<compile_context>
chip_gen: v7x
topology: tpu7x:2x2x1
jax: 0.10.0
libtpu: 0.0.40
codegen_flags: <defaults>
</compile_context>

<pallas_src>
import functools

import numpy as np
import jax
import jax.numpy as jnp
from jax import lax
from jax.experimental import pallas as pl
from jax.experimental.pallas import tpu as pltpu

_VMEM = pl.BlockSpec(memory_space=pltpu.MemorySpace.VMEM)
_SUBLANE = 8


def _nbytes(*shapes):
    return sum(int(np.prod(s)) * 4 for s in shapes)


def _mosaic_params(total_bytes):
    # explicit VMEM budget: 2x working set + slack, clipped to [4 MiB, 64 MiB]
    lim = int(min(64 * 2 ** 20, max(4 * 2 ** 20, 2 * total_bytes + (1 << 20))))
    return pltpu.CompilerParams(vmem_limit_bytes=lim)


# ----------------------------------------------------------------------------
# Pallas kernels
# ----------------------------------------------------------------------------
def _bilstm_layer_kernel(x_ref, len_ref, wih_ref, whh_ref, b_ref,
                         outf_ref, outb_ref, hT_ref,
                         gxf_sc, gxb_sc, h_sc, c_sc,
                         *, hid_dim, seq_len, batch_pad):
    """Fused fwd+bwd LSTM layer over a (length-masked) padded sequence.

    x_ref:   [T*Bp, D]        time-major input, time folded into sublanes
    len_ref: [Bp, 1] int32    per-example valid length
    wih_ref: [D, 8H]          [W_ih_fwd | W_ih_bwd], gate order (i,f,g,o)
    whh_ref: [2H, 8H]         block-diagonal [W_hh_fwd, 0; 0, W_hh_bwd]
    b_ref:   [1, 8H]          b_ih + b_hh for both directions
    outf/outb: [T*Bp, H]      per-timestep hidden state, fwd / bwd
    hT_ref:  [Bp, 2H]         final hidden [h_fwd(last valid) | h_bwd(t=0)]
    """
    H, T, Bp = hid_dim, seq_len, batch_pad

    # ---- hoisted input projection: ONE big MXU matmul for both directions
    # (removes T tiny matmuls and the per-step bias broadcast from the serial
    #  path).  For v6e/v7x production sizes, cast operands to bf16 here.
    g_all = (jnp.dot(x_ref[...], wih_ref[...], preferred_element_type=jnp.float32)
             + b_ref[...])                                    # [T*Bp, 8H]
    gxf_sc[...] = g_all[:, :4 * H]
    gxb_sc[...] = g_all[:, 4 * H:]

    h_sc[...] = jnp.zeros_like(h_sc)
    c_sc[...] = jnp.zeros_like(c_sc)
    lens = len_ref[...]                                       # [Bp, 1] int32

    def gates_to_hc(g, c_prev):
        i = jax.nn.sigmoid(g[:, 0 * H:1 * H])
        f = jax.nn.sigmoid(g[:, 1 * H:2 * H])
        gg = jnp.tanh(g[:, 2 * H:3 * H])
        o = jax.nn.sigmoid(g[:, 3 * H:4 * H])
        c_new = f * c_prev + i * gg
        h_new = o * jnp.tanh(c_new)
        return h_new, c_new

    def step(s, carry):
        tb = T - 1 - s                                  # bwd direction time index
        rf = pl.ds(pl.multiple_of(s * Bp, _SUBLANE), Bp)
        rb = pl.ds(pl.multiple_of(tb * Bp, _SUBLANE), Bp)
        h_prev = h_sc[...]                              # [Bp, 2H]
        c_prev = c_sc[...]
        # single block-diagonal recurrent matmul covering both directions
        hh = jnp.dot(h_prev, whh_ref[...],
                     preferred_element_type=jnp.float32)  # [Bp, 8H]
        g_f = gxf_sc[rf, :] + hh[:, :4 * H]
        g_b = gxb_sc[rb, :] + hh[:, 4 * H:]
        hf_new, cf_new = gates_to_hc(g_f, c_prev[:, :H])
        hb_new, cb_new = gates_to_hc(g_b, c_prev[:, H:])
        # packed-sequence semantics: padded steps keep the carried state
        m_f = s < lens                                  # [Bp, 1] bool
        m_b = tb < lens
        hf = jnp.where(m_f, hf_new, h_prev[:, :H])
        cf = jnp.where(m_f, cf_new, c_prev[:, :H])
        hb = jnp.where(m_b, hb_new, h_prev[:, H:])
        cb = jnp.where(m_b, cb_new, c_prev[:, H:])
        h_sc[...] = jnp.concatenate([hf, hb], axis=-1)
        c_sc[...] = jnp.concatenate([cf, cb], axis=-1)
        outf_ref[rf, :] = hf
        outb_ref[rb, :] = hb
        return carry

    lax.fori_loop(0, T, step, 0, unroll=True)           # full unroll (T small, static)
    hT_ref[...] = h_sc[...]


def _linear_chain_kernel(*refs):
    """hidden -> (Linear)* -> fc, fused into one kernel (no activations in spec)."""
    h_ref, out_ref = refs[0], refs[-1]
    wb = refs[1:-1]                                      # alternating w, b
    h = h_ref[...]
    for k in range(len(wb) // 2):
        h = (jnp.dot(h, wb[2 * k][...], preferred_element_type=jnp.float32)
             + wb[2 * k + 1][...])
    out_ref[...] = h


# ----------------------------------------------------------------------------
# Wrappers
# ----------------------------------------------------------------------------
def bilstm_layer(x2, lengths_col, wih_cat, whh_blk, b_cat, *, seq_len):
    TB, D = x2.shape
    Bp = TB // seq_len
    H = whh_blk.shape[0] // 2
    kernel = functools.partial(_bilstm_layer_kernel, hid_dim=H,
                               seq_len=seq_len, batch_pad=Bp)
    nbytes = _nbytes((TB, D), (Bp, 1), (D, 8 * H), (2 * H, 8 * H), (1, 8 * H),
                     (TB, H), (TB, H), (Bp, 2 * H),
                     (TB, 4 * H), (TB, 4 * H), (Bp, 2 * H), (Bp, 2 * H))
    out_f, out_b, h_final = pl.pallas_call(
        kernel,
        out_shape=(jax.ShapeDtypeStruct((TB, H), jnp.float32),
                   jax.ShapeDtypeStruct((TB, H), jnp.float32),
                   jax.ShapeDtypeStruct((Bp, 2 * H), jnp.float32)),
        in_specs=[_VMEM] * 5,
        out_specs=(_VMEM, _VMEM, _VMEM),
        scratch_shapes=[pltpu.VMEM((TB, 4 * H), jnp.float32),
                        pltpu.VMEM((TB, 4 * H), jnp.float32),
                        pltpu.VMEM((Bp, 2 * H), jnp.float32),
                        pltpu.VMEM((Bp, 2 * H), jnp.float32)],
        compiler_params=_mosaic_params(nbytes),
    )(x2, lengths_col, wih_cat, whh_blk, b_cat)
    return out_f, out_b, h_final


def linear_chain(hidden, weights_biases):
    Bp = hidden.shape[0]
    out_dim = weights_biases[-1][0].shape[1]
    args, shapes = [hidden], [hidden.shape]
    for w, b in weights_biases:
        b2 = b.reshape(1, -1)
        args += [w, b2]
        shapes += [w.shape, b2.shape]
    shapes.append((Bp, out_dim))
    return pl.pallas_call(
        _linear_chain_kernel,
        out_shape=jax.ShapeDtypeStruct((Bp, out_dim), jnp.float32),
        in_specs=[_VMEM] * len(args),
        out_specs=_VMEM,
        compiler_params=_mosaic_params(_nbytes(*shapes)),
    )(*args)


def _fuse_layer_weights(dir_f, dir_b):
    """Build fused [D,8H] input weights, block-diag [2H,8H] recurrent weights, [1,8H] bias."""
    wih_f, whh_f, b_f = dir_f
    wih_b, whh_b, b_b = dir_b
    H = whh_f.shape[0]
    wih_cat = jnp.concatenate([wih_f, wih_b], axis=1)                  # [D, 8H]
    z = jnp.zeros((H, 4 * H), jnp.float32)
    whh_blk = jnp.concatenate(
        [jnp.concatenate([whh_f, z], axis=1),
         jnp.concatenate([z, whh_b], axis=1)], axis=0)                 # [2H, 8H]
    b_cat = jnp.concatenate([b_f, b_b], axis=1)                        # [1, 8H]
    return wih_cat, whh_blk, b_cat


# ----------------------------------------------------------------------------
# Parameters (deterministic, same shapes as the PyTorch module)
# ----------------------------------------------------------------------------
def init_params(key, vocab_size, in_dim, hid_dim, out_dim, n_layers, num_linear):
    keys = iter(jax.random.split(key, 64))
    k = 1.0 / np.sqrt(hid_dim)
    params = {}
    params["embedding"] = jax.random.normal(next(keys), (vocab_size, in_dim), jnp.float32)
    lstm = []
    for layer in range(n_layers):
        d_in = in_dim if layer == 0 else 2 * hid_dim
        dirs = []
        for _ in range(2):  # forward, backward
            w_ih = jax.random.uniform(next(keys), (d_in, 4 * hid_dim), jnp.float32, -k, k)
            w_hh = jax.random.uniform(next(keys), (hid_dim, 4 * hid_dim), jnp.float32, -k, k)
            b_ih = jax.random.uniform(next(keys), (4 * hid_dim,), jnp.float32, -k, k)
            b_hh = jax.random.uniform(next(keys), (4 * hid_dim,), jnp.float32, -k, k)
            dirs.append((w_ih, w_hh, (b_ih + b_hh).reshape(1, 4 * hid_dim)))
        lstm.append(dirs)
    params["lstm"] = lstm
    feat = 2 * hid_dim
    linears = []
    for _ in range(num_linear - 1):
        kl = 1.0 / np.sqrt(feat)
        w = jax.random.uniform(next(keys), (feat, feat), jnp.float32, -kl, kl)
        bb = jax.random.uniform(next(keys), (feat,), jnp.float32, -kl, kl)
        linears.append((w, bb))
    params["linears"] = linears
    kf = 1.0 / np.sqrt(feat)
    params["fc"] = (jax.random.uniform(next(keys), (feat, out_dim), jnp.float32, -kf, kf),
                    jax.random.uniform(next(keys), (out_dim,), jnp.float32, -kf, kf))
    return params


# ----------------------------------------------------------------------------
# Forward pass (BiLSTM_Emb_Classifier.forward)
# ----------------------------------------------------------------------------
def bilstm_classifier_forward(params, text, text_lengths):
    emb = params["embedding"][text]                        # [B, T, D] gather (plain-JAX glue)
    B, T, D = emb.shape
    Bp = int(-(-B // _SUBLANE) * _SUBLANE)                 # pad batch to sublane multiple
    x = jnp.transpose(emb, (1, 0, 2)).astype(jnp.float32)  # [T, B, D] time-major
    lengths = text_lengths.astype(jnp.int32)
    if Bp != B:
        x = jnp.pad(x, ((0, 0), (0, Bp - B), (0, 0)))
        lengths = jnp.pad(lengths, (0, Bp - B))            # padded rows: length 0 (state stays 0)
    lengths_col = lengths.reshape(Bp, 1)
    layer_in = x.reshape(T * Bp, D)                        # all kernel tensors are 2-D

    # TODO(synk): inter-layer LSTM dropout (p=0.2) is a training-only stochastic op; eval semantics.
    h_final = None
    for dir_f, dir_b in params["lstm"]:
        wih_cat, whh_blk, b_cat = _fuse_layer_weights(dir_f, dir_b)
        out_f, out_b, h_final = bilstm_layer(layer_in, lengths_col,
                                             wih_cat, whh_blk, b_cat, seq_len=T)
        layer_in = jnp.concatenate([out_f, out_b], axis=-1)  # [T*Bp, 2H] next-layer input

    # hidden = cat(hidden[-2], hidden[-1]) == h_final from the fused last layer
    logits = linear_chain(h_final, list(params["linears"]) + [params["fc"]])
    return logits[:B]


# ----------------------------------------------------------------------------
# Pure numpy reference (packed-sequence semantics via per-example loops)
# ----------------------------------------------------------------------------
def ref_forward(params, text, lengths):
    def sigmoid(z):
        return 1.0 / (1.0 + np.exp(-z))

    def run_dir(xs, wih, whh, b, reverse):
        H = whh.shape[0]
        h = np.zeros(H, np.float64)
        c = np.zeros(H, np.float64)
        outs = np.zeros((xs.shape[0], H), np.float64)
        order = range(xs.shape[0] - 1, -1, -1) if reverse else range(xs.shape[0])
        for t in order:
            g = xs[t] @ wih + h @ whh + b[0]
            i = sigmoid(g[:H]); f = sigmoid(g[H:2 * H])
            gg = np.tanh(g[2 * H:3 * H]); o = sigmoid(g[3 * H:])
            c = f * c + i * gg
            h = o * np.tanh(c)
            outs[t] = h
        return outs, h

    emb = np.asarray(params["embedding"], np.float64)[np.asarray(text)]
    B = emb.shape[0]
    hid_fw, hid_bw = [], []
    for bi in range(B):
        L = int(lengths[bi])
        layer_in = emb[bi, :L]
        hf = hb = None
        for dirs in params["lstm"]:
            (wih_f, whh_f, b_f), (wih_b, whh_b, b_b) = [
                tuple(np.asarray(a, np.float64) for a in d) for d in dirs]
            of, hf = run_dir(layer_in, wih_f, whh_f, b_f, False)
            ob, hb = run_dir(layer_in, wih_b, whh_b, b_b, True)
            layer_in = np.concatenate([of, ob], axis=-1)
        hid_fw.append(hf); hid_bw.append(hb)
    hidden = np.concatenate([np.stack(hid_fw), np.stack(hid_bw)], axis=1)
    for w, bb in params["linears"]:
        hidden = hidden @ np.asarray(w, np.float64) + np.asarray(bb, np.float64)
    wf, bf = params["fc"]
    return hidden @ np.asarray(wf, np.float64) + np.asarray(bf, np.float64)


# ----------------------------------------------------------------------------
if __name__ == "__main__":
    VOCAB, IN_DIM, HID, OUT = 50, 16, 32, 4
    N_LAYERS, NUM_LINEAR = 2, 2
    B, T = 4, 8

    key = jax.random.PRNGKey(0)
    k_par, k_txt = jax.random.split(key)
    params = init_params(k_par, VOCAB, IN_DIM, HID, OUT, N_LAYERS, NUM_LINEAR)

    text = jax.random.randint(k_txt, (B, T), 0, VOCAB, dtype=jnp.int32)
    text_lengths = jnp.array([8, 5, 3, 7], dtype=jnp.int32)

    logits = bilstm_classifier_forward(params, text, text_lengths)
    logits = jax.block_until_ready(logits)

    ref = ref_forward(params, text, np.asarray(text_lengths))
    np.testing.assert_allclose(np.asarray(logits), ref, rtol=2e-4, atol=2e-4)

    print("KERNEL_OK")
</pallas_src>

<mosaic_0001>
module attributes {stable_mosaic.version = 11 : i64} {
  func.func @_bilstm_layer_kernel(%arg0: memref<64x16xf32, #tpu.memory_space<vmem>>, %arg1: memref<8x1xi32, #tpu.memory_space<vmem>>, %arg2: memref<16x256xf32, #tpu.memory_space<vmem>>, %arg3: memref<64x256xf32, #tpu.memory_space<vmem>>, %arg4: memref<1x256xf32, #tpu.memory_space<vmem>>, %arg5: memref<64x32xf32, #tpu.memory_space<vmem>>, %arg6: memref<64x32xf32, #tpu.memory_space<vmem>>, %arg7: memref<8x64xf32, #tpu.memory_space<vmem>>, %arg8: memref<64x128xf32, #tpu.memory_space<vmem>>, %arg9: memref<64x128xf32, #tpu.memory_space<vmem>>, %arg10: memref<8x64xf32, #tpu.memory_space<vmem>>, %arg11: memref<8x64xf32, #tpu.memory_space<vmem>>) attributes {dimension_semantics = [], scalar_prefetch = 0 : i64, scratch_operands = 4 : i64, tpu.core_type = #tpu.core_type<tc>} {
    %c0 = arith.constant 0 : index
    %c0_0 = arith.constant 0 : index
    %0 = vector.load %arg0[%c0, %c0_0] : memref<64x16xf32, #tpu.memory_space<vmem>>, vector<64x16xf32>
    %c0_1 = arith.constant 0 : index
    %c0_2 = arith.constant 0 : index
    %1 = vector.load %arg2[%c0_1, %c0_2] : memref<16x256xf32, #tpu.memory_space<vmem>>, vector<16x256xf32>
    %cst = arith.constant dense<0.000000e+00> : vector<64x256xf32>
    %2 = tpu.matmul %0, %1, %cst {dimension_numbers = #tpu.dot_dimension_numbers<[1], [0], [0], [1], [0, 0, 1, 1], [], []>} : vector<64x16xf32>, vector<16x256xf32>, vector<64x256xf32> -> vector<64x256xf32>
    %c0_3 = arith.constant 0 : index
    %c0_4 = arith.constant 0 : index
    %3 = vector.load %arg4[%c0_3, %c0_4] : memref<1x256xf32, #tpu.memory_space<vmem>>, vector<1x256xf32>
    %4 = vector.broadcast %3 : vector<1x256xf32> to vector<64x256xf32>
    %5 = arith.addf %2, %4 : vector<64x256xf32>
    %6 = vector.extract_strided_slice %5 {offsets = [0, 0], sizes = [64, 128], strides = [1, 1]} : vector<64x256xf32> to vector<64x128xf32>
    %c0_5 = arith.constant 0 : index
    %c0_6 = arith.constant 0 : index
    %7 = vector.load %arg8[%c0_5, %c0_6] : memref<64x128xf32, #tpu.memory_space<vmem>>, vector<64x128xf32>
    tpu.vector_store %arg8[%c0_5, %c0_6], %6 {strides = array<i32>} : memref<64x128xf32, #tpu.memory_space<vmem>>, vector<64x128xf32>,
    %8 = vector.extract_strided_slice %5 {offsets = [0, 128], sizes = [64, 128], strides = [1, 1]} : vector<64x256xf32> to vector<64x128xf32>
    %c0_7 = arith.constant 0 : index
    %c0_8 = arith.constant 0 : index
    %9 = vector.load %arg9[%c0_7, %c0_8] : memref<64x128xf32, #tpu.memory_space<vmem>>, vector<64x128xf32>
    tpu.vector_store %arg9[%c0_7, %c0_8], %8 {strides = array<i32>} : memref<64x128xf32, #tpu.memory_space<vmem>>, vector<64x128xf32>,
    %cst_9 = arith.constant 0.000000e+00 : f32
    %10 = vector.broadcast %cst_9 : f32 to vector<8x64xf32>
    %c0_10 = arith.constant 0 : index
    %c0_11 = arith.constant 0 : index
    %11 = vector.load %arg10[%c0_10, %c0_11] : memref<8x64xf32, #tpu.memory_space<vmem>>, vector<8x64xf32>
    tpu.vector_store %arg10[%c0_10, %c0_11], %10 {strides = array<i32>} : memref<8x64xf32, #tpu.memory_space<vmem>>, vector<8x64xf32>,
    %cst_12 = arith.constant 0.000000e+00 : f32
    %12 = vector.broadcast %cst_12 : f32 to vector<8x64xf32>
    %c0_13 = arith.constant 0 : index
    %c0_14 = arith.constant 0 : index
    %13 = vector.load %arg11[%c0_13, %c0_14] : memref<8x64xf32, #tpu.memory_space<vmem>>, vector<8x64xf32>
    tpu.vector_store %arg11[%c0_13, %c0_14], %12 {strides = array<i32>} : memref<8x64xf32, #tpu.memory_space<vmem>>, vector<8x64xf32>,
    %c0_15 = arith.constant 0 : index
    %c0_16 = arith.constant 0 : index
    %14 = vector.load %arg1[%c0_15, %c0_16] : memref<8x1xi32, #tpu.memory_space<vmem>>, vector<8x1xi32>
    %c0_i32 = arith.constant 0 : i32
    %c7_i32 = arith.constant 7 : i32
    %15 = arith.subi %c7_i32, %c0_i32 : i32
    %c8_i32 = arith.constant 8 : i32
    %16 = arith.muli %c0_i32, %c8_i32 : i32
    %17 = tpu.assume_multiple %16, 8 : i32
    %c8_i32_17 = arith.constant 8 : i32
    %18 = arith.muli %15, %c8_i32_17 : i32
    %19 = tpu.assume_multiple %18, 8 : i32
    %c0_18 = arith.constant 0 : index
    %c0_19 = arith.constant 0 : index
    %20 = vector.load %arg10[%c0_18, %c0_19] : memref<8x64xf32, #tpu.memory_space<vmem>>, vector<8x64xf32>
    %c0_20 = arith.constant 0 : index
    %c0_21 = arith.constant 0 : index
    %21 = vector.load %arg11[%c0_20, %c0_21] : memref<8x64xf32, #tpu.memory_space<vmem>>, vector<8x64xf32>
    %c0_22 = arith.constant 0 : index
    %c0_23 = arith.constant 0 : index
    %22 = vector.load %arg3[%c0_22, %c0_23] : memref<64x256xf32, #tpu.memory_space<vmem>>, vector<64x256xf32>
    %cst_24 = arith.constant dense<0.000000e+00> : vector<8x256xf32>
    %23 = tpu.matmul %20, %22, %cst_24 {dimension_numbers = #tpu.dot_dimension_numbers<[1], [0], [0], [1], [0, 0, 1, 1], [], []>} : vector<8x64xf32>, vector<64x256xf32>, vector<8x256xf32> -> vector<8x256xf32>
    %24 = arith.index_cast %17 : i32 to index
    %c0_25 = arith.constant 0 : index
    %25 = vector.load %arg8[%24, %c0_25] : memref<64x128xf32, #tpu.memory_space<vmem>>, vector<8x128xf32>
    %26 = vector.extract_strided_slice %23 {offsets = [0, 0], sizes = [8, 128], strides = [1, 1]} : vector<8x256xf32> to vector<8x128xf32>
    %27 = arith.addf %25, %26 : vector<8x128xf32>
    %28 = arith.index_cast %19 : i32 to index
    %c0_26 = arith.constant 0 : index
    %29 = vector.load %arg9[%28, %c0_26] : memref<64x128xf32, #tpu.memory_space<vmem>>, vector<8x128xf32>
    %30 = vector.extract_strided_slice %23 {offsets = [0, 128], sizes = [8, 128], strides = [1, 1]} : vector<8x256xf32> to vector<8x128xf32>
    %31 = arith.addf %29, %30 : vector<8x128xf32>
    %32 = vector.extract_strided_slice %21 {offsets = [0, 0], sizes = [8, 32], strides = [1, 1]} : vector<8x64xf32> to vector<8x32xf32>
    %33 = vector.extract_strided_slice %27 {offsets = [0, 0], sizes = [8, 32], strides = [1, 1]} : vector<8x128xf32> to vector<8x32xf32>
    %34 = arith.negf %33 : vector<8x32xf32>
    %35 = math.exp %34 : vector<8x32xf32>
    %cst_27 = arith.constant 1.000000e+00 : f32
    %36 = vector.broadcast %cst_27 : f32 to vector<8x32xf32>
    %37 = arith.addf %36, %35 : vector<8x32xf32>
    %38 = arith.divf %36, %37 : vector<8x32xf32>
    %39 = vector.extract_strided_slice %27 {offsets = [0, 32], sizes = [8, 32], strides = [1, 1]} : vector<8x128xf32> to vector<8x32xf32>
    %40 = arith.negf %39 : vector<8x32xf32>
    %41 = math.exp %40 : vector<8x32xf32>
    %cst_28 = arith.constant 1.000000e+00 : f32
    %42 = vector.broadcast %cst_28 : f32 to vector<8x32xf32>
    %43 = arith.addf %42, %41 : vector<8x32xf32>
    %44 = arith.divf %42, %43 : vector<8x32xf32>
    %45 = vector.extract_strided_slice %27 {offsets = [0, 64], sizes = [8, 32], strides = [1, 1]} : vector<8x128xf32> to vector<8x32xf32>
    %46 = math.tanh %45 : vector<8x32xf32>
    %47 = vector.extract_strided_slice %27 {offsets = [0, 96], sizes = [8, 32], strides = [1, 1]} : vector<8x128xf32> to vector<8x32xf32>
    %48 = arith.negf %47 : vector<8x32xf32>
    %49 = math.exp %48 : vector<8x32xf32>
    %cst_29 = arith.constant 1.000000e+00 : f32
    %50 = vector.broadcast %cst_29 : f32 to vector<8x32xf32>
    %51 = arith.addf %50, %49 : vector<8x32xf32>
    %52 = arith.divf %50, %51 : vector<8x32xf32>
    %53 = arith.mulf %44, %32 : vector<8x32xf32>
    %54 = arith.mulf %38, %46 : vector<8x32xf32>
    %55 = arith.addf %53, %54 : vector<8x32xf32>
    %56 = math.tanh %55 : vector<8x32xf32>
    %57 = arith.mulf %52, %56 : vector<8x32xf32>
    %58 = vector.extract_strided_slice %21 {offsets = [0, 32], sizes = [8, 32], strides = [1, 1]} : vector<8x64xf32> to vector<8x32xf32>
    %59 = vector.extract_strided_slice %31 {offsets = [0, 0], sizes = [8, 32], strides = [1, 1]} : vector<8x128xf32> to vector<8x32xf32>
    %60 = arith.negf %59 : vector<8x32xf32>
    %61 = math.exp %60 : vector<8x32xf32>
    %cst_30 = arith.constant 1.000000e+00 : f32
    %62 = vector.broadcast %cst_30 : f32 to vector<8x32xf32>
    %63 = arith.addf %62, %61 : vector<8x32xf32>
    %64 = arith.divf %62, %63 : vector<8x32xf32>
    %65 = vector.extract_strided_slice %31 {offsets = [0, 32], sizes = [8, 32], strides = [1, 1]} : vector<8x128xf32> to vector<8x32xf32>
    %66 = arith.negf %65 : vector<8x32xf32>
    %67 = math.exp %66 : vector<8x32xf32>
    %cst_31 = arith.constant 1.000000e+00 : f32
    %68 = vector.broadcast %cst_31 : f32 to vector<8x32xf32>
    %69 = arith.addf %68, %67 : vector<8x32xf32>
    %70 = arith.divf %68, %69 : vector<8x32xf32>
    %71 = vector.extract_strided_slice %31 {offsets = [0, 64], sizes = [8, 32], strides = [1, 1]} : vector<8x128xf32> to vector<8x32xf32>
    %72 = math.tanh %71 : vector<8x32xf32>
    %73 = vector.extract_strided_slice %31 {offsets = [0, 96], sizes = [8, 32], strides = [1, 1]} : vector<8x128xf32> to vector<8x32xf32>
    %74 = arith.negf %73 : vector<8x32xf32>
    %75 = math.exp %74 : vector<8x32xf32>
    %cst_32 = arith.constant 1.000000e+00 : f32
    %76 = vector.broadcast %cst_32 : f32 to vector<8x32xf32>
    %77 = arith.addf %76, %75 : vector<8x32xf32>
    %78 = arith.divf %76, %77 : vector<8x32xf32>
    %79 = arith.mulf %70, %58 : vector<8x32xf32>
    %80 = arith.mulf %64, %72 : vector<8x32xf32>
    %81 = arith.addf %79, %80 : vector<8x32xf32>
    %82 = math.tanh %81 : vector<8x32xf32>
    %83 = arith.mulf %78, %82 : vector<8x32xf32>
    %84 = vector.broadcast %c0_i32 : i32 to vector<8x1xi32>
    %85 = arith.cmpi slt, %84, %14 : vector<8x1xi32>
    %86 = vector.broadcast %15 : i32 to vector<8x1xi32>
    %87 = arith.cmpi slt, %86, %14 : vector<8x1xi32>
    %88 = vector.extract_strided_slice %20 {offsets = [0, 0], sizes = [8, 32], strides = [1, 1]} : vector<8x64xf32> to vector<8x32xf32>
    %89 = vector.shape_cast %85 : vector<8x1xi1> to vector<8x1xi1>
    %90 = vector.broadcast %89 : vector<8x1xi1> to vector<8x32xi1>
    %91 = arith.select %90, %57, %88 : vector<8x32xi1>, vector<8x32xf32>
    %92 = vector.extract_strided_slice %21 {offsets = [0, 0], sizes = [8, 32], strides = [1, 1]} : vector<8x64xf32> to vector<8x32xf32>
    %93 = vector.shape_cast %85 : vector<8x1xi1> to vector<8x1xi1>
    %94 = vector.broadcast %93 : vector<8x1xi1> to vector<8x32xi1>
    %95 = arith.select %94, %55, %92 : vector<8x32xi1>, vector<8x32xf32>
    %96 = vector.extract_strided_slice %20 {offsets = [0, 32], sizes = [8, 32], strides = [1, 1]} : vector<8x64xf32> to vector<8x32xf32>
    %97 = vector.shape_cast %87 : vector<8x1xi1> to vector<8x1xi1>
    %98 = vector.broadcast %97 : vector<8x1xi1> to vector<8x32xi1>
    %99 = arith.select %98, %83, %96 : vector<8x32xi1>, vector<8x32xf32>
    %100 = vector.extract_strided_slice %21 {offsets = [0, 32], sizes = [8, 32], strides = [1, 1]} : vector<8x64xf32> to vector<8x32xf32>
    %101 = vector.shape_cast %87 : vector<8x1xi1> to vector<8x1xi1>
    %102 = vector.broadcast %101 : vector<8x1xi1> to vector<8x32xi1>
    %103 = arith.select %102, %81, %100 : vector<8x32xi1>, vector<8x32xf32>
    %104 = tpu.concatenate %91, %99 in 1 : vector<8x32xf32>, vector<8x32xf32> -> vector<8x64xf32>
    %c0_33 = arith.constant 0 : index
    %c0_34 = arith.constant 0 : index
    %105 = vector.load %arg10[%c0_33, %c0_34] : memref<8x64xf32, #tpu.memory_space<vmem>>, vector<8x64xf32>
    tpu.vector_store %arg10[%c0_33, %c0_34], %104 {strides = array<i32>} : memref<8x64xf32, #tpu.memory_space<vmem>>, vector<8x64xf32>,
    %106 = tpu.concatenate %95, %103 in 1 : vector<8x32xf32>, vector<8x32xf32> -> vector<8x64xf32>
    %c0_35 = arith.constant 0 : index
    %c0_36 = arith.constant 0 : index
    %107 = vector.load %arg11[%c0_35, %c0_36] : memref<8x64xf32, #tpu.memory_space<vmem>>, vector<8x64xf32>
    tpu.vector_store %arg11[%c0_35, %c0_36], %106 {strides = array<i32>} : memref<8x64xf32, #tpu.memory_space<vmem>>, vector<8x64xf32>,
    %108 = arith.index_cast %17 : i32 to index
    %c0_37 = arith.constant 0 : index
    %109 = vector.load %arg5[%108, %c0_37] : memref<64x32xf32, #tpu.memory_space<vmem>>, vector<8x32xf32>
    tpu.vector_store %arg5[%108, %c0_37], %91 {strides = array<i32>} : memref<64x32xf32, #tpu.memory_space<vmem>>, vector<8x32xf32>,
    %110 = arith.index_cast %19 : i32 to index
    %c0_38 = arith.constant 0 : index
    %111 = vector.load %arg6[%110, %c0_38] : memref<64x32xf32, #tpu.memory_space<vmem>>, vector<8x32xf32>
    tpu.vector_store %arg6[%110, %c0_38], %99 {strides = array<i32>} : memref<64x32xf32, #tpu.memory_space<vmem>>, vector<8x32xf32>,
    %c1_i32 = arith.constant 1 : i32
    %c7_i32_39 = arith.constant 7 : i32
    %112 = arith.subi %c7_i32_39, %c1_i32 : i32
    %c8_i32_40 = arith.constant 8 : i32
    %113 = arith.muli %c1_i32, %c8_i32_40 : i32
    %114 = tpu.assume_multiple %113, 8 : i32
    %c8_i32_41 = arith.constant 8 : i32
    %115 = arith.muli %112, %c8_i32_41 : i32
    %116 = tpu.assume_multiple %115, 8 : i32
    %c0_42 = arith.constant 0 : index
    %c0_43 = arith.constant 0 : index
    %117 = vector.load %arg10[%c0_42, %c0_43] : memref<8x64xf32, #tpu.memory_space<vmem>>, vector<8x64xf32>
    %c0_44 = arith.constant 0 : index
    %c0_45 = arith.constant 0 : index
    %118 = vector.load %arg11[%c0_44, %c0_45] : memref<8x64xf32, #tpu.memory_space<vmem>>, vector<8x64xf32>
    %c0_46 = arith.constant 0 : index
    %c0_47 = arith.constant 0 : index
    %119 = vector.load %arg3[%c0_46, %c0_47] : memref<64x256xf32, #tpu.memory_space<vmem>>, vector<64x256xf32>
    %cst_48 = arith.constant dense<0.000000e+00> : vector<8x256xf32>
    %120 = tpu.matmul %117, %119, %cst_48 {dimension_numbers = #tpu.dot_dimension_numbers<[1], [0], [0], [1], [0, 0, 1, 1], [], []>} : vector<8x64xf32>, vector<64x256xf32>, vector<8x256xf32> -> vector<8x256xf32>
    %121 = arith.index_cast %114 : i32 to index
    %c0_49 = arith.constant 0 : index
    %122 = vector.load %arg8[%121, %c0_49] : memref<64x128xf32, #tpu.memory_space<vmem>>, vector<8x128xf32>
    %123 = vector.extract_strided_slice %120 {offsets = [0, 0], sizes = [8, 128], strides = [1, 1]} : vector<8x256xf32> to vector<8x128xf32>
    %124 = arith.addf %122, %123 : vector<8x128xf32>
    %125 = arith.index_cast %116 : i32 to index
    %c0_50 = arith.constant 0 : index
    %126 = vector.load %arg9[%125, %c0_50] : memref<64x128xf32, #tpu.memory_space<vmem>>, vector<8x128xf32>
    %127 = vector.extract_strided_slice %120 {offsets = [0, 128], sizes = [8, 128], strides = [1, 1]} : vector<8x256xf32> to vector<8x128xf32>
    %128 = arith.addf %126, %127 : vector<8x128xf32>
    %129 = vector.extract_strided_slice %118 {offsets = [0, 0], sizes = [8, 32], strides = [1, 1]} : vector<8x64xf32> to vector<8x32xf32>
    %130 = vector.extract_strided_slice %124 {offsets = [0, 0], sizes = [8, 32], strides = [1, 1]} : vector<8x128xf32> to vector<8x32xf32>
    %131 = arith.negf %130 : vector<8x32xf32>
    %132 = math.exp %131 : vector<8x32xf32>
    %cst_51 = arith.constant 1.000000e+00 : f32
    %133 = vector.broadcast %cst_51 : f32 to vector<8x32xf32>
    %134 = arith.addf %133, %132 : vector<8x32xf32>
    %135 = arith.divf %133, %134 : vector<8x32xf32>
    %136 = vector.extract_strided_slice %124 {offsets = [0, 32], sizes = [8, 32], strides = [1, 1]} : vector<8x128xf32> to vector<8x32xf32>
    %137 = arith.negf %136 : vector<8x32xf32>
    %138 = math.exp %137 : vector<8x32xf32>
    %cst_52 = arith.constant 1.000000e+00 : f32
    %139 = vector.broadcast %cst_52 : f32 to vector<8x32xf32>
    %140 = arith.addf %139, %138 : vector<8x32xf32>
    %141 = arith.divf %139, %140 : vector<8x32xf32>
    %142 = vector.extract_strided_slice %124 {offsets = [0, 64], sizes = [8, 32], strides = [1, 1]} : vector<8x128xf32> to vector<8x32xf32>
    %143 = math.tanh %142 : vector<8x32xf32>
    %144 = vector.extract_strided_slice %124 {offsets = [0, 96], sizes = [8, 32], strides = [1, 1]} : vector<8x128xf32> to vector<8x32xf32>
    %145 = arith.negf %144 : vector<8x32xf32>
    %146 = math.exp %145 : vector<8x32xf32>
    %cst_53 = arith.constant 1.000000e+00 : f32
    %147 = vector.broadcast %cst_53 : f32 to vector<8x32xf32>
    %148 = arith.addf %147, %146 : vector<8x32xf32>
    %149 = arith.divf %147, %148 : vector<8x32xf32>
    %150 = arith.mulf %141, %129 : vector<8x32xf32>
    %151 = arith.mulf %135, %143 : vector<8x32xf32>
    %152 = arith.addf %150, %151 : vector<8x32xf32>
    %153 = math.tanh %152 : vector<8x32xf32>
    %154 = arith.mulf %149, %153 : vector<8x32xf32>
    %155 = vector.extract_strided_slice %118 {offsets = [0, 32], sizes = [8, 32], strides = [1, 1]} : vector<8x64xf32> to vector<8x32xf32>
    %156 = vector.extract_strided_slice %128 {offsets = [0, 0], sizes = [8, 32], strides = [1, 1]} : vector<8x128xf32> to vector<8x32xf32>
    %157 = arith.negf %156 : vector<8x32xf32>
    %158 = math.exp %157 : vector<8x32xf32>
    %cst_54 = arith.constant 1.000000e+00 : f32
    %159 = vector.broadcast %cst_54 : f32 to vector<8x32xf32>
    %160 = arith.addf %159, %158 : vector<8x32xf32>
    %161 = arith.divf %159, %160 : vector<8x32xf32>
    %162 = vector.extract_strided_slice %128 {offsets = [0, 32], sizes = [8, 32], strides = [1, 1]} : vector<8x128xf32> to vector<8x32xf32>
    %163 = arith.negf %162 : vector<8x32xf32>
    %164 = math.exp %163 : vector<8x32xf32>
    %cst_55 = arith.constant 1.000000e+00 : f32
    %165 = vector.broadcast %cst_55 : f32 to vector<8x32xf32>
    %166 = arith.addf %165, %164 : vector<8x32xf32>
    %167 = arith.divf %165, %166 : vector<8x32xf32>
    %168 = vector.extract_strided_slice %128 {offsets = [0, 64], sizes = [8, 32], strides = [1, 1]} : vector<8x128xf32> to vector<8x32xf32>
    %169 = math.tanh %168 : vector<8x32xf32>
    %170 = vector.extract_strided_slice %128 {offsets = [0, 96], sizes = [8, 32], strides = [1, 1]} : vector<8x128xf32> to vector<8x32xf32>
    %171 = arith.negf %170 : vector<8x32xf32>
    %172 = math.exp %171 : vector<8x32xf32>
    %cst_56 = arith.constant 1.000000e+00 : f32
    %173 = vector.broadcast %cst_56 : f32 to vector<8x32xf32>
    %174 = arith.addf %173, %172 : vector<8x32xf32>
    %175 = arith.divf %173, %174 : vector<8x32xf32>
    %176 = arith.mulf %167, %155 : vector<8x32xf32>
    %177 = arith.mulf %161, %169 : vector<8x32xf32>
    %178 = arith.addf %176, %177 : vector<8x32xf32>
    %179 = math.tanh %178 : vector<8x32xf32>
    %180 = arith.mulf %175, %179 : vector<8x32xf32>
    %181 = vector.broadcast %c1_i32 : i32 to vector<8x1xi32>
    %182 = arith.cmpi slt, %181, %14 : vector<8x1xi32>
    %183 = vector.broadcast %112 : i32 to vector<8x1xi32>
    %184 = arith.cmpi slt, %183, %14 : vector<8x1xi32>
    %185 = vector.extract_strided_slice %117 {offsets = [0, 0], sizes = [8, 32], strides = [1, 1]} : vector<8x64xf32> to vector<8x32xf32>
    %186 = vector.shape_cast %182 : vector<8x1xi1> to vector<8x1xi1>
    %187 = vector.broadcast %186 : vector<8x1xi1> to vector<8x32xi1>
    %188 = arith.select %187, %154, %185 : vector<8x32xi1>, vector<8x32xf32>
    %189 = vector.extract_strided_slice %118 {offsets = [0, 0], sizes = [8, 32], strides = [1, 1]} : vector<8x64xf32> to vector<8x32xf32>
    %190 = vector.shape_cast %182 : vector<8x1xi1> to vector<8x1xi1>
    %191 = vector.broadcast %190 : vector<8x1xi1> to vector<8x32xi1>
    %192 = arith.select %191, %152, %189 : vector<8x32xi1>, vector<8x32xf32>
    %193 = vector.extract_strided_slice %117 {offsets = [0, 32], sizes = [8, 32], strides = [1, 1]} : vector<8x64xf32> to vector<8x32xf32>
    %194 = vector.shape_cast %184 : vector<8x1xi1> to vector<8x1xi1>
    %195 = vector.broadcast %194 : vector<8x1xi1> to vector<8x32xi1>
    %196 = arith.select %195, %180, %193 : vector<8x32xi1>, vector<8x32xf32>
    %197 = vector.extract_strided_slice %118 {offsets = [0, 32], sizes = [8, 32], strides = [1, 1]} : vector<8x64xf32> to vector<8x32xf32>
    %198 = vector.shape_cast %184 : vector<8x1xi1> to vector<8x1xi1>
    %199 = vector.broadcast %198 : vector<8x1xi1> to vector<8x32xi1>
    %200 = arith.select %199, %178, %197 : vector<8x32xi1>, vector<8x32xf32>
    %201 = tpu.concatenate %188, %196 in 1 : vector<8x32xf32>, vector<8x32xf32> -> vector<8x64xf32>
    %c0_57 = arith.constant 0 : index
    %c0_58 = arith.constant 0 : index
    %202 = vector.load %arg10[%c0_57, %c0_58] : memref<8x64xf32, #tpu.memory_space<vmem>>, vector<8x64xf32>
    tpu.vector_store %arg10[%c0_57, %c0_58], %201 {strides = array<i32>} : memref<8x64xf32, #tpu.memory_space<vmem>>, vector<8x64xf32>,
    %203 = tpu.concatenate %192, %200 in 1 : vector<8x32xf32>, vector<8x32xf32> -> vector<8x64xf32>
    %c0_59 = arith.constant 0 : index
    %c0_60 = arith.constant 0 : index
    %204 = vector.load %arg11[%c0_59, %c0_60] : memref<8x64xf32, #tpu.memory_space<vmem>>, vector<8x64xf32>
    tpu.vector_store %arg11[%c0_59, %c0_60], %203 {strides = array<i32>} : memref<8x64xf32, #tpu.memory_space<vmem>>, vector<8x64xf32>,
    %205 = arith.index_cast %114 : i32 to index
    %c0_61 = arith.constant 0 : index
    %206 = vector.load %arg5[%205, %c0_61] : memref<64x32xf32, #tpu.memory_space<vmem>>, vector<8x32xf32>
    tpu.vector_store %arg5[%205, %c0_61], %188 {strides = array<i32>} : memref<64x32xf32, #tpu.memory_space<vmem>>, vector<8x32xf32>,
    %207 = arith.index_cast %116 : i32 to index
    %c0_62 = arith.constant 0 : index
    %208 = vector.load %arg6[%207, %c0_62] : memref<64x32xf32, #tpu.memory_space<vmem>>, vector<8x32xf32>
    tpu.vector_store %arg6[%207, %c0_62], %196 {strides = array<i32>} : memref<64x32xf32, #tpu.memory_space<vmem>>, vector<8x32xf32>,
    %c2_i32 = arith.constant 2 : i32
    %c7_i32_63 = arith.constant 7 : i32
    %209 = arith.subi %c7_i32_63, %c2_i32 : i32
    %c8_i32_64 = arith.constant 8 : i32
    %210 = arith.muli %c2_i32, %c8_i32_64 : i32
    %211 = tpu.assume_multiple %210, 8 : i32
    %c8_i32_65 = arith.constant 8 : i32
    %212 = arith.muli %209, %c8_i32_65 : i32
    %213 = tpu.assume_multiple %212, 8 : i32
    %c0_66 = arith.constant 0 : index
    %c0_67 = arith.constant 0 : index
    %214 = vector.load %arg10[%c0_66, %c0_67] : memref<8x64xf32, #tpu.memory_space<vmem>>, vector<8x64xf32>
    %c0_68 = arith.constant 0 : index
    %c0_69 = arith.constant 0 : index
    %215 = vector.load %arg11[%c0_68, %c0_69] : memref<8x64xf32, #tpu.memory_space<vmem>>, vector<8x64xf32>
    %c0_70 = arith.constant 0 : index
    %c0_71 = arith.constant 0 : index
    %216 = vector.load %arg3[%c0_70, %c0_71] : memref<64x256xf32, #tpu.memory_space<vmem>>, vector<64x256xf32>
    %cst_72 = arith.constant dense<0.000000e+00> : vector<8x256xf32>
    %217 = tpu.matmul %214, %216, %cst_72 {dimension_numbers = #tpu.dot_dimension_numbers<[1], [0], [0], [1], [0, 0, 1, 1], [], []>} : vector<8x64xf32>, vector<64x256xf32>, vector<8x256xf32> -> vector<8x256xf32>
    %218 = arith.index_cast %211 : i32 to index
    %c0_73 = arith.constant 0 : index
    %219 = vector.load %arg8[%218, %c0_73] : memref<64x128xf32, #tpu.memory_space<vmem>>, vector<8x128xf32>
    %220 = vector.extract_strided_slice %217 {offsets = [0, 0], sizes = [8, 128], strides = [1, 1]} : vector<8x256xf32> to vector<8x128xf32>
    %221 = arith.addf %219, %220 : vector<8x128xf32>
    %222 = arith.index_cast %213 : i32 to index
    %c0_74 = arith.constant 0 : index
    %223 = vector.load %arg9[%222, %c0_74] : memref<64x128xf32, #tpu.memory_space<vmem>>, vector<8x128xf32>
    %224 = vector.extract_strided_slice %217 {offsets = [0, 128], sizes = [8, 128], strides = [1, 1]} : vector<8x256xf32> to vector<8x128xf32>
    %225 = arith.addf %223, %224 : vector<8x128xf32>
    %226 = vector.extract_strided_slice %215 {offsets = [0, 0], sizes = [8, 32], strides = [1, 1]} : vector<8x64xf32> to vector<8x32xf32>
    %227 = vector.extract_strided_slice %221 {offsets = [0, 0], sizes = [8, 32], strides = [1, 1]} : vector<8x128xf32> to vector<8x32xf32>
    %228 = arith.negf %227 : vector<8x32xf32>
    %229 = math.exp %228 : vector<8x32xf32>
    %cst_75 = arith.constant 1.000000e+00 : f32
    %230 = vector.broadcast %cst_75 : f32 to vector<8x32xf32>
    %231 = arith.addf %230, %229 : vector<8x32xf32>
    %232 = arith.divf %230, %231 : vector<8x32xf32>
    %233 = vector.extract_strided_slice %221 {offsets = [0, 32], sizes = [8, 32], strides = [1, 1]} : vector<8x128xf32> to vector<8x32xf32>
    %234 = arith.negf %233 : vector<8x32xf32>
    %235 = math.exp %234 : vector<8x32xf32>
    %cst_76 = arith.constant 1.000000e+00 : f32
    %236 = vector.broadcast %cst_76 : f32 to vector<8x32xf32>
    %237 = arith.addf %236, %235 : vector<8x32xf32>
    %238 = arith.divf %236, %237 : vector<8x32xf32>
    %239 = vector.extract_strided_slice %221 {offsets = [0, 64], sizes = [8, 32], strides = [1, 1]} : vector<8x128xf32> to vector<8x32xf32>
    %240 = math.tanh %239 : vector<8x32xf32>
    %241 = vector.extract_strided_slice %221 {offsets = [0, 96], sizes = [8, 32], strides = [1, 1]} : vector<8x128xf32> to vector<8x32xf32>
    %242 = arith.negf %241 : vector<8x32xf32>
    %243 = math.exp %242 : vector<8x32xf32>
    %cst_77 = arith.constant 1.000000e+00 : f32
    %244 = vector.broadcast %cst_77 : f32 to vector<8x32xf32>
    %245 = arith.addf %244, %243 : vector<8x32xf32>
    %246 = arith.divf %244, %245 : vector<8x32xf32>
    %247 = arith.mulf %238, %226 : vector<8x32xf32>
    %248 = arith.mulf %232, %240 : vector<8x32xf32>
    %249 = arith.addf %247, %248 : vector<8x32xf32>
    %250 = math.tanh %249 : vector<8x32xf32>
    %251 = arith.mulf %246, %250 : vector<8x32xf32>
    %252 = vector.extract_strided_slice %215 {offsets = [0, 32], sizes = [8, 32], strides = [1, 1]} : vector<8x64xf32> to vector<8x32xf32>
    %253 = vector.extract_strided_slice %225 {offsets = [0, 0], sizes = [8, 32], strides = [1, 1]} : vector<8x128xf32> to vector<8x32xf32>
    %254 = arith.negf %253 : vector<8x32xf32>
    %255 = math.exp %254 : vector<8x32xf32>
    %cst_78 = arith.constant 1.000000e+00 : f32
    %256 = vector.broadcast %cst_78 : f32 to vector<8x32xf32>
    %257 = arith.addf %256, %255 : vector<8x32xf32>
    %258 = arith.divf %256, %257 : vector<8x32xf32>
    %259 = vector.extract_strided_slice %225 {offsets = [0, 32], sizes = [8, 32], strides = [1, 1]} : vector<8x128xf32> to vector<8x32xf32>
    %260 = arith.negf %259 : vector<8x32xf32>
    %261 = math.exp %260 : vector<8x32xf32>
    %cst_79 = arith.constant 1.000000e+00 : f32
    %262 = vector.broadcast %cst_79 : f32 to vector<8x32xf32>
    %263 = arith.addf %262, %261 : vector<8x32xf32>
    %264 = arith.divf %262, %263 : vector<8x32xf32>
    %265 = vector.extract_strided_slice %225 {offsets = [0, 64], sizes = [8, 32], strides = [1, 1]} : vector<8x128xf32> to vector<8x32xf32>
    %266 = math.tanh %265 : vector<8x32xf32>
    %267 = vector.extract_strided_slice %225 {offsets = [0, 96], sizes = [8, 32], strides = [1, 1]} : vector<8x128xf32> to vector<8x32xf32>
    %268 = arith.negf %267 : vector<8x32xf32>
    %269 = math.exp %268 : vector<8x32xf32>
    %cst_80 = arith.constant 1.000000e+00 : f32
    %270 = vector.broadcast %cst_80 : f32 to vector<8x32xf32>
    %271 = arith.addf %270, %269 : vector<8x32xf32>
    %272 = arith.divf %270, %271 : vector<8x32xf32>
    %273 = arith.mulf %264, %252 : vector<8x32xf32>
    %274 = arith.mulf %258, %266 : vector<8x32xf32>
    %275 = arith.addf %273, %274 : vector<8x32xf32>
    %276 = math.tanh %275 : vector<8x32xf32>
    %277 = arith.mulf %272, %276 : vector<8x32xf32>
    %278 = vector.broadcast %c2_i32 : i32 to vector<8x1xi32>
    %279 = arith.cmpi slt, %278, %14 : vector<8x1xi32>
    %280 = vector.broadcast %209 : i32 to vector<8x1xi32>
    %281 = arith.cmpi slt, %280, %14 : vector<8x1xi32>
    %282 = vector.extract_strided_slice %214 {offsets = [0, 0], sizes = [8, 32], strides = [1, 1]} : vector<8x64xf32> to vector<8x32xf32>
    %283 = vector.shape_cast %279 : vector<8x1xi1> to vector<8x1xi1>
    %284 = vector.broadcast %283 : vector<8x1xi1> to vector<8x32xi1>
    %285 = arith.select %284, %251, %282 : vector<8x32xi1>, vector<8x32xf32>
    %286 = vector.extract_strided_slice %215 {offsets = [0, 0], sizes = [8, 32], strides = [1, 1]} : vector<8x64xf32> to vector<8x32xf32>
    %287 = vector.shape_cast %279 : vector<8x1xi1> to vector<8x1xi1>
    %288 = vector.broadcast %287 : vector<8x1xi1> to vector<8x32xi1>
    %289 = arith.select %288, %249, %286 : vector<8x32xi1>, vector<8x32xf32>
    %290 = vector.extract_strided_slice %214 {offsets = [0, 32], sizes = [8, 32], strides = [1, 1]} : vector<8x64xf32> to vector<8x32xf32>
    %291 = vector.shape_cast %281 : vector<8x1xi1> to vector<8x1xi1>
    %292 = vector.broadcast %291 : vector<8x1xi1> to vector<8x32xi1>
    %293 = arith.select %292, %277, %290 : vector<8x32xi1>, vector<8x32xf32>
    %294 = vector.extract_strided_slice %215 {offsets = [0, 32], sizes = [8, 32], strides = [1, 1]} : vector<8x64xf32> to vector<8x32xf32>
    %295 = vector.shape_cast %281 : vector<8x1xi1> to vector<8x1xi1>
    %296 = vector.broadcast %295 : vector<8x1xi1> to vector<8x32xi1>
    %297 = arith.select %296, %275, %294 : vector<8x32xi1>, vector<8x32xf32>
    %298 = tpu.concatenate %285, %293 in 1 : vector<8x32xf32>, vector<8x32xf32> -> vector<8x64xf32>
    %c0_81 = arith.constant 0 : index
    %c0_82 = arith.constant 0 : index
    %299 = vector.load %arg10[%c0_81, %c0_82] : memref<8x64xf32, #tpu.memory_space<vmem>>, vector<8x64xf32>
    tpu.vector_store %arg10[%c0_81, %c0_82], %298 {strides = array<i32>} : memref<8x64xf32, #tpu.memory_space<vmem>>, vector<8x64xf32>,
    %300 = tpu.concatenate %289, %297 in 1 : vector<8x32xf32>, vector<8x32xf32> -> vector<8x64xf32>
    %c0_83 = arith.constant 0 : index
    %c0_84 = arith.constant 0 : index
    %301 = vector.load %arg11[%c0_83, %c0_84] : memref<8x64xf32, #tpu.memory_space<vmem>>, vector<8x64xf32>
    tpu.vector_store %arg11[%c0_83, %c0_84], %300 {strides = array<i32>} : memref<8x64xf32, #tpu.memory_space<vmem>>, vector<8x64xf32>,
    %302 = arith.index_cast %211 : i32 to index
    %c0_85 = arith.constant 0 : index
    %303 = vector.load %arg5[%302, %c0_85] : memref<64x32xf32, #tpu.memory_space<vmem>>, vector<8x32xf32>
    tpu.vector_store %arg5[%302, %c0_85], %285 {strides = array<i32>} : memref<64x32xf32, #tpu.memory_space<vmem>>, vector<8x32xf32>,
    %304 = arith.index_cast %213 : i32 to index
    %c0_86 = arith.constant 0 : index
    %305 = vector.load %arg6[%304, %c0_86] : memref<64x32xf32, #tpu.memory_space<vmem>>, vector<8x32xf32>
    tpu.vector_store %arg6[%304, %c0_86], %293 {strides = array<i32>} : memref<64x32xf32, #tpu.memory_space<vmem>>, vector<8x32xf32>,
    %c3_i32 = arith.constant 3 : i32
    %c7_i32_87 = arith.constant 7 : i32
    %306 = arith.subi %c7_i32_87, %c3_i32 : i32
    %c8_i32_88 = arith.constant 8 : i32
    %307 = arith.muli %c3_i32, %c8_i32_88 : i32
    %308 = tpu.assume_multiple %307, 8 : i32
    %c8_i32_89 = arith.constant 8 : i32
    %309 = arith.muli %306, %c8_i32_89 : i32
    %310 = tpu.assume_multiple %309, 8 : i32
    %c0_90 = arith.constant 0 : index
    %c0_91 = arith.constant 0 : index
    %311 = vector.load %arg10[%c0_90, %c0_91] : memref<8x64xf32, #tpu.memory_space<vmem>>, vector<8x64xf32>
    %c0_92 = arith.constant 0 : index
    %c0_93 = arith.constant 0 : index
    %312 = vector.load %arg11[%c0_92, %c0_93] : memref<8x64xf32, #tpu.memory_space<vmem>>, vector<8x64xf32>
    %c0_94 = arith.constant 0 : index
    %c0_95 = arith.constant 0 : index
    %313 = vector.load %arg3[%c0_94, %c0_95] : memref<64x256xf32, #tpu.memory_space<vmem>>, vector<64x256xf32>
    %cst_96 = arith.constant dense<0.000000e+00> : vector<8x256xf32>
    %314 = tpu.matmul %311, %313, %cst_96 {dimension_numbers = #tpu.dot_dimension_numbers<[1], [0], [0], [1], [0, 0, 1, 1], [], []>} : vector<8x64xf32>, vector<64x256xf32>, vector<8x256xf32> -> vector<8x256xf32>
    %315 = arith.index_cast %308 : i32 to index
    %c0_97 = arith.constant 0 : index
    %316 = vector.load %arg8[%315, %c0_97] : memref<64x128xf32, #tpu.memory_space<vmem>>, vector<8x128xf32>
    %317 = vector.extract_strided_slice %314 {offsets = [0, 0], sizes = [8, 128], strides = [1, 1]} : vector<8x256xf32> to vector<8x128xf32>
    %318 = arith.addf %316, %317 : vector<8x128xf32>
    %319 = arith.index_cast %310 : i32 to index
    %c0_98 = arith.constant 0 : index
    %320 = vector.load %arg9[%319, %c0_98] : memref<64x128xf32, #tpu.memory_space<vmem>>, vector<8x128xf32>
    %321 = vector.extract_strided_slice %314 {offsets = [0, 128], sizes = [8, 128], strides = [1, 1]} : vector<8x256xf32> to vector<8x128xf32>
    %322 = arith.addf %320, %321 : vector<8x128xf32>
    %323 = vector.extract_strided_slice %312 {offsets = [0, 0], sizes = [8, 32], strides = [1, 1]} : vector<8x64xf32> to vector<8x32xf32>
    %324 = vector.extract_strided_slice %318 {offsets = [0, 0], sizes = [8, 32], strides = [1, 1]} : vector<8x128xf32> to vector<8x32xf32>
    %325 = arith.negf %324 : vector<8x32xf32>
    %326 = math.exp %325 : vector<8x32xf32>
    %cst_99 = arith.constant 1.000000e+00 : f32
    %327 = vector.broadcast %cst_99 : f32 to vector<8x32xf32>
    %328 = arith.addf %327, %326 : vector<8x32xf32>
    %329 = arith.divf %327, %328 : vector<8x32xf32>
    %330 = vector.extract_strided_slice %318 {offsets = [0, 32], sizes = [8, 32], strides = [1, 1]} : vector<8x128xf32> to vector<8x32xf32>
    %331 = arith.negf %330 : vector<8x32xf32>
    %332 = math.exp %331 : vector<8x32xf32>
    %cst_100 = arith.constant 1.000000e+00 : f32
    %333 = vector.broadcast %cst_100 : f32 to vector<8x32xf32>
    %334 = arith.addf %333, %332 : vector<8x32xf32>
    %335 = arith.divf %333, %334 : vector<8x32xf32>
    %336 = vector.extract_strided_slice %318 {offsets = [0, 64], sizes = [8, 32], strides = [1, 1]} : vector<8x128xf32> to vector<8x32xf32>
    %337 = math.tanh %336 : vector<8x32xf32>
    %338 = vector.extract_strided_slice %318 {offsets = [0, 96], sizes = [8, 32], strides = [1, 1]} : vector<8x128xf32> to vector<8x32xf32>
    %339 = arith.negf %338 : vector<8x32xf32>
    %340 = math.exp %339 : vector<8x32xf32>
    %cst_101 = arith.constant 1.000000e+00 : f32
    %341 = vector.broadcast %cst_101 : f32 to vector<8x32xf32>
    %342 = arith.addf %341, %340 : vector<8x32xf32>
    %343 = arith.divf %341, %342 : vector<8x32xf32>
    %344 = arith.mulf %335, %323 : vector<8x32xf32>
    %345 = arith.mulf %329, %337 : vector<8x32xf32>
    %346 = arith.addf %344, %345 : vector<8x32xf32>
    %347 = math.tanh %346 : vector<8x32xf32>
    %348 = arith.mulf %343, %347 : vector<8x32xf32>
    %349 = vector.extract_strided_slice %312 {offsets = [0, 32], sizes = [8, 32], strides = [1, 1]} : vector<8x64xf32> to vector<8x32xf32>
    %350 = vector.extract_strided_slice %322 {offsets = [0, 0], sizes = [8, 32], strides = [1, 1]} : vector<8x128xf32> to vector<8x32xf32>
    %351 = arith.negf %350 : vector<8x32xf32>
    %352 = math.exp %351 : vector<8x32xf32>
    %cst_102 = arith.constant 1.000000e+00 : f32
    %353 = vector.broadcast %cst_102 : f32 to vector<8x32xf32>
    %354 = arith.addf %353, %352 : vector<8x32xf32>
    %355 = arith.divf %353, %354 : vector<8x32xf32>
    %356 = vector.extract_strided_slice %322 {offsets = [0, 32], sizes = [8, 32], strides = [1, 1]} : vector<8x128xf32> to vector<8x32xf32>
    %357 = arith.negf %356 : vector<8x32xf32>
    %358 = math.exp %357 : vector<8x32xf32>
    %cst_103 = arith.constant 1.000000e+00 : f32
    %359 = vector.broadcast %cst_103 : f32 to vector<8x32xf32>
    %360 = arith.addf %359, %358 : vector<8x32xf32>
    %361 = arith.divf %359, %360 : vector<8x32xf32>
    %362 = vector.extract_strided_slice %322 {offsets = [0, 64], sizes = [8, 32], strides = [1, 1]} : vector<8x128xf32> to vector<8x32xf32>
    %363 = math.tanh %362 : vector<8x32xf32>
    %364 = vector.extract_strided_slice %322 {offsets = [0, 96], sizes = [8, 32], strides = [1, 1]} : vector<8x128xf32> to vector<8x32xf32>
    %365 = arith.negf %364 : vector<8x32xf32>
    %366 = math.exp %365 : vector<8x32xf32>
    %cst_104 = arith.constant 1.000000e+00 : f32
    %367 = vector.broadcast %cst_104 : f32 to vector<8x32xf32>
    %368 = arith.addf %367, %366 : vector<8x32xf32>
    %369 = arith.divf %367, %368 : vector<8x32xf32>
    %370 = arith.mulf %361, %349 : vector<8x32xf32>
    %371 = arith.mulf %355, %363 : vector<8x32xf32>
    %372 = arith.addf %370, %371 : vector<8x32xf32>
    %373 = math.tanh %372 : vector<8x32xf32>
    %374 = arith.mulf %369, %373 : vector<8x32xf32>
    %375 = vector.broadcast %c3_i32 : i32 to vector<8x1xi32>
    %376 = arith.cmpi slt, %375, %14 : vector<8x1xi32>
    %377 = vector.broadcast %306 : i32 to vector<8x1xi32>
    %378 = arith.cmpi slt, %377, %14 : vector<8x1xi32>
    %379 = vector.extract_strided_slice %311 {offsets = [0, 0], sizes = [8, 32], strides = [1, 1]} : vector<8x64xf32> to vector<8x32xf32>
    %380 = vector.shape_cast %376 : vector<8x1xi1> to vector<8x1xi1>
    %381 = vector.broadcast %380 : vector<8x1xi1> to vector<8x32xi1>
    %382 = arith.select %381, %348, %379 : vector<8x32xi1>, vector<8x32xf32>
    %383 = vector.extract_strided_slice %312 {offsets = [0, 0], sizes = [8, 32], strides = [1, 1]} : vector<8x64xf32> to vector<8x32xf32>
    %384 = vector.shape_cast %376 : vector<8x1xi1> to vector<8x1xi1>
    %385 = vector.broadcast %384 : vector<8x1xi1> to vector<8x32xi1>
    %386 = arith.select %385, %346, %383 : vector<8x32xi1>, vector<8x32xf32>
    %387 = vector.extract_strided_slice %311 {offsets = [0, 32], sizes = [8, 32], strides = [1, 1]} : vector<8x64xf32> to vector<8x32xf32>
    %388 = vector.shape_cast %378 : vector<8x1xi1> to vector<8x1xi1>
    %389 = vector.broadcast %388 : vector<8x1xi1> to vector<8x32xi1>
    %390 = arith.select %389, %374, %387 : vector<8x32xi1>, vector<8x32xf32>
    %391 = vector.extract_strided_slice %312 {offsets = [0, 32], sizes = [8, 32], strides = [1, 1]} : vector<8x64xf32> to vector<8x32xf32>
    %392 = vector.shape_cast %378 : vector<8x1xi1> to vector<8x1xi1>
    %393 = vector.broadcast %392 : vector<8x1xi1> to vector<8x32xi1>
    %394 = arith.select %393, %372, %391 : vector<8x32xi1>, vector<8x32xf32>
    %395 = tpu.concatenate %382, %390 in 1 : vector<8x32xf32>, vector<8x32xf32> -> vector<8x64xf32>
    %c0_105 = arith.constant 0 : index
    %c0_106 = arith.constant 0 : index
    %396 = vector.load %arg10[%c0_105, %c0_106] : memref<8x64xf32, #tpu.memory_space<vmem>>, vector<8x64xf32>
    tpu.vector_store %arg10[%c0_105, %c0_106], %395 {strides = array<i32>} : memref<8x64xf32, #tpu.memory_space<vmem>>, vector<8x64xf32>,
    %397 = tpu.concatenate %386, %394 in 1 : vector<8x32xf32>, vector<8x32xf32> -> vector<8x64xf32>
    %c0_107 = arith.constant 0 : index
    %c0_108 = arith.constant 0 : index
    %398 = vector.load %arg11[%c0_107, %c0_108] : memref<8x64xf32, #tpu.memory_space<vmem>>, vector<8x64xf32>
    tpu.vector_store %arg11[%c0_107, %c0_108], %397 {strides = array<i32>} : memref<8x64xf32, #tpu.memory_space<vmem>>, vector<8x64xf32>,
    %399 = arith.index_cast %308 : i32 to index
    %c0_109 = arith.constant 0 : index
    %400 = vector.load %arg5[%399, %c0_109] : memref<64x32xf32, #tpu.memory_space<vmem>>, vector<8x32xf32>
    tpu.vector_store %arg5[%399, %c0_109], %382 {strides = array<i32>} : memref<64x32xf32, #tpu.memory_space<vmem>>, vector<8x32xf32>,
    %401 = arith.index_cast %310 : i32 to index
    %c0_110 = arith.constant 0 : index
    %402 = vector.load %arg6[%401, %c0_110] : memref<64x32xf32, #tpu.memory_space<vmem>>, vector<8x32xf32>
    tpu.vector_store %arg6[%401, %c0_110], %390 {strides = array<i32>} : memref<64x32xf32, #tpu.memory_space<vmem>>, vector<8x32xf32>,
    %c4_i32 = arith.constant 4 : i32
    %c7_i32_111 = arith.constant 7 : i32
    %403 = arith.subi %c7_i32_111, %c4_i32 : i32
    %c8_i32_112 = arith.constant 8 : i32
    %404 = arith.muli %c4_i32, %c8_i32_112 : i32
    %405 = tpu.assume_multiple %404, 8 : i32
    %c8_i32_113 = arith.constant 8 : i32
    %406 = arith.muli %403, %c8_i32_113 : i32
    %407 = tpu.assume_multiple %406, 8 : i32
    %c0_114 = arith.constant 0 : index
    %c0_115 = arith.constant 0 : index
    %408 = vector.load %arg10[%c0_114, %c0_115] : memref<8x64xf32, #tpu.memory_space<vmem>>, vector<8x64xf32>
    %c0_116 = arith.constant 0 : index
    %c0_117 = arith.constant 0 : index
    %409 = vector.load %arg11[%c0_116, %c0_117] : memref<8x64xf32, #tpu.memory_space<vmem>>, vector<8x64xf32>
    %c0_118 = arith.constant 0 : index
    %c0_119 = arith.constant 0 : index
    %410 = vector.load %arg3[%c0_118, %c0_119] : memref<64x256xf32, #tpu.memory_space<vmem>>, vector<64x256xf32>
    %cst_120 = arith.constant dense<0.000000e+00> : vector<8x256xf32>
    %411 = tpu.matmul %408, %410, %cst_120 {dimension_numbers = #tpu.dot_dimension_numbers<[1], [0], [0], [1], [0, 0, 1, 1], [], []>} : vector<8x64xf32>, vector<64x256xf32>, vector<8x256xf32> -> vector<8x256xf32>
    %412 = arith.index_cast %405 : i32 to index
    %c0_121 = arith.constant 0 : index
    %413 = vector.load %arg8[%412, %c0_121] : memref<64x128xf32, #tpu.memory_space<vmem>>, vector<8x128xf32>
    %414 = vector.extract_strided_slice %411 {offsets = [0, 0], sizes = [8, 128], strides = [1, 1]} : vector<8x256xf32> to vector<8x128xf32>
    %415 = arith.addf %413, %414 : vector<8x128xf32>
    %416 = arith.index_cast %407 : i32 to index
    %c0_122 = arith.constant 0 : index
    %417 = vector.load %arg9[%416, %c0_122] : memref<64x128xf32, #tpu.memory_space<vmem>>, vector<8x128xf32>
    %418 = vector.extract_strided_slice %411 {offsets = [0, 128], sizes = [8, 128], strides = [1, 1]} : vector<8x256xf32> to vector<8x128xf32>
    %419 = arith.addf %417, %418 : vector<8x128xf32>
    %420 = vector.extract_strided_slice %409 {offsets = [0, 0], sizes = [8, 32], strides = [1, 1]} : vector<8x64xf32> to vector<8x32xf32>
    %421 = vector.extract_strided_slice %415 {offsets = [0, 0], sizes = [8, 32], strides = [1, 1]} : vector<8x128xf32> to vector<8x32xf32>
    %422 = arith.negf %421 : vector<8x32xf32>
    %423 = math.exp %422 : vector<8x32xf32>
    %cst_123 = arith.constant 1.000000e+00 : f32
    %424 = vector.broadcast %cst_123 : f32 to vector<8x32xf32>
    %425 = arith.addf %424, %423 : vector<8x32xf32>
    %426 = arith.divf %424, %425 : vector<8x32xf32>
    %427 = vector.extract_strided_slice %415 {offsets = [0, 32], sizes = [8, 32], strides = [1, 1]} : vector<8x128xf32> to vector<8x32xf32>
    %428 = arith.negf %427 : vector<8x32xf32>
    %429 = math.exp %428 : vector<8x32xf32>
    %cst_124 = arith.constant 1.000000e+00 : f32
    %430 = vector.broadcast %cst_124 : f32 to vector<8x32xf32>
    %431 = arith.addf %430, %429 : vector<8x32xf32>
    %432 = arith.divf %430, %431 : vector<8x32xf32>
    %433 = vector.extract_strided_slice %415 {offsets = [0, 64], sizes = [8, 32], strides = [1, 1]} : vector<8x128xf32> to vector<8x32xf32>
    %434 = math.tanh %433 : vector<8x32xf32>
    %435 = vector.extract_strided_slice %415 {offsets = [0, 96], sizes = [8, 32], strides = [1, 1]} : vector<8x128xf32> to vector<8x32xf32>
    %436 = arith.negf %435 : vector<8x32xf32>
    %437 = math.exp %436 : vector<8x32xf32>
    %cst_125 = arith.constant 1.000000e+00 : f32
    %438 = vector.broadcast %cst_125 : f32 to vector<8x32xf32>
    %439 = arith.addf %438, %437 : vector<8x32xf32>
    %440 = arith.divf %438, %439 : vector<8x32xf32>
    %441 = arith.mulf %432, %420 : vector<8x32xf32>
    %442 = arith.mulf %426, %434 : vector<8x32xf32>
    %443 = arith.addf %441, %442 : vector<8x32xf32>
    %444 = math.tanh %443 : vector<8x32xf32>
    %445 = arith.mulf %440, %444 : vector<8x32xf32>
    %446 = vector.extract_strided_slice %409 {offsets = [0, 32], sizes = [8, 32], strides = [1, 1]} : vector<8x64xf32> to vector<8x32xf32>
    %447 = vector.extract_strided_slice %419 {offsets = [0, 0], sizes = [8, 32], strides = [1, 1]} : vector<8x128xf32> to vector<8x32xf32>
    %448 = arith.negf %447 : vector<8x32xf32>
    %449 = math.exp %448 : vector<8x32xf32>
    %cst_126 = arith.constant 1.000000e+00 : f32
    %450 = vector.broadcast %cst_126 : f32 to vector<8x32xf32>
    %451 = arith.addf %450, %449 : vector<8x32xf32>
    %452 = arith.divf %450, %451 : vector<8x32xf32>
    %453 = vector.extract_strided_slice %419 {offsets = [0, 32], sizes = [8, 32], strides = [1, 1]} : vector<8x128xf32> to vector<8x32xf32>
    %454 = arith.negf %453 : vector<8x32xf32>
    %455 = math.exp %454 : vector<8x32xf32>
    %cst_127 = arith.constant 1.000000e+00 : f32
    %456 = vector.broadcast %cst_127 : f32 to vector<8x32xf32>
    %457 = arith.addf %456, %455 : vector<8x32xf32>
    %458 = arith.divf %456, %457 : vector<8x32xf32>
    %459 = vector.extract_strided_slice %419 {offsets = [0, 64], sizes = [8, 32], strides = [1, 1]} : vector<8x128xf32> to vector<8x32xf32>
    %460 = math.tanh %459 : vector<8x32xf32>
    %461 = vector.extract_strided_slice %419 {offsets = [0, 96], sizes = [8, 32], strides = [1, 1]} : vector<8x128xf32> to vector<8x32xf32>
    %462 = arith.negf %461 : vector<8x32xf32>
    %463 = math.exp %462 : vector<8x32xf32>
    %cst_128 = arith.constant 1.000000e+00 : f32
    %464 = vector.broadcast %cst_128 : f32 to vector<8x32xf32>
    %465 = arith.addf %464, %463 : vector<8x32xf32>
    %466 = arith.divf %464, %465 : vector<8x32xf32>
    %467 = arith.mulf %458, %446 : vector<8x32xf32>
    %468 = arith.mulf %452, %460 : vector<8x32xf32>
    %469 = arith.addf %467, %468 : vector<8x32xf32>
    %470 = math.tanh %469 : vector<8x32xf32>
    %471 = arith.mulf %466, %470 : vector<8x32xf32>
    %472 = vector.broadcast %c4_i32 : i32 to vector<8x1xi32>
    %473 = arith.cmpi slt, %472, %14 : vector<8x1xi32>
    %474 = vector.broadcast %403 : i32 to vector<8x1xi32>
    %475 = arith.cmpi slt, %474, %14 : vector<8x1xi32>
    %476 = vector.extract_strided_slice %408 {offsets = [0, 0], sizes = [8, 32], strides = [1, 1]} : vector<8x64xf32> to vector<8x32xf32>
    %477 = vector.shape_cast %473 : vector<8x1xi1> to vector<8x1xi1>
    %478 = vector.broadcast %477 : vector<8x1xi1> to vector<8x32xi1>
    %479 = arith.select %478, %445, %476 : vector<8x32xi1>, vector<8x32xf32>
    %480 = vector.extract_strided_slice %409 {offsets = [0, 0], sizes = [8, 32], strides = [1, 1]} : vector<8x64xf32> to vector<8x32xf32>
    %481 = vector.shape_cast %473 : vector<8x1xi1> to vector<8x1xi1>
    %482 = vector.broadcast %481 : vector<8x1xi1> to vector<8x32xi1>
    %483 = arith.select %482, %443, %480 : vector<8x32xi1>, vector<8x32xf32>
    %484 = vector.extract_strided_slice %408 {offsets = [0, 32], sizes = [8, 32], strides = [1, 1]} : vector<8x64xf32> to vector<8x32xf32>
    %485 = vector.shape_cast %475 : vector<8x1xi1> to vector<8x1xi1>
    %486 = vector.broadcast %485 : vector<8x1xi1> to vector<8x32xi1>
    %487 = arith.select %486, %471, %484 : vector<8x32xi1>, vector<8x32xf32>
    %488 = vector.extract_strided_slice %409 {offsets = [0, 32], sizes = [8, 32], strides = [1, 1]} : vector<8x64xf32> to vector<8x32xf32>
    %489 = vector.shape_cast %475 : vector<8x1xi1> to vector<8x1xi1>
    %490 = vector.broadcast %489 : vector<8x1xi1> to vector<8x32xi1>
    %491 = arith.select %490, %469, %488 : vector<8x32xi1>, vector<8x32xf32>
    %492 = tpu.concatenate %479, %487 in 1 : vector<8x32xf32>, vector<8x32xf32> -> vector<8x64xf32>
    %c0_129 = arith.constant 0 : index
    %c0_130 = arith.constant 0 : index
    %493 = vector.load %arg10[%c0_129, %c0_130] : memref<8x64xf32, #tpu.memory_space<vmem>>, vector<8x64xf32>
    tpu.vector_store %arg10[%c0_129, %c0_130], %492 {strides = array<i32>} : memref<8x64xf32, #tpu.memory_space<vmem>>, vector<8x64xf32>,
    %494 = tpu.concatenate %483, %491 in 1 : vector<8x32xf32>, vector<8x32xf32> -> vector<8x64xf32>
    %c0_131 = arith.constant 0 : index
    %c0_132 = arith.constant 0 : index
    %495 = vector.load %arg11[%c0_131, %c0_132] : memref<8x64xf32, #tpu.memory_space<vmem>>, vector<8x64xf32>
    tpu.vector_store %arg11[%c0_131, %c0_132], %494 {strides = array<i32>} : memref<8x64xf32, #tpu.memory_space<vmem>>, vector<8x64xf32>,
    %496 = arith.index_cast %405 : i32 to index
    %c0_133 = arith.constant 0 : index
    %497 = vector.load %arg5[%496, %c0_133] : memref<64x32xf32, #tpu.memory_space<vmem>>, vector<8x32xf32>
    tpu.vector_store %arg5[%496, %c0_133], %479 {strides = array<i32>} : memref<64x32xf32, #tpu.memory_space<vmem>>, vector<8x32xf32>,
    %498 = arith.index_cast %407 : i32 to index
    %c0_134 = arith.constant 0 : index
    %499 = vector.load %arg6[%498, %c0_134] : memref<64x32xf32, #tpu.memory_space<vmem>>, vector<8x32xf32>
    tpu.vector_store %arg6[%498, %c0_134], %487 {strides = array<i32>} : memref<64x32xf32, #tpu.memory_space<vmem>>, vector<8x32xf32>,
    %c5_i32 = arith.constant 5 : i32
    %c7_i32_135 = arith.constant 7 : i32
    %500 = arith.subi %c7_i32_135, %c5_i32 : i32
    %c8_i32_136 = arith.constant 8 : i32
    %501 = arith.muli %c5_i32, %c8_i32_136 : i32
    %502 = tpu.assume_multiple %501, 8 : i32
    %c8_i32_137 = arith.constant 8 : i32
    %503 = arith.muli %500, %c8_i32_137 : i32
    %504 = tpu.assume_multiple %503, 8 : i32
    %c0_138 = arith.constant 0 : index
    %c0_139 = arith.constant 0 : index
    %505 = vector.load %arg10[%c0_138, %c0_139] : memref<8x64xf32, #tpu.memory_space<vmem>>, vector<8x64xf32>
    %c0_140 = arith.constant 0 : index
    %c0_141 = arith.constant 0 : index
    %506 = vector.load %arg11[%c0_140, %c0_141] : memref<8x64xf32, #tpu.memory_space<vmem>>, vector<8x64xf32>
    %c0_142 = arith.constant 0 : index
    %c0_143 = arith.constant 0 : index
    %507 = vector.load %arg3[%c0_142, %c0_143] : memref<64x256xf32, #tpu.memory_space<vmem>>, vector<64x256xf32>
    %cst_144 = arith.constant dense<0.000000e+00> : vector<8x256xf32>
    %508 = tpu.matmul %505, %507, %cst_144 {dimension_numbers = #tpu.dot_dimension_numbers<[1], [0], [0], [1], [0, 0, 1, 1], [], []>} : vector<8x64xf32>, vector<64x256xf32>, vector<8x256xf32> -> vector<8x256xf32>
    %509 = arith.index_cast %502 : i32 to index
    %c0_145 = arith.constant 0 : index
    %510 = vector.load %arg8[%509, %c0_145] : memref<64x128xf32, #tpu.memory_space<vmem>>, vector<8x128xf32>
    %511 = vector.extract_strided_slice %508 {offsets = [0, 0], sizes = [8, 128], strides = [1, 1]} : vector<8x256xf32> to vector<8x128xf32>
    %512 = arith.addf %510, %511 : vector<8x128xf32>
    %513 = arith.index_cast %504 : i32 to index
    %c0_146 = arith.constant 0 : index
    %514 = vector.load %arg9[%513, %c0_146] : memref<64x128xf32, #tpu.memory_space<vmem>>, vector<8x128xf32>
    %515 = vector.extract_strided_slice %508 {offsets = [0, 128], sizes = [8, 128], strides = [1, 1]} : vector<8x256xf32> to vector<8x128xf32>
    %516 = arith.addf %514, %515 : vector<8x128xf32>
    %517 = vector.extract_strided_slice %506 {offsets = [0, 0], sizes = [8, 32], strides = [1, 1]} : vector<8x64xf32> to vector<8x32xf32>
    %518 = vector.extract_strided_slice %512 {offsets = [0, 0], sizes = [8, 32], strides = [1, 1]} : vector<8x128xf32> to vector<8x32xf32>
    %519 = arith.negf %518 : vector<8x32xf32>
    %520 = math.exp %519 : vector<8x32xf32>
    %cst_147 = arith.constant 1.000000e+00 : f32
    %521 = vector.broadcast %cst_147 : f32 to vector<8x32xf32>
    %522 = arith.addf %521, %520 : vector<8x32xf32>
    %523 = arith.divf %521, %522 : vector<8x32xf32>
    %524 = vector.extract_strided_slice %512 {offsets = [0, 32], sizes = [8, 32], strides = [1, 1]} : vector<8x128xf32> to vector<8x32xf32>
    %525 = arith.negf %524 : vector<8x32xf32>
    %526 = math.exp %525 : vector<8x32xf32>
    %cst_148 = arith.constant 1.000000e+00 : f32
    %527 = vector.broadcast %cst_148 : f32 to vector<8x32xf32>
    %528 = arith.addf %527, %526 : vector<8x32xf32>
    %529 = arith.divf %527, %528 : vector<8x32xf32>
    %530 = vector.extract_strided_slice %512 {offsets = [0, 64], sizes = [8, 32], strides = [1, 1]} : vector<8x128xf32> to vector<8x32xf32>
    %531 = math.tanh %530 : vector<8x32xf32>
    %532 = vector.extract_strided_slice %512 {offsets = [0, 96], sizes = [8, 32], strides = [1, 1]} : vector<8x128xf32> to vector<8x32xf32>
    %533 = arith.negf %532 : vector<8x32xf32>
    %534 = math.exp %533 : vector<8x32xf32>
    %cst_149 = arith.constant 1.000000e+00 : f32
    %535 = vector.broadcast %cst_149 : f32 to vector<8x32xf32>
    %536 = arith.addf %535, %534 : vector<8x32xf32>
    %537 = arith.divf %535, %536 : vector<8x32xf32>
    %538 = arith.mulf %529, %517 : vector<8x32xf32>
    %539 = arith.mulf %523, %531 : vector<8x32xf32>
    %540 = arith.addf %538, %539 : vector<8x32xf32>
    %541 = math.tanh %540 : vector<8x32xf32>
    %542 = arith.mulf %537, %541 : vector<8x32xf32>
    %543 = vector.extract_strided_slice %506 {offsets = [0, 32], sizes = [8, 32], strides = [1, 1]} : vector<8x64xf32> to vector<8x32xf32>
    %544 = vector.extract_strided_slice %516 {offsets = [0, 0], sizes = [8, 32], strides = [1, 1]} : vector<8x128xf32> to vector<8x32xf32>
    %545 = arith.negf %544 : vector<8x32xf32>
    %546 = math.exp %545 : vector<8x32xf32>
    %cst_150 = arith.constant 1.000000e+00 : f32
    %547 = vector.broadcast %cst_150 : f32 to vector<8x32xf32>
    %548 = arith.addf %547, %546 : vector<8x32xf32>
    %549 = arith.divf %547, %548 : vector<8x32xf32>
    %550 = vector.extract_strided_slice %516 {offsets = [0, 32], sizes = [8, 32], strides = [1, 1]} : vector<8x128xf32> to vector<8x32xf32>
    %551 = arith.negf %550 : vector<8x32xf32>
    %552 = math.exp %551 : vector<8x32xf32>
    %cst_151 = arith.constant 1.000000e+00 : f32
    %553 = vector.broadcast %cst_151 : f32 to vector<8x32xf32>
    %554 = arith.addf %553, %552 : vector<8x32xf32>
    %555 = arith.divf %553, %554 : vector<8x32xf32>
    %556 = vector.extract_strided_slice %516 {offsets = [0, 64], sizes = [8, 32], strides = [1, 1]} : vector<8x128xf32> to vector<8x32xf32>
    %557 = math.tanh %556 : vector<8x32xf32>
    %558 = vector.extract_strided_slice %516 {offsets = [0, 96], sizes = [8, 32], strides = [1, 1]} : vector<8x128xf32> to vector<8x32xf32>
    %559 = arith.negf %558 : vector<8x32xf32>
    %560 = math.exp %559 : vector<8x32xf32>
    %cst_152 = arith.constant 1.000000e+00 : f32
    %561 = vector.broadcast %cst_152 : f32 to vector<8x32xf32>
    %562 = arith.addf %561, %560 : vector<8x32xf32>
    %563 = arith.divf %561, %562 : vector<8x32xf32>
    %564 = arith.mulf %555, %543 : vector<8x32xf32>
    %565 = arith.mulf %549, %557 : vector<8x32xf32>
    %566 = arith.addf %564, %565 : vector<8x32xf32>
    %567 = math.tanh %566 : vector<8x32xf32>
    %568 = arith.mulf %563, %567 : vector<8x32xf32>
    %569 = vector.broadcast %c5_i32 : i32 to vector<8x1xi32>
    %570 = arith.cmpi slt, %569, %14 : vector<8x1xi32>
    %571 = vector.broadcast %500 : i32 to vector<8x1xi32>
    %572 = arith.cmpi slt, %571, %14 : vector<8x1xi32>
    %573 = vector.extract_strided_slice %505 {offsets = [0, 0], sizes = [8, 32], strides = [1, 1]} : vector<8x64xf32> to vector<8x32xf32>
    %574 = vector.shape_cast %570 : vector<8x1xi1> to vector<8x1xi1>
    %575 = vector.broadcast %574 : vector<8x1xi1> to vector<8x32xi1>
    %576 = arith.select %575, %542, %573 : vector<8x32xi1>, vector<8x32xf32>
    %577 = vector.extract_strided_slice %506 {offsets = [0, 0], sizes = [8, 32], strides = [1, 1]} : vector<8x64xf32> to vector<8x32xf32>
    %578 = vector.shape_cast %570 : vector<8x1xi1> to vector<8x1xi1>
    %579 = vector.broadcast %578 : vector<8x1xi1> to vector<8x32xi1>
    %580 = arith.select %579, %540, %577 : vector<8x32xi1>, vector<8x32xf32>
    %581 = vector.extract_strided_slice %505 {offsets = [0, 32], sizes = [8, 32], strides = [1, 1]} : vector<8x64xf32> to vector<8x32xf32>
    %582 = vector.shape_cast %572 : vector<8x1xi1> to vector<8x1xi1>
    %583 = vector.broadcast %582 : vector<8x1xi1> to vector<8x32xi1>
    %584 = arith.select %583, %568, %581 : vector<8x32xi1>, vector<8x32xf32>
    %585 = vector.extract_strided_slice %506 {offsets = [0, 32], sizes = [8, 32], strides = [1, 1]} : vector<8x64xf32> to vector<8x32xf32>
    %586 = vector.shape_cast %572 : vector<8x1xi1> to vector<8x1xi1>
    %587 = vector.broadcast %586 : vector<8x1xi1> to vector<8x32xi1>
    %588 = arith.select %587, %566, %585 : vector<8x32xi1>, vector<8x32xf32>
    %589 = tpu.concatenate %576, %584 in 1 : vector<8x32xf32>, vector<8x32xf32> -> vector<8x64xf32>
    %c0_153 = arith.constant 0 : index
    %c0_154 = arith.constant 0 : index
    %590 = vector.load %arg10[%c0_153, %c0_154] : memref<8x64xf32, #tpu.memory_space<vmem>>, vector<8x64xf32>
    tpu.vector_store %arg10[%c0_153, %c0_154], %589 {strides = array<i32>} : memref<8x64xf32, #tpu.memory_space<vmem>>, vector<8x64xf32>,
    %591 = tpu.concatenate %580, %588 in 1 : vector<8x32xf32>, vector<8x32xf32> -> vector<8x64xf32>
    %c0_155 = arith.constant 0 : index
    %c0_156 = arith.constant 0 : index
    %592 = vector.load %arg11[%c0_155, %c0_156] : memref<8x64xf32, #tpu.memory_space<vmem>>, vector<8x64xf32>
    tpu.vector_store %arg11[%c0_155, %c0_156], %591 {strides = array<i32>} : memref<8x64xf32, #tpu.memory_space<vmem>>, vector<8x64xf32>,
    %593 = arith.index_cast %502 : i32 to index
    %c0_157 = arith.constant 0 : index
    %594 = vector.load %arg5[%593, %c0_157] : memref<64x32xf32, #tpu.memory_space<vmem>>, vector<8x32xf32>
    tpu.vector_store %arg5[%593, %c0_157], %576 {strides = array<i32>} : memref<64x32xf32, #tpu.memory_space<vmem>>, vector<8x32xf32>,
    %595 = arith.index_cast %504 : i32 to index
    %c0_158 = arith.constant 0 : index
    %596 = vector.load %arg6[%595, %c0_158] : memref<64x32xf32, #tpu.memory_space<vmem>>, vector<8x32xf32>
    tpu.vector_store %arg6[%595, %c0_158], %584 {strides = array<i32>} : memref<64x32xf32, #tpu.memory_space<vmem>>, vector<8x32xf32>,
    %c6_i32 = arith.constant 6 : i32
    %c7_i32_159 = arith.constant 7 : i32
    %597 = arith.subi %c7_i32_159, %c6_i32 : i32
    %c8_i32_160 = arith.constant 8 : i32
    %598 = arith.muli %c6_i32, %c8_i32_160 : i32
    %599 = tpu.assume_multiple %598, 8 : i32
    %c8_i32_161 = arith.constant 8 : i32
    %600 = arith.muli %597, %c8_i32_161 : i32
    %601 = tpu.assume_multiple %600, 8 : i32
    %c0_162 = arith.constant 0 : index
    %c0_163 = arith.constant 0 : index
    %602 = vector.load %arg10[%c0_162, %c0_163] : memref<8x64xf32, #tpu.memory_space<vmem>>, vector<8x64xf32>
    %c0_164 = arith.constant 0 : index
    %c0_165 = arith.constant 0 : index
    %603 = vector.load %arg11[%c0_164, %c0_165] : memref<8x64xf32, #tpu.memory_space<vmem>>, vector<8x64xf32>
    %c0_166 = arith.constant 0 : index
    %c0_167 = arith.constant 0 : index
    %604 = vector.load %arg3[%c0_166, %c0_167] : memref<64x256xf32, #tpu.memory_space<vmem>>, vector<64x256xf32>
    %cst_168 = arith.constant dense<0.000000e+00> : vector<8x256xf32>
    %605 = tpu.matmul %602, %604, %cst_168 {dimension_numbers = #tpu.dot_dimension_numbers<[1], [0], [0], [1], [0, 0, 1, 1], [], []>} : vector<8x64xf32>, vector<64x256xf32>, vector<8x256xf32> -> vector<8x256xf32>
    %606 = arith.index_cast %599 : i32 to index
    %c0_169 = arith.constant 0 : index
    %607 = vector.load %arg8[%606, %c0_169] : memref<64x128xf32, #tpu.memory_space<vmem>>, vector<8x128xf32>
    %608 = vector.extract_strided_slice %605 {offsets = [0, 0], sizes = [8, 128], strides = [1, 1]} : vector<8x256xf32> to vector<8x128xf32>
    %609 = arith.addf %607, %608 : vector<8x128xf32>
    %610 = arith.index_cast %601 : i32 to index
    %c0_170 = arith.constant 0 : index
    %611 = vector.load %arg9[%610, %c0_170] : memref<64x128xf32, #tpu.memory_space<vmem>>, vector<8x128xf32>
    %612 = vector.extract_strided_slice %605 {offsets = [0, 128], sizes = [8, 128], strides = [1, 1]} : vector<8x256xf32> to vector<8x128xf32>
    %613 = arith.addf %611, %612 : vector<8x128xf32>
    %614 = vector.extract_strided_slice %603 {offsets = [0, 0], sizes = [8, 32], strides = [1, 1]} : vector<8x64xf32> to vector<8x32xf32>
    %615 = vector.extract_strided_slice %609 {offsets = [0, 0], sizes = [8, 32], strides = [1, 1]} : vector<8x128xf32> to vector<8x32xf32>
    %616 = arith.negf %615 : vector<8x32xf32>
    %617 = math.exp %616 : vector<8x32xf32>
    %cst_171 = arith.constant 1.000000e+00 : f32
    %618 = vector.broadcast %cst_171 : f32 to vector<8x32xf32>
    %619 = arith.addf %618, %617 : vector<8x32xf32>
    %620 = arith.divf %618, %619 : vector<8x32xf32>
    %621 = vector.extract_strided_slice %609 {offsets = [0, 32], sizes = [8, 32], strides = [1, 1]} : vector<8x128xf32> to vector<8x32xf32>
    %622 = arith.negf %621 : vector<8x32xf32>
    %623 = math.exp %622 : vector<8x32xf32>
    %cst_172 = arith.constant 1.000000e+00 : f32
    %624 = vector.broadcast %cst_172 : f32 to vector<8x32xf32>
    %625 = arith.addf %624, %623 : vector<8x32xf32>
    %626 = arith.divf %624, %625 : vector<8x32xf32>
    %627 = vector.extract_strided_slice %609 {offsets = [0, 64], sizes = [8, 32], strides = [1, 1]} : vector<8x128xf32> to vector<8x32xf32>
    %628 = math.tanh %627 : vector<8x32xf32>
    %629 = vector.extract_strided_slice %609 {offsets = [0, 96], sizes = [8, 32], strides = [1, 1]} : vector<8x128xf32> to vector<8x32xf32>
    %630 = arith.negf %629 : vector<8x32xf32>
    %631 = math.exp %630 : vector<8x32xf32>
    %cst_173 = arith.constant 1.000000e+00 : f32
    %632 = vector.broadcast %cst_173 : f32 to vector<8x32xf32>
    %633 = arith.addf %632, %631 : vector<8x32xf32>
    %634 = arith.divf %632, %633 : vector<8x32xf32>
    %635 = arith.mulf %626, %614 : vector<8x32xf32>
    %636 = arith.mulf %620, %628 : vector<8x32xf32>
    %637 = arith.addf %635, %636 : vector<8x32xf32>
    %638 = math.tanh %637 : vector<8x32xf32>
    %639 = arith.mulf %634, %638 : vector<8x32xf32>
    %640 = vector.extract_strided_slice %603 {offsets = [0, 32], sizes = [8, 32], strides = [1, 1]} : vector<8x64xf32> to vector<8x32xf32>
    %641 = vector.extract_strided_slice %613 {offsets = [0, 0], sizes = [8, 32], strides = [1, 1]} : vector<8x128xf32> to vector<8x32xf32>
    %642 = arith.negf %641 : vector<8x32xf32>
    %643 = math.exp %642 : vector<8x32xf32>
    %cst_174 = arith.constant 1.000000e+00 : f32
    %644 = vector.broadcast %cst_174 : f32 to vector<8x32xf32>
    %645 = arith.addf %644, %643 : vector<8x32xf32>
    %646 = arith.divf %644, %645 : vector<8x32xf32>
    %647 = vector.extract_strided_slice %613 {offsets = [0, 32], sizes = [8, 32], strides = [1, 1]} : vector<8x128xf32> to vector<8x32xf32>
    %648 = arith.negf %647 : vector<8x32xf32>
    %649 = math.exp %648 : vector<8x32xf32>
    %cst_175 = arith.constant 1.000000e+00 : f32
    %650 = vector.broadcast %cst_175 : f32 to vector<8x32xf32>
    %651 = arith.addf %650, %649 : vector<8x32xf32>
    %652 = arith.divf %650, %651 : vector<8x32xf32>
    %653 = vector.extract_strided_slice %613 {offsets = [0, 64], sizes = [8, 32], strides = [1, 1]} : vector<8x128xf32> to vector<8x32xf32>
    %654 = math.tanh %653 : vector<8x32xf32>
    %655 = vector.extract_strided_slice %613 {offsets = [0, 96], sizes = [8, 32], strides = [1, 1]} : vector<8x128xf32> to vector<8x32xf32>
    %656 = arith.negf %655 : vector<8x32xf32>
    %657 = math.exp %656 : vector<8x32xf32>
    %cst_176 = arith.constant 1.000000e+00 : f32
    %658 = vector.broadcast %cst_176 : f32 to vector<8x32xf32>
    %659 = arith.addf %658, %657 : vector<8x32xf32>
    %660 = arith.divf %658, %659 : vector<8x32xf32>
    %661 = arith.mulf %652, %640 : vector<8x32xf32>
    %662 = arith.mulf %646, %654 : vector<8x32xf32>
    %663 = arith.addf %661, %662 : vector<8x32xf32>
    %664 = math.tanh %663 : vector<8x32xf32>
    %665 = arith.mulf %660, %664 : vector<8x32xf32>
    %666 = vector.broadcast %c6_i32 : i32 to vector<8x1xi32>
    %667 = arith.cmpi slt, %666, %14 : vector<8x1xi32>
    %668 = vector.broadcast %597 : i32 to vector<8x1xi32>
    %669 = arith.cmpi slt, %668, %14 : vector<8x1xi32>
    %670 = vector.extract_strided_slice %602 {offsets = [0, 0], sizes = [8, 32], strides = [1, 1]} : vector<8x64xf32> to vector<8x32xf32>
    %671 = vector.shape_cast %667 : vector<8x1xi1> to vector<8x1xi1>
    %672 = vector.broadcast %671 : vector<8x1xi1> to vector<8x32xi1>
    %673 = arith.select %672, %639, %670 : vector<8x32xi1>, vector<8x32xf32>
    %674 = vector.extract_strided_slice %603 {offsets = [0, 0], sizes = [8, 32], strides = [1, 1]} : vector<8x64xf32> to vector<8x32xf32>
    %675 = vector.shape_cast %667 : vector<8x1xi1> to vector<8x1xi1>
    %676 = vector.broadcast %675 : vector<8x1xi1> to vector<8x32xi1>
    %677 = arith.select %676, %637, %674 : vector<8x32xi1>, vector<8x32xf32>
    %678 = vector.extract_strided_slice %602 {offsets = [0, 32], sizes = [8, 32], strides = [1, 1]} : vector<8x64xf32> to vector<8x32xf32>
    %679 = vector.shape_cast %669 : vector<8x1xi1> to vector<8x1xi1>
    %680 = vector.broadcast %679 : vector<8x1xi1> to vector<8x32xi1>
    %681 = arith.select %680, %665, %678 : vector<8x32xi1>, vector<8x32xf32>
    %682 = vector.extract_strided_slice %603 {offsets = [0, 32], sizes = [8, 32], strides = [1, 1]} : vector<8x64xf32> to vector<8x32xf32>
    %683 = vector.shape_cast %669 : vector<8x1xi1> to vector<8x1xi1>
    %684 = vector.broadcast %683 : vector<8x1xi1> to vector<8x32xi1>
    %685 = arith.select %684, %663, %682 : vector<8x32xi1>, vector<8x32xf32>
    %686 = tpu.concatenate %673, %681 in 1 : vector<8x32xf32>, vector<8x32xf32> -> vector<8x64xf32>
    %c0_177 = arith.constant 0 : index
    %c0_178 = arith.constant 0 : index
    %687 = vector.load %arg10[%c0_177, %c0_178] : memref<8x64xf32, #tpu.memory_space<vmem>>, vector<8x64xf32>
    tpu.vector_store %arg10[%c0_177, %c0_178], %686 {strides = array<i32>} : memref<8x64xf32, #tpu.memory_space<vmem>>, vector<8x64xf32>,
    %688 = tpu.concatenate %677, %685 in 1 : vector<8x32xf32>, vector<8x32xf32> -> vector<8x64xf32>
    %c0_179 = arith.constant 0 : index
    %c0_180 = arith.constant 0 : index
    %689 = vector.load %arg11[%c0_179, %c0_180] : memref<8x64xf32, #tpu.memory_space<vmem>>, vector<8x64xf32>
    tpu.vector_store %arg11[%c0_179, %c0_180], %688 {strides = array<i32>} : memref<8x64xf32, #tpu.memory_space<vmem>>, vector<8x64xf32>,
    %690 = arith.index_cast %599 : i32 to index
    %c0_181 = arith.constant 0 : index
    %691 = vector.load %arg5[%690, %c0_181] : memref<64x32xf32, #tpu.memory_space<vmem>>, vector<8x32xf32>
    tpu.vector_store %arg5[%690, %c0_181], %673 {strides = array<i32>} : memref<64x32xf32, #tpu.memory_space<vmem>>, vector<8x32xf32>,
    %692 = arith.index_cast %601 : i32 to index
    %c0_182 = arith.constant 0 : index
    %693 = vector.load %arg6[%692, %c0_182] : memref<64x32xf32, #tpu.memory_space<vmem>>, vector<8x32xf32>
    tpu.vector_store %arg6[%692, %c0_182], %681 {strides = array<i32>} : memref<64x32xf32, #tpu.memory_space<vmem>>, vector<8x32xf32>,
    %c7_i32_183 = arith.constant 7 : i32
    %c7_i32_184 = arith.constant 7 : i32
    %694 = arith.subi %c7_i32_184, %c7_i32_183 : i32
    %c8_i32_185 = arith.constant 8 : i32
    %695 = arith.muli %c7_i32_183, %c8_i32_185 : i32
    %696 = tpu.assume_multiple %695, 8 : i32
    %c8_i32_186 = arith.constant 8 : i32
    %697 = arith.muli %694, %c8_i32_186 : i32
    %698 = tpu.assume_multiple %697, 8 : i32
    %c0_187 = arith.constant 0 : index
    %c0_188 = arith.constant 0 : index
    %699 = vector.load %arg10[%c0_187, %c0_188] : memref<8x64xf32, #tpu.memory_space<vmem>>, vector<8x64xf32>
    %c0_189 = arith.constant 0 : index
    %c0_190 = arith.constant 0 : index
    %700 = vector.load %arg11[%c0_189, %c0_190] : memref<8x64xf32, #tpu.memory_space<vmem>>, vector<8x64xf32>
    %c0_191 = arith.constant 0 : index
    %c0_192 = arith.constant 0 : index
    %701 = vector.load %arg3[%c0_191, %c0_192] : memref<64x256xf32, #tpu.memory_space<vmem>>, vector<64x256xf32>
    %cst_193 = arith.constant dense<0.000000e+00> : vector<8x256xf32>
    %702 = tpu.matmul %699, %701, %cst_193 {dimension_numbers = #tpu.dot_dimension_numbers<[1], [0], [0], [1], [0, 0, 1, 1], [], []>} : vector<8x64xf32>, vector<64x256xf32>, vector<8x256xf32> -> vector<8x256xf32>
    %703 = arith.index_cast %696 : i32 to index
    %c0_194 = arith.constant 0 : index
    %704 = vector.load %arg8[%703, %c0_194] : memref<64x128xf32, #tpu.memory_space<vmem>>, vector<8x128xf32>
    %705 = vector.extract_strided_slice %702 {offsets = [0, 0], sizes = [8, 128], strides = [1, 1]} : vector<8x256xf32> to vector<8x128xf32>
    %706 = arith.addf %704, %705 : vector<8x128xf32>
    %707 = arith.index_cast %698 : i32 to index
    %c0_195 = arith.constant 0 : index
    %708 = vector.load %arg9[%707, %c0_195] : memref<64x128xf32, #tpu.memory_space<vmem>>, vector<8x128xf32>
    %709 = vector.extract_strided_slice %702 {offsets = [0, 128], sizes = [8, 128], strides = [1, 1]} : vector<8x256xf32> to vector<8x128xf32>
    %710 = arith.addf %708, %709 : vector<8x128xf32>
    %711 = vector.extract_strided_slice %700 {offsets = [0, 0], sizes = [8, 32], strides = [1, 1]} : vector<8x64xf32> to vector<8x32xf32>
    %712 = vector.extract_strided_slice %706 {offsets = [0, 0], sizes = [8, 32], strides = [1, 1]} : vector<8x128xf32> to vector<8x32xf32>
    %713 = arith.negf %712 : vector<8x32xf32>
    %714 = math.exp %713 : vector<8x32xf32>
    %cst_196 = arith.constant 1.000000e+00 : f32
    %715 = vector.broadcast %cst_196 : f32 to vector<8x32xf32>
    %716 = arith.addf %715, %714 : vector<8x32xf32>
    %717 = arith.divf %715, %716 : vector<8x32xf32>
    %718 = vector.extract_strided_slice %706 {offsets = [0, 32], sizes = [8, 32], strides = [1, 1]} : vector<8x128xf32> to vector<8x32xf32>
    %719 = arith.negf %718 : vector<8x32xf32>
    %720 = math.exp %719 : vector<8x32xf32>
    %cst_197 = arith.constant 1.000000e+00 : f32
    %721 = vector.broadcast %cst_197 : f32 to vector<8x32xf32>
    %722 = arith.addf %721, %720 : vector<8x32xf32>
    %723 = arith.divf %721, %722 : vector<8x32xf32>
    %724 = vector.extract_strided_slice %706 {offsets = [0, 64], sizes = [8, 32], strides = [1, 1]} : vector<8x128xf32> to vector<8x32xf32>
    %725 = math.tanh %724 : vector<8x32xf32>
    %726 = vector.extract_strided_slice %706 {offsets = [0, 96], sizes = [8, 32], strides = [1, 1]} : vector<8x128xf32> to vector<8x32xf32>
    %727 = arith.negf %726 : vector<8x32xf32>
    %728 = math.exp %727 : vector<8x32xf32>
    %cst_198 = arith.constant 1.000000e+00 : f32
    %729 = vector.broadcast %cst_198 : f32 to vector<8x32xf32>
    %730 = arith.addf %729, %728 : vector<8x32xf32>
    %731 = arith.divf %729, %730 : vector<8x32xf32>
    %732 = arith.mulf %723, %711 : vector<8x32xf32>
    %733 = arith.mulf %717, %725 : vector<8x32xf32>
    %734 = arith.addf %732, %733 : vector<8x32xf32>
    %735 = math.tanh %734 : vector<8x32xf32>
    %736 = arith.mulf %731, %735 : vector<8x32xf32>
    %737 = vector.extract_strided_slice %700 {offsets = [0, 32], sizes = [8, 32], strides = [1, 1]} : vector<8x64xf32> to vector<8x32xf32>
    %738 = vector.extract_strided_slice %710 {offsets = [0, 0], sizes = [8, 32], strides = [1, 1]} : vector<8x128xf32> to vector<8x32xf32>
    %739 = arith.negf %738 : vector<8x32xf32>
    %740 = math.exp %739 : vector<8x32xf32>
    %cst_199 = arith.constant 1.000000e+00 : f32
    %741 = vector.broadcast %cst_199 : f32 to vector<8x32xf32>
    %742 = arith.addf %741, %740 : vector<8x32xf32>
    %743 = arith.divf %741, %742 : vector<8x32xf32>
    %744 = vector.extract_strided_slice %710 {offsets = [0, 32], sizes = [8, 32], strides = [1, 1]} : vector<8x128xf32> to vector<8x32xf32>
    %745 = arith.negf %744 : vector<8x32xf32>
    %746 = math.exp %745 : vector<8x32xf32>
    %cst_200 = arith.constant 1.000000e+00 : f32
    %747 = vector.broadcast %cst_200 : f32 to vector<8x32xf32>
    %748 = arith.addf %747, %746 : vector<8x32xf32>
    %749 = arith.divf %747, %748 : vector<8x32xf32>
    %750 = vector.extract_strided_slice %710 {offsets = [0, 64], sizes = [8, 32], strides = [1, 1]} : vector<8x128xf32> to vector<8x32xf32>
    %751 = math.tanh %750 : vector<8x32xf32>
    %752 = vector.extract_strided_slice %710 {offsets = [0, 96], sizes = [8, 32], strides = [1, 1]} : vector<8x128xf32> to vector<8x32xf32>
    %753 = arith.negf %752 : vector<8x32xf32>
    %754 = math.exp %753 : vector<8x32xf32>
    %cst_201 = arith.constant 1.000000e+00 : f32
    %755 = vector.broadcast %cst_201 : f32 to vector<8x32xf32>
    %756 = arith.addf %755, %754 : vector<8x32xf32>
    %757 = arith.divf %755, %756 : vector<8x32xf32>
    %758 = arith.mulf %749, %737 : vector<8x32xf32>
    %759 = arith.mulf %743, %751 : vector<8x32xf32>
    %760 = arith.addf %758, %759 : vector<8x32xf32>
    %761 = math.tanh %760 : vector<8x32xf32>
    %762 = arith.mulf %757, %761 : vector<8x32xf32>
    %763 = vector.broadcast %c7_i32_183 : i32 to vector<8x1xi32>
    %764 = arith.cmpi slt, %763, %14 : vector<8x1xi32>
    %765 = vector.broadcast %694 : i32 to vector<8x1xi32>
    %766 = arith.cmpi slt, %765, %14 : vector<8x1xi32>
    %767 = vector.extract_strided_slice %699 {offsets = [0, 0], sizes = [8, 32], strides = [1, 1]} : vector<8x64xf32> to vector<8x32xf32>
    %768 = vector.shape_cast %764 : vector<8x1xi1> to vector<8x1xi1>
    %769 = vector.broadcast %768 : vector<8x1xi1> to vector<8x32xi1>
    %770 = arith.select %769, %736, %767 : vector<8x32xi1>, vector<8x32xf32>
    %771 = vector.extract_strided_slice %700 {offsets = [0, 0], sizes = [8, 32], strides = [1, 1]} : vector<8x64xf32> to vector<8x32xf32>
    %772 = vector.shape_cast %764 : vector<8x1xi1> to vector<8x1xi1>
    %773 = vector.broadcast %772 : vector<8x1xi1> to vector<8x32xi1>
    %774 = arith.select %773, %734, %771 : vector<8x32xi1>, vector<8x32xf32>
    %775 = vector.extract_strided_slice %699 {offsets = [0, 32], sizes = [8, 32], strides = [1, 1]} : vector<8x64xf32> to vector<8x32xf32>
    %776 = vector.shape_cast %766 : vector<8x1xi1> to vector<8x1xi1>
    %777 = vector.broadcast %776 : vector<8x1xi1> to vector<8x32xi1>
    %778 = arith.select %777, %762, %775 : vector<8x32xi1>, vector<8x32xf32>
    %779 = vector.extract_strided_slice %700 {offsets = [0, 32], sizes = [8, 32], strides = [1, 1]} : vector<8x64xf32> to vector<8x32xf32>
    %780 = vector.shape_cast %766 : vector<8x1xi1> to vector<8x1xi1>
    %781 = vector.broadcast %780 : vector<8x1xi1> to vector<8x32xi1>
    %782 = arith.select %781, %760, %779 : vector<8x32xi1>, vector<8x32xf32>
    %783 = tpu.concatenate %770, %778 in 1 : vector<8x32xf32>, vector<8x32xf32> -> vector<8x64xf32>
    %c0_202 = arith.constant 0 : index
    %c0_203 = arith.constant 0 : index
    %784 = vector.load %arg10[%c0_202, %c0_203] : memref<8x64xf32, #tpu.memory_space<vmem>>, vector<8x64xf32>
    tpu.vector_store %arg10[%c0_202, %c0_203], %783 {strides = array<i32>} : memref<8x64xf32, #tpu.memory_space<vmem>>, vector<8x64xf32>,
    %785 = tpu.concatenate %774, %782 in 1 : vector<8x32xf32>, vector<8x32xf32> -> vector<8x64xf32>
    %c0_204 = arith.constant 0 : index
    %c0_205 = arith.constant 0 : index
    %786 = vector.load %arg11[%c0_204, %c0_205] : memref<8x64xf32, #tpu.memory_space<vmem>>, vector<8x64xf32>
    tpu.vector_store %arg11[%c0_204, %c0_205], %785 {strides = array<i32>} : memref<8x64xf32, #tpu.memory_space<vmem>>, vector<8x64xf32>,
    %787 = arith.index_cast %696 : i32 to index
    %c0_206 = arith.constant 0 : index
    %788 = vector.load %arg5[%787, %c0_206] : memref<64x32xf32, #tpu.memory_space<vmem>>, vector<8x32xf32>
    tpu.vector_store %arg5[%787, %c0_206], %770 {strides = array<i32>} : memref<64x32xf32, #tpu.memory_space<vmem>>, vector<8x32xf32>,
    %789 = arith.index_cast %698 : i32 to index
    %c0_207 = arith.constant 0 : index
    %790 = vector.load %arg6[%789, %c0_207] : memref<64x32xf32, #tpu.memory_space<vmem>>, vector<8x32xf32>
    tpu.vector_store %arg6[%789, %c0_207], %778 {strides = array<i32>} : memref<64x32xf32, #tpu.memory_space<vmem>>, vector<8x32xf32>,
    %c8_i32_208 = arith.constant 8 : i32
    %c0_209 = arith.constant 0 : index
    %c0_210 = arith.constant 0 : index
    %791 = vector.load %arg10[%c0_209, %c0_210] : memref<8x64xf32, #tpu.memory_space<vmem>>, vector<8x64xf32>
    %c0_211 = arith.constant 0 : index
    %c0_212 = arith.constant 0 : index
    %792 = vector.load %arg7[%c0_211, %c0_212] : memref<8x64xf32, #tpu.memory_space<vmem>>, vector<8x64xf32>
    tpu.vector_store %arg7[%c0_211, %c0_212], %791 {strides = array<i32>} : memref<8x64xf32, #tpu.memory_space<vmem>>, vector<8x64xf32>,
    return
  }
}

</mosaic_0001>

<llo_original>
// kernel: tpu_custom_call.1
$region0: #{tpu_custom_call.1}
  #allocation0 [shape = 'u32[]', space=smem, size = 0x4, offset = 0x4, fixed_abs, tag = 'smem constant byte address 0x4 - core index']
  #allocation1 [shape = 'u32[144,128]{1,0:T(1,128)}', space=vmem, size = 0x12000, scoped, tag = 'internal scratch']
  #allocation2 [shape = 'f32[64,128]{1,0:T(8,128)}', space=vmem, size = 0x8000, scoped, tag = 'scratch operand']
  #allocation3 [shape = 'f32[64,128]{1,0:T(8,128)}', space=vmem, size = 0x8000, scoped, tag = 'scratch operand']
  #allocation4 [shape = 'f32[8,64]{1,0:T(8,128)}', space=vmem, size = 0x1000, scoped, tag = 'scratch operand']
  #allocation5 [shape = 'f32[8,64]{1,0:T(8,128)}', space=vmem, size = 0x1000, scoped, tag = 'scratch operand']
  %s0 = inlined_call_operand.vmem [shape: f32[64,16], index: 0, kind: input, shape index: {}]
  %s1 = inlined_call_operand.vmem [shape: s32[8,1], index: 1, kind: input, shape index: {}]
  %s2 = inlined_call_operand.vmem [shape: f32[16,256], index: 2, kind: input, shape index: {}]
  %s3 = inlined_call_operand.hbm [shape: f32[64,256], index: 3, kind: input, shape index: {}]
  %s4 = inlined_call_operand.vmem [shape: f32[1,256], index: 4, kind: input, shape index: {}]
  %s5 = inlined_call_operand.vmem [shape: f32[64,32], index: 5, kind: output, shape index: {0}]
  %s6 = inlined_call_operand.vmem [shape: f32[64,32], index: 6, kind: output, shape index: {1}]
  %s7 = inlined_call_operand.hbm [shape: f32[8,64], index: 7, kind: output, shape index: {2}]
  %8 = xla_tuple %s5, %s6, %s7
  %s9 = sld [smem:[#allocation0]]
  $region50: #{tpu_custom_call.1} parent=0
    _
  %s11 = ssub.s32 1, %s9
  %s12 = scalar_select 0, %s11, %s9
  $region1: #{tpu_custom_call.1} parent=0
    #allocation6 [shape = 'u8[65536]{0}', space=vmem, size = 0x10000, scoped, tag = 'input window, operand 3, single buffered']
    #allocation7 [shape = 's32[1]{0}', space=sflag, size = 0x4, scoped, tag = 'scoped memory for tpu_custom_call.1']
    #allocation8 [shape = 's32[1]{0}', space=sflag, size = 0x4, scoped, tag = 'scoped memory for tpu_custom_call.1']
    #allocation9 [shape = 'u8[4096]{0}', space=vmem, size = 0x1000, scoped, tag = 'output window, operand 2, single buffered']
    %13 = vsyncpa [#allocation7], 0
    %14 = vsyncpa [#allocation8], 0
    // Predicated region
    $region2: #{tpu_custom_call.1} parent=1 // pred_check
      _
    $region3: #{tpu_custom_call.1} parent=1 // pred_check_branch
      %16 = sbr.rel (0) target = $region5
    $region4: #{tpu_custom_call.1} parent=1 // pred_region
      _
    $region5: #{tpu_custom_call.1} parent=1 // pred_fallthru
      _
    // Predicated region
    $region6: #{tpu_custom_call.1} parent=1 // pred_check
      _
    $region7: #{tpu_custom_call.1} parent=1 // pred_check_branch
      %18 = sbr.rel (0) target = $region9
    $region8: #{tpu_custom_call.1} parent=1 // pred_region
      _
    $region9: #{tpu_custom_call.1} parent=1 // pred_fallthru
      _
    // Predicated region
    $region10: #{tpu_custom_call.1} parent=1 // pred_check
      _
    $region11: #{tpu_custom_call.1} parent=1 // pred_check_branch
      %20 = sbr.rel (0) target = $region13
    $region12: #{tpu_custom_call.1} parent=1 // pred_region
      _
    $region13: #{tpu_custom_call.1} parent=1 // pred_fallthru
      _
    // Predicated region
    $region14: #{tpu_custom_call.1} parent=1 // pred_check
      _
    $region15: #{tpu_custom_call.1} parent=1 // pred_check_branch
      %22 = sbr.rel (0) target = $region17
    $region16: #{tpu_custom_call.1} parent=1 // pred_region
      %s24 = ssub.s32 2048, 2048
      %25 = vsyncadd [#allocation7], %s24
      %s26 = sshll.u32 [#allocation6], 4
      %s27 = int_to_ptr.vmem [resolvable:$true] %s26
      %32 = dma.hbm_to_vmem [thread:$0]  %s3, 2048, %s27, [#allocation7], 256, 256, 16
    $region17: #{tpu_custom_call.1} parent=1 // pred_fallthru
      _
    // Predicated region
    $region18: #{tpu_custom_call.1} parent=1 // pred_check
      _
    $region19: #{tpu_custom_call.1} parent=1 // pred_check_branch
      %34 = sbr.rel (0) target = $region21
    $region20: #{tpu_custom_call.1} parent=1 // pred_region
      _
    $region21: #{tpu_custom_call.1} parent=1 // pred_fallthru
      _
    // Predicated region
    $region22: #{tpu_custom_call.1} parent=1 // pred_check
      _
    $region23: #{tpu_custom_call.1} parent=1 // pred_check_branch
      %36 = sbr.rel (0) target = $region25
    $region24: #{tpu_custom_call.1} parent=1 // pred_region
      %37 = dma.done [#allocation7], 2048
    $region25: #{tpu_custom_call.1} parent=1 // pred_fallthru
      _
    %v38 = vld [vmem:[%s0] sm:$0xff]
    %v39 = vld [vmem:[%s0 + $0x8] sm:$0xff]
    %v40 = vld [vmem:[%s0 + $0x10] sm:$0xff]
    %v41 = vld [vmem:[%s0 + $0x18] sm:$0xff]
    %v42 = vld [vmem:[%s0 + $0x20] sm:$0xff]
    %v43 = vld [vmem:[%s0 + $0x28] sm:$0xff]
    %v44 = vld [vmem:[%s0 + $0x30] sm:$0xff]
    %v45 = vld [vmem:[%s0 + $0x38] sm:$0xff]
    %v46 = vld [vmem:[%s2] sm:$0xff]
    %v47 = vld [vmem:[%s2 + $0x8] sm:$0xff]
    %v48 = vld [vmem:[%s2 + $0x10] sm:$0xff]
    %v49 = vld [vmem:[%s2 + $0x18] sm:$0xff]
    %v50 = vld [vmem:[%s4] sm:$0x3]
    %v52 = vlaneseq
    %v53 = vshrl.u32 %v52, 7
    %v54 = vsub.s32 0, %v53
    %v55 = vrot.slane %v50, %v54
    %v56 = vlaneseq
    %v57 = vshrl.u32 %v56, 7
    %v58 = vsub.s32 1, %v57
    %v59 = vrot.slane %v50, %v58
    %vm62 = vcmask 130048
    %v64 = vsel %vm62, %v38, 0
    %v67 = vsel %vm62, %v39, 0
    %v70 = vsel %vm62, %v40, 0
    %v73 = vsel %vm62, %v41, 0
    %v76 = vsel %vm62, %v42, 0
    %v79 = vsel %vm62, %v43, 0
    %v82 = vsel %vm62, %v44, 0
    %v85 = vsel %vm62, %v45, 0
    %87 = vmatprep.subr.mxu0 %v47
    %88 = vmatpush1.msra.mxu0 %v46
    %89 = vmatprep.subr.mxu0 %v49
    %90 = vmatpush1.msra.mxu0 %v48
    %91 = vmatprep.subr.mxu0 0.0
    %92 = vmatpush1.msra.mxu0 0.0
    %93 = vmatprep.subr.mxu0 0.0
    %94 = vmatpush1.msra.mxu0 0.0
    %95 = vmatprep.subr.mxu0 0.0
    %96 = vmatpush1.msra.mxu0 0.0
    %97 = vmatprep.subr.mxu0 0.0
    %98 = vmatpush1.msra.mxu0 0.0
    %99 = vmatprep.subr.mxu0 0.0
    %100 = vmatpush1.msra.mxu0 0.0
    %101 = vmatprep.subr.mxu0 0.0
    %102 = vmatpush1.msra.mxu0 0.0
    %103 = vmatprep.subr.mxu0 0.0
    %104 = vmatpush1.msra.mxu0 0.0
    %105 = vmatprep.subr.mxu0 0.0
    %106 = vmatpush1.msra.mxu0 0.0
    %107 = vmatprep.subr.mxu0 0.0
    %108 = vmatpush1.msra.mxu0 0.0
    %109 = vmatprep.subr.mxu0 0.0
    %110 = vmatpush1.msra.mxu0 0.0
    %111 = vmatprep.subr.mxu0 0.0
    %112 = vmatpush1.msra.mxu0 0.0
    %113 = vmatprep.subr.mxu0 0.0
    %114 = vmatpush1.msra.mxu0 0.0
    %115 = vmatprep.subr.mxu0 0.0
    %116 = vmatpush1.msra.mxu0 0.0
    %117 = vmatprep.subr.mxu0 0.0
    %118 = vmatpush1.msra.mxu0 0.0
    %119 = vmatprep.subr.mxu0 0.0
    %120 = vmatpush1.msra.mxu0 0.0
    %121 = vmatprep.subr.mxu0 0.0
    %122 = vmatpush1.msra.mxu0 0.0
    %123 = vmatprep.subr.mxu0 0.0
    %124 = vmatpush1.msra.mxu0 0.0
    %125 = vmatprep.subr.mxu0 0.0
    %126 = vmatpush1.msra.mxu0 0.0
    %127 = vmatprep.subr.mxu0 0.0
    %128 = vmatpush1.msra.mxu0 0.0
    %129 = vmatprep.subr.mxu0 0.0
    %130 = vmatpush1.msra.mxu0 0.0
    %131 = vmatprep.subr.mxu0 0.0
    %132 = vmatpush1.msra.mxu0 0.0
    %133 = vmatprep.subr.mxu0 0.0
    %134 = vmatpush1.msra.mxu0 0.0
    %135 = vmatprep.subr.mxu0 0.0
    %136 = vmatpush1.msra.mxu0 0.0
    %137 = vmatprep.subr.mxu0 0.0
    %138 = vmatpush1.msra.mxu0 0.0
    %139 = vmatprep.subr.mxu0 0.0
    %140 = vmatpush1.msra.mxu0 0.0
    %141 = vmatprep.subr.mxu0 0.0
    %142 = vmatpush1.msra.mxu0 0.0
    %143 = vmatprep.subr.mxu0 0.0
    %144 = vmatpush1.msra.mxu0 0.0
    %145 = vmatprep.subr.mxu0 0.0
    %146 = vmatpush1.msra.mxu0 0.0
    %147 = vmatprep.subr.mxu0 0.0
    %148 = vmatpush1.msra.mxu0 0.0
    %149 = vmatprep.subr.mxu0 0.0
    %150 = vmatpush1.msra.mxu0 0.0
    %151 = vmatprep.mubr.f32.mxu0 0.0
    %152 = vmatmul.mubr.f32.gmra.mrb[0].mxu0 %v64
    %v153 = vpop.f32.mrb[0].mxu0
    %v154 = vadd.f32 %v55, %v153
    %v155 = vpop.f32.mrb[0].mxu0
    %v156 = vadd.f32 %v59, %v155
    %157 = vmatprep.mubr.f32.mxu0 0.0
    %158 = vmatmul.mubr.f32.gmra.mrb[0].mxu0 %v67
    %v159 = vpop.f32.mrb[0].mxu0
    %v160 = vadd.f32 %v55, %v159
    %v161 = vpop.f32.mrb[0].mxu0
    %v162 = vadd.f32 %v59, %v161
    %163 = vmatprep.mubr.f32.mxu0 0.0
    %164 = vmatmul.mubr.f32.gmra.mrb[0].mxu0 %v70
    %v165 = vpop.f32.mrb[0].mxu0
    %v166 = vadd.f32 %v55, %v165
    %v167 = vpop.f32.mrb[0].mxu0
    %v168 = vadd.f32 %v59, %v167
    %169 = vmatprep.mubr.f32.mxu0 0.0
    %170 = vmatmul.mubr.f32.gmra.mrb[0].mxu0 %v73
    %v171 = vpop.f32.mrb[0].mxu0
    %v172 = vadd.f32 %v55, %v171
    %v173 = vpop.f32.mrb[0].mxu0
    %v174 = vadd.f32 %v59, %v173
    %175 = vmatprep.mubr.f32.mxu0 0.0
    %176 = vmatmul.mubr.f32.gmra.mrb[0].mxu0 %v76
    %v177 = vpop.f32.mrb[0].mxu0
    %v178 = vadd.f32 %v55, %v177
    %v179 = vpop.f32.mrb[0].mxu0
    %v180 = vadd.f32 %v59, %v179
    %181 = vmatprep.mubr.f32.mxu0 0.0
    %182 = vmatmul.mubr.f32.gmra.mrb[0].mxu0 %v79
    %v183 = vpop.f32.mrb[0].mxu0
    %v184 = vadd.f32 %v55, %v183
    %v185 = vpop.f32.mrb[0].mxu0
    %v186 = vadd.f32 %v59, %v185
    %187 = vmatprep.mubr.f32.mxu0 0.0
    %188 = vmatmul.mubr.f32.gmra.mrb[0].mxu0 %v82
    %v189 = vpop.f32.mrb[0].mxu0
    %v190 = vadd.f32 %v55, %v189
    %v191 = vpop.f32.mrb[0].mxu0
    %v192 = vadd.f32 %v59, %v191
    %193 = vmatprep.mubr.f32.mxu0 0.0
    %194 = vmatmul.mubr.f32.gmra.mrb[0].mxu0 %v85
    %v195 = vpop.f32.mrb[0].mxu0
    %v196 = vadd.f32 %v55, %v195
    %v197 = vpop.f32.mrb[0].mxu0
    %v198 = vadd.f32 %v59, %v197
    %199 = vdwg.mxu0
    %200 = vst [vmem:[#allocation2] sm:$0xff] %v154
    %201 = vst [vmem:[#allocation2 + $0x8] sm:$0xff] %v160
    %202 = vst [vmem:[#allocation2 + $0x10] sm:$0xff] %v166
    %203 = vst [vmem:[#allocation2 + $0x18] sm:$0xff] %v172
    %204 = vst [vmem:[#allocation2 + $0x20] sm:$0xff] %v178
    %205 = vst [vmem:[#allocation2 + $0x28] sm:$0xff] %v184
    %206 = vst [vmem:[#allocation2 + $0x30] sm:$0xff] %v190
    %207 = vst [vmem:[#allocation2 + $0x38] sm:$0xff] %v196
    %208 = vst [vmem:[#allocation3] sm:$0xff] %v156
    %209 = vst [vmem:[#allocation3 + $0x8] sm:$0xff] %v162
    %210 = vst [vmem:[#allocation3 + $0x10] sm:$0xff] %v168
    %211 = vst [vmem:[#allocation3 + $0x18] sm:$0xff] %v174
    %212 = vst [vmem:[#allocation3 + $0x20] sm:$0xff] %v180
    %213 = vst [vmem:[#allocation3 + $0x28] sm:$0xff] %v186
    %214 = vst [vmem:[#allocation3 + $0x30] sm:$0xff] %v192
    %215 = vst [vmem:[#allocation3 + $0x38] sm:$0xff] %v198
    %vm216 = vcmask 523264
    %217 = vst.msk [vmem:[#allocation4] sm:$0xff] %vm216, 0.0
    %218 = vst.msk [vmem:[#allocation5] sm:$0xff] %vm216, 0.0
    %v219 = vld [vmem:[%s1] sm:$0xff]
    %v220 = vld [vmem:[#allocation4] sm:$0xff]
    %v221 = vld [vmem:[#allocation5] sm:$0xff]
    %v222 = vld [vmem:[#allocation6] sm:$0xff]
    %v223 = vld [vmem:[#allocation6 + $0x8] sm:$0xff]
    %v224 = vld [vmem:[#allocation6 + $0x10] sm:$0xff]
    %v225 = vld [vmem:[#allocation6 + $0x18] sm:$0xff]
    %v226 = vld [vmem:[#allocation6 + $0x20] sm:$0xff]
    %v227 = vld [vmem:[#allocation6 + $0x28] sm:$0xff]
    %v228 = vld [vmem:[#allocation6 + $0x30] sm:$0xff]
    %v229 = vld [vmem:[#allocation6 + $0x38] sm:$0xff]
    %v230 = vld [vmem:[#allocation6 + $0x40] sm:$0xff]
    %v231 = vld [vmem:[#allocation6 + $0x48] sm:$0xff]
    %v232 = vld [vmem:[#allocation6 + $0x50] sm:$0xff]
    %v233 = vld [vmem:[#allocation6 + $0x58] sm:$0xff]
    %v234 = vld [vmem:[#allocation6 + $0x60] sm:$0xff]
    %v235 = vld [vmem:[#allocation6 + $0x68] sm:$0xff]
    %v236 = vld [vmem:[#allocation6 + $0x70] sm:$0xff]
    %v237 = vld [vmem:[#allocation6 + $0x78] sm:$0xff]
    %v239 = vsel %vm216, %v220, 0
    %241 = vmatprep.subr.mxu0 %v223
    %242 = vmatpush1.msra.mxu0 %v222
    %243 = vmatprep.subr.mxu0 %v225
    %244 = vmatpush1.msra.mxu0 %v224
    %245 = vmatprep.subr.mxu0 %v227
    %246 = vmatpush1.msra.mxu0 %v226
    %247 = vmatprep.subr.mxu0 %v229
    %248 = vmatpush1.msra.mxu0 %v228
    %249 = vmatprep.subr.mxu0 %v231
    %250 = vmatpush1.msra.mxu0 %v230
    %251 = vmatprep.subr.mxu0 %v233
    %252 = vmatpush1.msra.mxu0 %v232
    %253 = vmatprep.subr.mxu0 %v235
    %254 = vmatpush1.msra.mxu0 %v234
    %255 = vmatprep.subr.mxu0 %v237
    %256 = vmatpush1.msra.mxu0 %v236
    %257 = vmatprep.subr.mxu0 0.0
    %258 = vmatpush1.msra.mxu0 0.0
    %259 = vmatprep.subr.mxu0 0.0
    %260 = vmatpush1.msra.mxu0 0.0
    %261 = vmatprep.subr.mxu0 0.0
    %262 = vmatpush1.msra.mxu0 0.0
    %263 = vmatprep.subr.mxu0 0.0
    %264 = vmatpush1.msra.mxu0 0.0
    %265 = vmatprep.subr.mxu0 0.0
    %266 = vmatpush1.msra.mxu0 0.0
    %267 = vmatprep.subr.mxu0 0.0
    %268 = vmatpush1.msra.mxu0 0.0
    %269 = vmatprep.subr.mxu0 0.0
    %270 = vmatpush1.msra.mxu0 0.0
    %271 = vmatprep.subr.mxu0 0.0
    %272 = vmatpush1.msra.mxu0 0.0
    %273 = vmatprep.subr.mxu0 0.0
    %274 = vmatpush1.msra.mxu0 0.0
    %275 = vmatprep.subr.mxu0 0.0
    %276 = vmatpush1.msra.mxu0 0.0
    %277 = vmatprep.subr.mxu0 0.0
    %278 = vmatpush1.msra.mxu0 0.0
    %279 = vmatprep.subr.mxu0 0.0
    %280 = vmatpush1.msra.mxu0 0.0
    %281 = vmatprep.subr.mxu0 0.0
    %282 = vmatpush1.msra.mxu0 0.0
    %283 = vmatprep.subr.mxu0 0.0
    %284 = vmatpush1.msra.mxu0 0.0
    %285 = vmatprep.subr.mxu0 0.0
    %286 = vmatpush1.msra.mxu0 0.0
    %287 = vmatprep.subr.mxu0 0.0
    %288 = vmatpush1.msra.mxu0 0.0
    %289 = vmatprep.subr.mxu0 0.0
    %290 = vmatpush1.msra.mxu0 0.0
    %291 = vmatprep.subr.mxu0 0.0
    %292 = vmatpush1.msra.mxu0 0.0
    %293 = vmatprep.subr.mxu0 0.0
    %294 = vmatpush1.msra.mxu0 0.0
    %295 = vmatprep.subr.mxu0 0.0
    %296 = vmatpush1.msra.mxu0 0.0
    %297 = vmatprep.subr.mxu0 0.0
    %298 = vmatpush1.msra.mxu0 0.0
    %299 = vmatprep.subr.mxu0 0.0
    %300 = vmatpush1.msra.mxu0 0.0
    %301 = vmatprep.subr.mxu0 0.0
    %302 = vmatpush1.msra.mxu0 0.0
    %303 = vmatprep.subr.mxu0 0.0
    %304 = vmatpush1.msra.mxu0 0.0
    %305 = vmatprep.mubr.f32.mxu0 0.0
    %306 = vmatmul.mubr.f32.gmra.mrb[0].mxu0 %v239
    %v307 = vpop.f32.mrb[0].mxu0
    %v308 = vadd.f32 0.0, %v307
    %v309 = vpop.f32.mrb[0].mxu0
    %v310 = vadd.f32 0.0, %v309
    %311 = vdwg.mxu0
    %v312 = vld [vmem:[#allocation2] sm:$0xff]
    %v313 = vadd.f32 %v312, %v308
    %s314 = scalar_lea.vmem [#allocation3], 56
    %v315 = vld [vmem:[%s314] sm:$0xff]
    %v316 = vadd.f32 %v315, %v310
    %v317 = vxor.u32 %v313, 2147483648
    %v318 = vmul.f32 %v317, 1.442695
    %v319 = vpow.pop %v318
    %v320 = vadd.f32 %v319, 1.0
    %v321 = vrcp.pop %v320
    %v322 = vmul.f32 1.0, %v321
    %v323 = vtanh.pop %v313
    %325 = vrot.lane.b32.xlu0 %v221, 32
    %v326 = vpop.permute.xlu0 %325
    %v328 = vmul.f32 %v322, %v326
    %330 = vrot.lane.b32.xlu0 %v323, 64
    %v331 = vpop.permute.xlu0 %330
    %v333 = vmul.f32 %v322, %v331
    %335 = vrot.lane.b32.xlu0 %v333, 32
    %v336 = vpop.permute.xlu0 %335
    %v338 = vadd.f32 %v328, %v336
    %v339 = vtanh.pop %v338
    %341 = vrot.lane.b32.xlu0 %v339, 64
    %v342 = vpop.permute.xlu0 %341
    %v344 = vmul.f32 %v322, %v342
    %v345 = vxor.u32 %v316, 2147483648
    %v346 = vmul.f32 %v345, 1.442695
    %v347 = vpow.pop %v346
    %v348 = vadd.f32 %v347, 1.0
    %v349 = vrcp.pop %v348
    %v350 = vmul.f32 1.0, %v349
    %v351 = vtanh.pop %v316
    %v352 = vmul.f32 %v350, %v221
    %354 = vrot.lane.b32.xlu0 %v351, 64
    %v355 = vpop.permute.xlu0 %354
    %v357 = vmul.f32 %v350, %v355
    %359 = vrot.lane.b32.xlu0 %v357, 32
    %v360 = vpop.permute.xlu0 %359
    %v362 = vadd.f32 %v352, %v360
    %v363 = vtanh.pop %v362
    %365 = vrot.lane.b32.xlu0 %v363, 64
    %v366 = vpop.permute.xlu0 %365
    %v368 = vmul.f32 %v350, %v366
    %vm369 = vcmp.gt.s32.totalorder %v219, 0
    %vm370 = vcmp.gt.s32.totalorder %v219, 7
    %v371 = vsel %vm369, 1, 0
    %372 = vset.pattern.permute.xlu0 0
    %373 = vperm.xlu0 %372, %v371
    %v374 = vpop.permute.xlu0 %373
    %vm375 = vcmp.eq.s32.totalorder %v374, 1
    %376 = vrot.lane.b32.xlu0 %v220, 96
    %v377 = vpop.permute.xlu0 %376
    %v379 = vsel %vm375, %v344, %v377
    %v380 = vsel %vm375, %v338, %v326
    %v381 = vsel %vm370, 1, 0
    %382 = vset.pattern.permute.xlu0 0
    %383 = vperm.xlu0 %382, %v381
    %v384 = vpop.permute.xlu0 %383
    %vm385 = vcmp.eq.s32.totalorder %v384, 1
    %386 = vrot.lane.b32.xlu0 %v220, 64
    %v387 = vpop.permute.xlu0 %386
    %v389 = vsel %vm385, %v368, %v387
    %v390 = vsel %vm385, %v362, %v221
    %392 = vrot.lane.b32.xlu0 %v379, 32
    %v393 = vpop.permute.xlu0 %392
    %396 = vrot.lane.b32.xlu0 %v389, 64
    %v397 = vpop.permute.xlu0 %396
    %vm399 = vcmask 261120
    %v400 = vsel %vm399, %v393, %v397
    %401 = vst.msk [vmem:[#allocation4] sm:$0xff] %vm216, %v400
    %403 = vrot.lane.b32.xlu0 %v380, 96
    %v404 = vpop.permute.xlu0 %403
    %v406 = vsel %vm399, %v404, %v390
    %407 = vst.msk [vmem:[#allocation5] sm:$0xff] %vm216, %v406
    %408 = vst.msk [vmem:[%s5] sm:$0xff] %vm399, %v393
    %409 = vrot.lane.b32.xlu0 %v389, 32
    %v410 = vpop.permute.xlu0 %409
    %s412 = scalar_lea.vmem %s6, 56
    %413 = vst.msk [vmem:[%s412] sm:$0xff] %vm399, %v410
    %v414 = vld [vmem:[#allocation4] sm:$0xff]
    %v415 = vld [vmem:[#allocation5] sm:$0xff]
    %v416 = vld [vmem:[#allocation6] sm:$0xff]
    %v417 = vld [vmem:[#allocation6 + $0x8] sm:$0xff]
    %v418 = vld [vmem:[#allocation6 + $0x10] sm:$0xff]
    %v419 = vld [vmem:[#allocation6 + $0x18] sm:$0xff]
    %v420 = vld [vmem:[#allocation6 + $0x20] sm:$0xff]
    %v421 = vld [vmem:[#allocation6 + $0x28] sm:$0xff]
    %v422 = vld [vmem:[#allocation6 + $0x30] sm:$0xff]
    %v423 = vld [vmem:[#allocation6 + $0x38] sm:$0xff]
    %v424 = vld [vmem:[#allocation6 + $0x40] sm:$0xff]
    %v425 = vld [vmem:[#allocation6 + $0x48] sm:$0xff]
    %v426 = vld [vmem:[#allocation6 + $0x50] sm:$0xff]
    %v427 = vld [vmem:[#allocation6 + $0x58] sm:$0xff]
    %v428 = vld [vmem:[#allocation6 + $0x60] sm:$0xff]
    %v429 = vld [vmem:[#allocation6 + $0x68] sm:$0xff]
    %v430 = vld [vmem:[#allocation6 + $0x70] sm:$0xff]
    %v431 = vld [vmem:[#allocation6 + $0x78] sm:$0xff]
    %v433 = vsel %vm216, %v414, 0
    %435 = vmatprep.subr.mxu0 %v417
    %436 = vmatpush1.msra.mxu0 %v416
    %437 = vmatprep.subr.mxu0 %v419
    %438 = vmatpush1.msra.mxu0 %v418
    %439 = vmatprep.subr.mxu0 %v421
    %440 = vmatpush1.msra.mxu0 %v420
    %441 = vmatprep.subr.mxu0 %v423
    %442 = vmatpush1.msra.mxu0 %v422
    %443 = vmatprep.subr.mxu0 %v425
    %444 = vmatpush1.msra.mxu0 %v424
    %445 = vmatprep.subr.mxu0 %v427
    %446 = vmatpush1.msra.mxu0 %v426
    %447 = vmatprep.subr.mxu0 %v429
    %448 = vmatpush1.msra.mxu0 %v428
    %449 = vmatprep.subr.mxu0 %v431
    %450 = vmatpush1.msra.mxu0 %v430
    %451 = vmatprep.subr.mxu0 0.0
    %452 = vmatpush1.msra.mxu0 0.0
    %453 = vmatprep.subr.mxu0 0.0
    %454 = vmatpush1.msra.mxu0 0.0
    %455 = vmatprep.subr.mxu0 0.0
    %456 = vmatpush1.msra.mxu0 0.0
    %457 = vmatprep.subr.mxu0 0.0
    %458 = vmatpush1.msra.mxu0 0.0
    %459 = vmatprep.subr.mxu0 0.0
    %460 = vmatpush1.msra.mxu0 0.0
    %461 = vmatprep.subr.mxu0 0.0
    %462 = vmatpush1.msra.mxu0 0.0
    %463 = vmatprep.subr.mxu0 0.0
    %464 = vmatpush1.msra.mxu0 0.0
    %465 = vmatprep.subr.mxu0 0.0
    %466 = vmatpush1.msra.mxu0 0.0
    %467 = vmatprep.subr.mxu0 0.0
    %468 = vmatpush1.msra.mxu0 0.0
    %469 = vmatprep.subr.mxu0 0.0
    %470 = vmatpush1.msra.mxu0 0.0
    %471 = vmatprep.subr.mxu0 0.0
    %472 = vmatpush1.msra.mxu0 0.0
    %473 = vmatprep.subr.mxu0 0.0
    %474 = vmatpush1.msra.mxu0 0.0
    %475 = vmatprep.subr.mxu0 0.0
    %476 = vmatpush1.msra.mxu0 0.0
    %477 = vmatprep.subr.mxu0 0.0
    %478 = vmatpush1.msra.mxu0 0.0
    %479 = vmatprep.subr.mxu0 0.0
    %480 = vmatpush1.msra.mxu0 0.0
    %481 = vmatprep.subr.mxu0 0.0
    %482 = vmatpush1.msra.mxu0 0.0
    %483 = vmatprep.subr.mxu0 0.0
    %484 = vmatpush1.msra.mxu0 0.0
    %485 = vmatprep.subr.mxu0 0.0
    %486 = vmatpush1.msra.mxu0 0.0
    %487 = vmatprep.subr.mxu0 0.0
    %488 = vmatpush1.msra.mxu0 0.0
    %489 = vmatprep.subr.mxu0 0.0
    %490 = vmatpush1.msra.mxu0 0.0
    %491 = vmatprep.subr.mxu0 0.0
    %492 = vmatpush1.msra.mxu0 0.0
    %493 = vmatprep.subr.mxu0 0.0
    %494 = vmatpush1.msra.mxu0 0.0
    %495 = vmatprep.subr.mxu0 0.0
    %496 = vmatpush1.msra.mxu0 0.0
    %497 = vmatprep.subr.mxu0 0.0
    %498 = vmatpush1.msra.mxu0 0.0
    %499 = vmatprep.mubr.f32.mxu0 0.0
    %500 = vmatmul.mubr.f32.gmra.mrb[0].mxu0 %v433
    %v501 = vpop.f32.mrb[0].mxu0
    %v502 = vadd.f32 0.0, %v501
    %v503 = vpop.f32.mrb[0].mxu0
    %v504 = vadd.f32 0.0, %v503
    %505 = vdwg.mxu0
    %s506 = scalar_lea.vmem [#allocation2], 8
    %v507 = vld [vmem:[%s506] sm:$0xff]
    %v508 = vadd.f32 %v507, %v502
    %s509 = scalar_lea.vmem [#allocation3], 48
    %v510 = vld [vmem:[%s509] sm:$0xff]
    %v511 = vadd.f32 %v510, %v504
    %v512 = vxor.u32 %v508, 2147483648
    %v513 = vmul.f32 %v512, 1.442695
    %v514 = vpow.pop %v513
    %v515 = vadd.f32 %v514, 1.0
    %v516 = vrcp.pop %v515
    %v517 = vmul.f32 1.0, %v516
    %v518 = vtanh.pop %v508
    %520 = vrot.lane.b32.xlu0 %v415, 32
    %v521 = vpop.permute.xlu0 %520
    %v523 = vmul.f32 %v517, %v521
    %525 = vrot.lane.b32.xlu0 %v518, 64
    %v526 = vpop.permute.xlu0 %525
    %v528 = vmul.f32 %v517, %v526
    %530 = vrot.lane.b32.xlu0 %v528, 32
    %v531 = vpop.permute.xlu0 %530
    %v533 = vadd.f32 %v523, %v531
    %v534 = vtanh.pop %v533
    %536 = vrot.lane.b32.xlu0 %v534, 64
    %v537 = vpop.permute.xlu0 %536
    %v539 = vmul.f32 %v517, %v537
    %v540 = vxor.u32 %v511, 2147483648
    %v541 = vmul.f32 %v540, 1.442695
    %v542 = vpow.pop %v541
    %v543 = vadd.f32 %v542, 1.0
    %v544 = vrcp.pop %v543
    %v545 = vmul.f32 1.0, %v544
    %v546 = vtanh.pop %v511
    %v547 = vmul.f32 %v545, %v415
    %549 = vrot.lane.b32.xlu0 %v546, 64
    %v550 = vpop.permute.xlu0 %549
    %v552 = vmul.f32 %v545, %v550
    %554 = vrot.lane.b32.xlu0 %v552, 32
    %v555 = vpop.permute.xlu0 %554
    %v557 = vadd.f32 %v547, %v555
    %v558 = vtanh.pop %v557
    %560 = vrot.lane.b32.xlu0 %v558, 64
    %v561 = vpop.permute.xlu0 %560
    %v563 = vmul.f32 %v545, %v561
    %vm564 = vcmp.gt.s32.totalorder %v219, 1
    %vm565 = vcmp.gt.s32.totalorder %v219, 6
    %v566 = vsel %vm564, 1, 0
    %567 = vset.pattern.permute.xlu0 0
    %568 = vperm.xlu0 %567, %v566
    %v569 = vpop.permute.xlu0 %568
    %vm570 = vcmp.eq.s32.totalorder %v569, 1
    %571 = vrot.lane.b32.xlu0 %v414, 96
    %v572 = vpop.permute.xlu0 %571
    %v574 = vsel %vm570, %v539, %v572
    %v575 = vsel %vm570, %v533, %v521
    %v576 = vsel %vm565, 1, 0
    %577 = vset.pattern.permute.xlu0 0
    %578 = vperm.xlu0 %577, %v576
    %v579 = vpop.permute.xlu0 %578
    %vm580 = vcmp.eq.s32.totalorder %v579, 1
    %581 = vrot.lane.b32.xlu0 %v414, 64
    %v582 = vpop.permute.xlu0 %581
    %v584 = vsel %vm580, %v563, %v582
    %v585 = vsel %vm580, %v557, %v415
    %587 = vrot.lane.b32.xlu0 %v574, 32
    %v588 = vpop.permute.xlu0 %587
    %591 = vrot.lane.b32.xlu0 %v584, 64
    %v592 = vpop.permute.xlu0 %591
    %v594 = vsel %vm399, %v588, %v592
    %595 = vst.msk [vmem:[#allocation4] sm:$0xff] %vm216, %v594
    %597 = vrot.lane.b32.xlu0 %v575, 96
    %v598 = vpop.permute.xlu0 %597
    %v600 = vsel %vm399, %v598, %v585
    %601 = vst.msk [vmem:[#allocation5] sm:$0xff] %vm216, %v600
    %s602 = scalar_lea.vmem %s5, 8
    %603 = vst.msk [vmem:[%s602] sm:$0xff] %vm399, %v588
    %604 = vrot.lane.b32.xlu0 %v584, 32
    %v605 = vpop.permute.xlu0 %604
    %s607 = scalar_lea.vmem %s6, 48
    %608 = vst.msk [vmem:[%s607] sm:$0xff] %vm399, %v605
    %v609 = vld [vmem:[#allocation4] sm:$0xff]
    %v610 = vld [vmem:[#allocation5] sm:$0xff]
    %v611 = vld [vmem:[#allocation6] sm:$0xff]
    %v612 = vld [vmem:[#allocation6 + $0x8] sm:$0xff]
    %v613 = vld [vmem:[#allocation6 + $0x10] sm:$0xff]
    %v614 = vld [vmem:[#allocation6 + $0x18] sm:$0xff]
    %v615 = vld [vmem:[#allocation6 + $0x20] sm:$0xff]
    %v616 = vld [vmem:[#allocation6 + $0x28] sm:$0xff]
    %v617 = vld [vmem:[#allocation6 + $0x30] sm:$0xff]
    %v618 = vld [vmem:[#allocation6 + $0x38] sm:$0xff]
    %v619 = vld [vmem:[#allocation6 + $0x40] sm:$0xff]
    %v620 = vld [vmem:[#allocation6 + $0x48] sm:$0xff]
    %v621 = vld [vmem:[#allocation6 + $0x50] sm:$0xff]
    %v622 = vld [vmem:[#allocation6 + $0x58] sm:$0xff]
    %v623 = vld [vmem:[#allocation6 + $0x60] sm:$0xff]
    %v624 = vld [vmem:[#allocation6 + $0x68] sm:$0xff]
    %v625 = vld [vmem:[#allocation6 + $0x70] sm:$0xff]
    %v626 = vld [vmem:[#allocation6 + $0x78] sm:$0xff]
    %v628 = vsel %vm216, %v609, 0
    %630 = vmatprep.subr.mxu0 %v612
    %631 = vmatpush1.msra.mxu0 %v611
    %632 = vmatprep.subr.mxu0 %v614
    %633 = vmatpush1.msra.mxu0 %v613
    %634 = vmatprep.subr.mxu0 %v616
    %635 = vmatpush1.msra.mxu0 %v615
    %636 = vmatprep.subr.mxu0 %v618
    %637 = vmatpush1.msra.mxu0 %v617
    %638 = vmatprep.subr.mxu0 %v620
    %639 = vmatpush1.msra.mxu0 %v619
    %640 = vmatprep.subr.mxu0 %v622
    %641 = vmatpush1.msra.mxu0 %v621
    %642 = vmatprep.subr.mxu0 %v624
    %643 = vmatpush1.msra.mxu0 %v623
    %644 = vmatprep.subr.mxu0 %v626
    %645 = vmatpush1.msra.mxu0 %v625
    %646 = vmatprep.subr.mxu0 0.0
    %647 = vmatpush1.msra.mxu0 0.0
    %648 = vmatprep.subr.mxu0 0.0
    %649 = vmatpush1.msra.mxu0 0.0
    %650 = vmatprep.subr.mxu0 0.0
    %651 = vmatpush1.msra.mxu0 0.0
    %652 = vmatprep.subr.mxu0 0.0
    %653 = vmatpush1.msra.mxu0 0.0
    %654 = vmatprep.subr.mxu0 0.0
    %655 = vmatpush1.msra.mxu0 0.0
    %656 = vmatprep.subr.mxu0 0.0
    %657 = vmatpush1.msra.mxu0 0.0
    %658 = vmatprep.subr.mxu0 0.0
    %659 = vmatpush1.msra.mxu0 0.0
    %660 = vmatprep.subr.mxu0 0.0
    %661 = vmatpush1.msra.mxu0 0.0
    %662 = vmatprep.subr.mxu0 0.0
    %663 = vmatpush1.msra.mxu0 0.0
    %664 = vmatprep.subr.mxu0 0.0
    %665 = vmatpush1.msra.mxu0 0.0
    %666 = vmatprep.subr.mxu0 0.0
    %667 = vmatpush1.msra.mxu0 0.0
    %668 = vmatprep.subr.mxu0 0.0
    %669 = vmatpush1.msra.mxu0 0.0
    %670 = vmatprep.subr.mxu0 0.0
    %671 = vmatpush1.msra.mxu0 0.0
    %672 = vmatprep.subr.mxu0 0.0
    %673 = vmatpush1.msra.mxu0 0.0
    %674 = vmatprep.subr.mxu0 0.0
    %675 = vmatpush1.msra.mxu0 0.0
    %676 = vmatprep.subr.mxu0 0.0
    %677 = vmatpush1.msra.mxu0 0.0
    %678 = vmatprep.subr.mxu0 0.0
    %679 = vmatpush1.msra.mxu0 0.0
    %680 = vmatprep.subr.mxu0 0.0
    %681 = vmatpush1.msra.mxu0 0.0
    %682 = vmatprep.subr.mxu0 0.0
    %683 = vmatpush1.msra.mxu0 0.0
    %684 = vmatprep.subr.mxu0 0.0
    %685 = vmatpush1.msra.mxu0 0.0
    %686 = vmatprep.subr.mxu0 0.0
    %687 = vmatpush1.msra.mxu0 0.0
    %688 = vmatprep.subr.mxu0 0.0
    %689 = vmatpush1.msra.mxu0 0.0
    %690 = vmatprep.subr.mxu0 0.0
    %691 = vmatpush1.msra.mxu0 0.0
    %692 = vmatprep.subr.mxu0 0.0
    %693 = vmatpush1.msra.mxu0 0.0
    %694 = vmatprep.mubr.f32.mxu0 0.0
    %695 = vmatmul.mubr.f32.gmra.mrb[0].mxu0 %v628
    %v696 = vpop.f32.mrb[0].mxu0
    %v697 = vadd.f32 0.0, %v696
    %v698 = vpop.f32.mrb[0].mxu0
    %v699 = vadd.f32 0.0, %v698
    %700 = vdwg.mxu0
    %s701 = scalar_lea.vmem [#allocation2], 16
    %v702 = vld [vmem:[%s701] sm:$0xff]
    %v703 = vadd.f32 %v702, %v697
    %s704 = scalar_lea.vmem [#allocation3], 40
    %v705 = vld [vmem:[%s704] sm:$0xff]
    %v706 = vadd.f32 %v705, %v699
    %v707 = vxor.u32 %v703, 2147483648
    %v708 = vmul.f32 %v707, 1.442695
    %v709 = vpow.pop %v708
    %v710 = vadd.f32 %v709, 1.0
    %v711 = vrcp.pop %v710
    %v712 = vmul.f32 1.0, %v711
    %v713 = vtanh.pop %v703
    %715 = vrot.lane.b32.xlu0 %v610, 32
    %v716 = vpop.permute.xlu0 %715
    %v718 = vmul.f32 %v712, %v716
    %720 = vrot.lane.b32.xlu0 %v713, 64
    %v721 = vpop.permute.xlu0 %720
    %v723 = vmul.f32 %v712, %v721
    %725 = vrot.lane.b32.xlu0 %v723, 32
    %v726 = vpop.permute.xlu0 %725
    %v728 = vadd.f32 %v718, %v726
    %v729 = vtanh.pop %v728
    %731 = vrot.lane.b32.xlu0 %v729, 64
    %v732 = vpop.permute.xlu0 %731
    %v734 = vmul.f32 %v712, %v732
    %v735 = vxor.u32 %v706, 2147483648
    %v736 = vmul.f32 %v735, 1.442695
    %v737 = vpow.pop %v736
    %v738 = vadd.f32 %v737, 1.0
    %v739 = vrcp.pop %v738
    %v740 = vmul.f32 1.0, %v739
    %v741 = vtanh.pop %v706
    %v742 = vmul.f32 %v740, %v610
    %744 = vrot.lane.b32.xlu0 %v741, 64
    %v745 = vpop.permute.xlu0 %744
    %v747 = vmul.f32 %v740, %v745
    %749 = vrot.lane.b32.xlu0 %v747, 32
    %v750 = vpop.permute.xlu0 %749
    %v752 = vadd.f32 %v742, %v750
    %v753 = vtanh.pop %v752
    %755 = vrot.lane.b32.xlu0 %v753, 64
    %v756 = vpop.permute.xlu0 %755
    %v758 = vmul.f32 %v740, %v756
    %vm759 = vcmp.gt.s32.totalorder %v219, 2
    %vm760 = vcmp.gt.s32.totalorder %v219, 5
    %v761 = vsel %vm759, 1, 0
    %762 = vset.pattern.permute.xlu0 0
    %763 = vperm.xlu0 %762, %v761
    %v764 = vpop.permute.xlu0 %763
    %vm765 = vcmp.eq.s32.totalorder %v764, 1
    %766 = vrot.lane.b32.xlu0 %v609, 96
    %v767 = vpop.permute.xlu0 %766
    %v769 = vsel %vm765, %v734, %v767
    %v770 = vsel %vm765, %v728, %v716
    %v771 = vsel %vm760, 1, 0
    %772 = vset.pattern.permute.xlu0 0
    %773 = vperm.xlu0 %772, %v771
    %v774 = vpop.permute.xlu0 %773
    %vm775 = vcmp.eq.s32.totalorder %v774, 1
    %776 = vrot.lane.b32.xlu0 %v609, 64
    %v777 = vpop.permute.xlu0 %776
    %v779 = vsel %vm775, %v758, %v777
    %v780 = vsel %vm775, %v752, %v610
    %782 = vrot.lane.b32.xlu0 %v769, 32
    %v783 = vpop.permute.xlu0 %782
    %786 = vrot.lane.b32.xlu0 %v779, 64
    %v787 = vpop.permute.xlu0 %786
    %v789 = vsel %vm399, %v783, %v787
    %790 = vst.msk [vmem:[#allocation4] sm:$0xff] %vm216, %v789
    %792 = vrot.lane.b32.xlu0 %v770, 96
    %v793 = vpop.permute.xlu0 %792
    %v795 = vsel %vm399, %v793, %v780
    %796 = vst.msk [vmem:[#allocation5] sm:$0xff] %vm216, %v795
    %s797 = scalar_lea.vmem %s5, 16
    %798 = vst.msk [vmem:[%s797] sm:$0xff] %vm399, %v783
    %799 = vrot.lane.b32.xlu0 %v779, 32
    %v800 = vpop.permute.xlu0 %799
    %s802 = scalar_lea.vmem %s6, 40
    %803 = vst.msk [vmem:[%s802] sm:$0xff] %vm399, %v800
    %v804 = vld [vmem:[#allocation4] sm:$0xff]
    %v805 = vld [vmem:[#allocation5] sm:$0xff]
    %v806 = vld [vmem:[#allocation6] sm:$0xff]
    %v807 = vld [vmem:[#allocation6 + $0x8] sm:$0xff]
    %v808 = vld [vmem:[#allocation6 + $0x10] sm:$0xff]
    %v809 = vld [vmem:[#allocation6 + $0x18] sm:$0xff]
    %v810 = vld [vmem:[#allocation6 + $0x20] sm:$0xff]
    %v811 = vld [vmem:[#allocation6 + $0x28] sm:$0xff]
    %v812 = vld [vmem:[#allocation6 + $0x30] sm:$0xff]
    %v813 = vld [vmem:[#allocation6 + $0x38] sm:$0xff]
    %v814 = vld [vmem:[#allocation6 + $0x40] sm:$0xff]
    %v815 = vld [vmem:[#allocation6 + $0x48] sm:$0xff]
    %v816 = vld [vmem:[#allocation6 + $0x50] sm:$0xff]
    %v817 = vld [vmem:[#allocation6 + $0x58] sm:$0xff]
    %v818 = vld [vmem:[#allocation6 + $0x60] sm:$0xff]
    %v819 = vld [vmem:[#allocation6 + $0x68] sm:$0xff]
    %v820 = vld [vmem:[#allocation6 + $0x70] sm:$0xff]
    %v821 = vld [vmem:[#allocation6 + $0x78] sm:$0xff]
    %v823 = vsel %vm216, %v804, 0
    %825 = vmatprep.subr.mxu0 %v807
    %826 = vmatpush1.msra.mxu0 %v806
    %827 = vmatprep.subr.mxu0 %v809
    %828 = vmatpush1.msra.mxu0 %v808
    %829 = vmatprep.subr.mxu0 %v811
    %830 = vmatpush1.msra.mxu0 %v810
    %831 = vmatprep.subr.mxu0 %v813
    %832 = vmatpush1.msra.mxu0 %v812
    %833 = vmatprep.subr.mxu0 %v815
    %834 = vmatpush1.msra.mxu0 %v814
    %835 = vmatprep.subr.mxu0 %v817
    %836 = vmatpush1.msra.mxu0 %v816
    %837 = vmatprep.subr.mxu0 %v819
    %838 = vmatpush1.msra.mxu0 %v818
    %839 = vmatprep.subr.mxu0 %v821
    %840 = vmatpush1.msra.mxu0 %v820
    %841 = vmatprep.subr.mxu0 0.0
    %842 = vmatpush1.msra.mxu0 0.0
    %843 = vmatprep.subr.mxu0 0.0
    %844 = vmatpush1.msra.mxu0 0.0
    %845 = vmatprep.subr.mxu0 0.0
    %846 = vmatpush1.msra.mxu0 0.0
    %847 = vmatprep.subr.mxu0 0.0
    %848 = vmatpush1.msra.mxu0 0.0
    %849 = vmatprep.subr.mxu0 0.0
    %850 = vmatpush1.msra.mxu0 0.0
    %851 = vmatprep.subr.mxu0 0.0
    %852 = vmatpush1.msra.mxu0 0.0
    %853 = vmatprep.subr.mxu0 0.0
    %854 = vmatpush1.msra.mxu0 0.0
    %855 = vmatprep.subr.mxu0 0.0
    %856 = vmatpush1.msra.mxu0 0.0
    %857 = vmatprep.subr.mxu0 0.0
    %858 = vmatpush1.msra.mxu0 0.0
    %859 = vmatprep.subr.mxu0 0.0
    %860 = vmatpush1.msra.mxu0 0.0
    %861 = vmatprep.subr.mxu0 0.0
    %862 = vmatpush1.msra.mxu0 0.0
    %863 = vmatprep.subr.mxu0 0.0
    %864 = vmatpush1.msra.mxu0 0.0
    %865 = vmatprep.subr.mxu0 0.0
    %866 = vmatpush1.msra.mxu0 0.0
    %867 = vmatprep.subr.mxu0 0.0
    %868 = vmatpush1.msra.mxu0 0.0
    %869 = vmatprep.subr.mxu0 0.0
    %870 = vmatpush1.msra.mxu0 0.0
    %871 = vmatprep.subr.mxu0 0.0
    %872 = vmatpush1.msra.mxu0 0.0
    %873 = vmatprep.subr.mxu0 0.0
    %874 = vmatpush1.msra.mxu0 0.0
    %875 = vmatprep.subr.mxu0 0.0
    %876 = vmatpush1.msra.mxu0 0.0
    %877 = vmatprep.subr.mxu0 0.0
    %878 = vmatpush1.msra.mxu0 0.0
    %879 = vmatprep.subr.mxu0 0.0
    %880 = vmatpush1.msra.mxu0 0.0
    %881 = vmatprep.subr.mxu0 0.0
    %882 = vmatpush1.msra.mxu0 0.0
    %883 = vmatprep.subr.mxu0 0.0
    %884 = vmatpush1.msra.mxu0 0.0
    %885 = vmatprep.subr.mxu0 0.0
    %886 = vmatpush1.msra.mxu0 0.0
    %887 = vmatprep.subr.mxu0 0.0
    %888 = vmatpush1.msra.mxu0 0.0
    %889 = vmatprep.mubr.f32.mxu0 0.0
    %890 = vmatmul.mubr.f32.gmra.mrb[0].mxu0 %v823
    %v891 = vpop.f32.mrb[0].mxu0
    %v892 = vadd.f32 0.0, %v891
    %v893 = vpop.f32.mrb[0].mxu0
    %v894 = vadd.f32 0.0, %v893
    %895 = vdwg.mxu0
    %s896 = scalar_lea.vmem [#allocation2], 24
    %v897 = vld [vmem:[%s896] sm:$0xff]
    %v898 = vadd.f32 %v897, %v892
    %s899 = scalar_lea.vmem [#allocation3], 32
    %v900 = vld [vmem:[%s899] sm:$0xff]
    %v901 = vadd.f32 %v900, %v894
    %v902 = vxor.u32 %v898, 2147483648
    %v903 = vmul.f32 %v902, 1.442695
    %v904 = vpow.pop %v903
    %v905 = vadd.f32 %v904, 1.0
    %v906 = vrcp.pop %v905
    %v907 = vmul.f32 1.0, %v906
    %v908 = vtanh.pop %v898
    %910 = vrot.lane.b32.xlu0 %v805, 32
    %v911 = vpop.permute.xlu0 %910
    %v913 = vmul.f32 %v907, %v911
    %915 = vrot.lane.b32.xlu0 %v908, 64
    %v916 = vpop.permute.xlu0 %915
    %v918 = vmul.f32 %v907, %v916
    %920 = vrot.lane.b32.xlu0 %v918, 32
    %v921 = vpop.permute.xlu0 %920
    %v923 = vadd.f32 %v913, %v921
    %v924 = vtanh.pop %v923
    %926 = vrot.lane.b32.xlu0 %v924, 64
    %v927 = vpop.permute.xlu0 %926
    %v929 = vmul.f32 %v907, %v927
    %v930 = vxor.u32 %v901, 2147483648
    %v931 = vmul.f32 %v930, 1.442695
    %v932 = vpow.pop %v931
    %v933 = vadd.f32 %v932, 1.0
    %v934 = vrcp.pop %v933
    %v935 = vmul.f32 1.0, %v934
    %v936 = vtanh.pop %v901
    %v937 = vmul.f32 %v935, %v805
    %939 = vrot.lane.b32.xlu0 %v936, 64
    %v940 = vpop.permute.xlu0 %939
    %v942 = vmul.f32 %v935, %v940
    %944 = vrot.lane.b32.xlu0 %v942, 32
    %v945 = vpop.permute.xlu0 %944
    %v947 = vadd.f32 %v937, %v945
    %v948 = vtanh.pop %v947
    %950 = vrot.lane.b32.xlu0 %v948, 64
    %v951 = vpop.permute.xlu0 %950
    %v953 = vmul.f32 %v935, %v951
    %vm954 = vcmp.gt.s32.totalorder %v219, 3
    %vm955 = vcmp.gt.s32.totalorder %v219, 4
    %v956 = vsel %vm954, 1, 0
    %957 = vset.pattern.permute.xlu0 0
    %958 = vperm.xlu0 %957, %v956
    %v959 = vpop.permute.xlu0 %958
    %vm960 = vcmp.eq.s32.totalorder %v959, 1
    %961 = vrot.lane.b32.xlu0 %v804, 96
    %v962 = vpop.permute.xlu0 %961
    %v964 = vsel %vm960, %v929, %v962
    %v965 = vsel %vm960, %v923, %v911
    %v966 = vsel %vm955, 1, 0
    %967 = vset.pattern.permute.xlu0 0
    %968 = vperm.xlu0 %967, %v966
    %v969 = vpop.permute.xlu0 %968
    %vm970 = vcmp.eq.s32.totalorder %v969, 1
    %971 = vrot.lane.b32.xlu0 %v804, 64
    %v972 = vpop.permute.xlu0 %971
    %v974 = vsel %vm970, %v953, %v972
    %v975 = vsel %vm970, %v947, %v805
    %977 = vrot.lane.b32.xlu0 %v964, 32
    %v978 = vpop.permute.xlu0 %977
    %981 = vrot.lane.b32.xlu0 %v974, 64
    %v982 = vpop.permute.xlu0 %981
    %v984 = vsel %vm399, %v978, %v982
    %985 = vst.msk [vmem:[#allocation4] sm:$0xff] %vm216, %v984
    %987 = vrot.lane.b32.xlu0 %v965, 96
    %v988 = vpop.permute.xlu0 %987
    %v990 = vsel %vm399, %v988, %v975
    %991 = vst.msk [vmem:[#allocation5] sm:$0xff] %vm216, %v990
    %s992 = scalar_lea.vmem %s5, 24
    %993 = vst.msk [vmem:[%s992] sm:$0xff] %vm399, %v978
    %994 = vrot.lane.b32.xlu0 %v974, 32
    %v995 = vpop.permute.xlu0 %994
    %s997 = scalar_lea.vmem %s6, 32
    %998 = vst.msk [vmem:[%s997] sm:$0xff] %vm399, %v995
    %v999 = vld [vmem:[#allocation4] sm:$0xff]
    %v1000 = vld [vmem:[#allocation5] sm:$0xff]
    %v1001 = vld [vmem:[#allocation6] sm:$0xff]
    %v1002 = vld [vmem:[#allocation6 + $0x8] sm:$0xff]
    %v1003 = vld [vmem:[#allocation6 + $0x10] sm:$0xff]
    %v1004 = vld [vmem:[#allocation6 + $0x18] sm:$0xff]
    %v1005 = vld [vmem:[#allocation6 + $0x20] sm:$0xff]
    %v1006 = vld [vmem:[#allocation6 + $0x28] sm:$0xff]
    %v1007 = vld [vmem:[#allocation6 + $0x30] sm:$0xff]
    %v1008 = vld [vmem:[#allocation6 + $0x38] sm:$0xff]
    %v1009 = vld [vmem:[#allocation6 + $0x40] sm:$0xff]
    %v1010 = vld [vmem:[#allocation6 + $0x48] sm:$0xff]
    %v1011 = vld [vmem:[#allocation6 + $0x50] sm:$0xff]
    %v1012 = vld [vmem:[#allocation6 + $0x58] sm:$0xff]
    %v1013 = vld [vmem:[#allocation6 + $0x60] sm:$0xff]
    %v1014 = vld [vmem:[#allocation6 + $0x68] sm:$0xff]
    %v1015 = vld [vmem:[#allocation6 + $0x70] sm:$0xff]
    %v1016 = vld [vmem:[#allocation6 + $0x78] sm:$0xff]
    %v1018 = vsel %vm216, %v999, 0
    %1020 = vmatprep.subr.mxu0 %v1002
    %1021 = vmatpush1.msra.mxu0 %v1001
    %1022 = vmatprep.subr.mxu0 %v1004
    %1023 = vmatpush1.msra.mxu0 %v1003
    %1024 = vmatprep.subr.mxu0 %v1006
    %1025 = vmatpush1.msra.mxu0 %v1005
    %1026 = vmatprep.subr.mxu0 %v1008
    %1027 = vmatpush1.msra.mxu0 %v1007
    %1028 = vmatprep.subr.mxu0 %v1010
    %1029 = vmatpush1.msra.mxu0 %v1009
    %1030 = vmatprep.subr.mxu0 %v1012
    %1031 = vmatpush1.msra.mxu0 %v1011
    %1032 = vmatprep.subr.mxu0 %v1014
    %1033 = vmatpush1.msra.mxu0 %v1013
    %1034 = vmatprep.subr.mxu0 %v1016
    %1035 = vmatpush1.msra.mxu0 %v1015
    %1036 = vmatprep.subr.mxu0 0.0
    %1037 = vmatpush1.msra.mxu0 0.0
    %1038 = vmatprep.subr.mxu0 0.0
    %1039 = vmatpush1.msra.mxu0 0.0
    %1040 = vmatprep.subr.mxu0 0.0
    %1041 = vmatpush1.msra.mxu0 0.0
    %1042 = vmatprep.subr.mxu0 0.0
    %1043 = vmatpush1.msra.mxu0 0.0
    %1044 = vmatprep.subr.mxu0 0.0
    %1045 = vmatpush1.msra.mxu0 0.0
    %1046 = vmatprep.subr.mxu0 0.0
    %1047 = vmatpush1.msra.mxu0 0.0
    %1048 = vmatprep.subr.mxu0 0.0
    %1049 = vmatpush1.msra.mxu0 0.0
    %1050 = vmatprep.subr.mxu0 0.0
    %1051 = vmatpush1.msra.mxu0 0.0
    %1052 = vmatprep.subr.mxu0 0.0
    %1053 = vmatpush1.msra.mxu0 0.0
    %1054 = vmatprep.subr.mxu0 0.0
    %1055 = vmatpush1.msra.mxu0 0.0
    %1056 = vmatprep.subr.mxu0 0.0
    %1057 = vmatpush1.msra.mxu0 0.0
    %1058 = vmatprep.subr.mxu0 0.0
    %1059 = vmatpush1.msra.mxu0 0.0
    %1060 = vmatprep.subr.mxu0 0.0
    %1061 = vmatpush1.msra.mxu0 0.0
    %1062 = vmatprep.subr.mxu0 0.0
    %1063 = vmatpush1.msra.mxu0 0.0
    %1064 = vmatprep.subr.mxu0 0.0
    %1065 = vmatpush1.msra.mxu0 0.0
    %1066 = vmatprep.subr.mxu0 0.0
    %1067 = vmatpush1.msra.mxu0 0.0
    %1068 = vmatprep.subr.mxu0 0.0
    %1069 = vmatpush1.msra.mxu0 0.0
    %1070 = vmatprep.subr.mxu0 0.0
    %1071 = vmatpush1.msra.mxu0 0.0
    %1072 = vmatprep.subr.mxu0 0.0
    %1073 = vmatpush1.msra.mxu0 0.0
    %1074 = vmatprep.subr.mxu0 0.0
    %1075 = vmatpush1.msra.mxu0 0.0
    %1076 = vmatprep.subr.mxu0 0.0
    %1077 = vmatpush1.msra.mxu0 0.0
    %1078 = vmatprep.subr.mxu0 0.0
    %1079 = vmatpush1.msra.mxu0 0.0
    %1080 = vmatprep.subr.mxu0 0.0
    %1081 = vmatpush1.msra.mxu0 0.0
    %1082 = vmatprep.subr.mxu0 0.0
    %1083 = vmatpush1.msra.mxu0 0.0
    %1084 = vmatprep.mubr.f32.mxu0 0.0
    %1085 = vmatmul.mubr.f32.gmra.mrb[0].mxu0 %v1018
    %v1086 = vpop.f32.mrb[0].mxu0
    %v1087 = vadd.f32 0.0, %v1086
    %v1088 = vpop.f32.mrb[0].mxu0
    %v1089 = vadd.f32 0.0, %v1088
    %1090 = vdwg.mxu0
    %s1091 = scalar_lea.vmem [#allocation2], 32
    %v1092 = vld [vmem:[%s1091] sm:$0xff]
    %v1093 = vadd.f32 %v1092, %v1087
    %s1094 = scalar_lea.vmem [#allocation3], 24
    %v1095 = vld [vmem:[%s1094] sm:$0xff]
    %v1096 = vadd.f32 %v1095, %v1089
    %v1097 = vxor.u32 %v1093, 2147483648
    %v1098 = vmul.f32 %v1097, 1.442695
    %v1099 = vpow.pop %v1098
    %v1100 = vadd.f32 %v1099, 1.0
    %v1101 = vrcp.pop %v1100
    %v1102 = vmul.f32 1.0, %v1101
    %v1103 = vtanh.pop %v1093
    %1105 = vrot.lane.b32.xlu0 %v1000, 32
    %v1106 = vpop.permute.xlu0 %1105
    %v1108 = vmul.f32 %v1102, %v1106
    %1110 = vrot.lane.b32.xlu0 %v1103, 64
    %v1111 = vpop.permute.xlu0 %1110
    %v1113 = vmul.f32 %v1102, %v1111
    %1115 = vrot.lane.b32.xlu0 %v1113, 32
    %v1116 = vpop.permute.xlu0 %1115
    %v1118 = vadd.f32 %v1108, %v1116
    %v1119 = vtanh.pop %v1118
    %1121 = vrot.lane.b32.xlu0 %v1119, 64
    %v1122 = vpop.permute.xlu0 %1121
    %v1124 = vmul.f32 %v1102, %v1122
    %v1125 = vxor.u32 %v1096, 2147483648
    %v1126 = vmul.f32 %v1125, 1.442695
    %v1127 = vpow.pop %v1126
    %v1128 = vadd.f32 %v1127, 1.0
    %v1129 = vrcp.pop %v1128
    %v1130 = vmul.f32 1.0, %v1129
    %v1131 = vtanh.pop %v1096
    %v1132 = vmul.f32 %v1130, %v1000
    %1134 = vrot.lane.b32.xlu0 %v1131, 64
    %v1135 = vpop.permute.xlu0 %1134
    %v1137 = vmul.f32 %v1130, %v1135
    %1139 = vrot.lane.b32.xlu0 %v1137, 32
    %v1140 = vpop.permute.xlu0 %1139
    %v1142 = vadd.f32 %v1132, %v1140
    %v1143 = vtanh.pop %v1142
    %1145 = vrot.lane.b32.xlu0 %v1143, 64
    %v1146 = vpop.permute.xlu0 %1145
    %v1148 = vmul.f32 %v1130, %v1146
    %1149 = vrot.lane.b32.xlu0 %v999, 96
    %v1150 = vpop.permute.xlu0 %1149
    %v1152 = vsel %vm970, %v1124, %v1150
    %v1153 = vsel %vm970, %v1118, %v1106
    %1154 = vrot.lane.b32.xlu0 %v999, 64
    %v1155 = vpop.permute.xlu0 %1154
    %v1157 = vsel %vm960, %v1148, %v1155
    %v1158 = vsel %vm960, %v1142, %v1000
    %1160 = vrot.lane.b32.xlu0 %v1152, 32
    %v1161 = vpop.permute.xlu0 %1160
    %1164 = vrot.lane.b32.xlu0 %v1157, 64
    %v1165 = vpop.permute.xlu0 %1164
    %v1167 = vsel %vm399, %v1161, %v1165
    %1168 = vst.msk [vmem:[#allocation4] sm:$0xff] %vm216, %v1167
    %1170 = vrot.lane.b32.xlu0 %v1153, 96
    %v1171 = vpop.permute.xlu0 %1170
    %v1173 = vsel %vm399, %v1171, %v1158
    %1174 = vst.msk [vmem:[#allocation5] sm:$0xff] %vm216, %v1173
    %s1175 = scalar_lea.vmem %s5, 32
    %1176 = vst.msk [vmem:[%s1175] sm:$0xff] %vm399, %v1161
    %1177 = vrot.lane.b32.xlu0 %v1157, 32
    %v1178 = vpop.permute.xlu0 %1177
    %s1180 = scalar_lea.vmem %s6, 24
    %1181 = vst.msk [vmem:[%s1180] sm:$0xff] %vm399, %v1178
    %v1182 = vld [vmem:[#allocation4] sm:$0xff]
    %v1183 = vld [vmem:[#allocation5] sm:$0xff]
    %v1184 = vld [vmem:[#allocation6] sm:$0xff]
    %v1185 = vld [vmem:[#allocation6 + $0x8] sm:$0xff]
    %v1186 = vld [vmem:[#allocation6 + $0x10] sm:$0xff]
    %v1187 = vld [vmem:[#allocation6 + $0x18] sm:$0xff]
    %v1188 = vld [vmem:[#allocation6 + $0x20] sm:$0xff]
    %v1189 = vld [vmem:[#allocation6 + $0x28] sm:$0xff]
    %v1190 = vld [vmem:[#allocation6 + $0x30] sm:$0xff]
    %v1191 = vld [vmem:[#allocation6 + $0x38] sm:$0xff]
    %v1192 = vld [vmem:[#allocation6 + $0x40] sm:$0xff]
    %v1193 = vld [vmem:[#allocation6 + $0x48] sm:$0xff]
    %v1194 = vld [vmem:[#allocation6 + $0x50] sm:$0xff]
    %v1195 = vld [vmem:[#allocation6 + $0x58] sm:$0xff]
    %v1196 = vld [vmem:[#allocation6 + $0x60] sm:$0xff]
    %v1197 = vld [vmem:[#allocation6 + $0x68] sm:$0xff]
    %v1198 = vld [vmem:[#allocation6 + $0x70] sm:$0xff]
    %v1199 = vld [vmem:[#allocation6 + $0x78] sm:$0xff]
    %v1201 = vsel %vm216, %v1182, 0
    %1203 = vmatprep.subr.mxu0 %v1185
    %1204 = vmatpush1.msra.mxu0 %v1184
    %1205 = vmatprep.subr.mxu0 %v1187
    %1206 = vmatpush1.msra.mxu0 %v1186
    %1207 = vmatprep.subr.mxu0 %v1189
    %1208 = vmatpush1.msra.mxu0 %v1188
    %1209 = vmatprep.subr.mxu0 %v1191
    %1210 = vmatpush1.msra.mxu0 %v1190
    %1211 = vmatprep.subr.mxu0 %v1193
    %1212 = vmatpush1.msra.mxu0 %v1192
    %1213 = vmatprep.subr.mxu0 %v1195
    %1214 = vmatpush1.msra.mxu0 %v1194
    %1215 = vmatprep.subr.mxu0 %v1197
    %1216 = vmatpush1.msra.mxu0 %v1196
    %1217 = vmatprep.subr.mxu0 %v1199
    %1218 = vmatpush1.msra.mxu0 %v1198
    %1219 = vmatprep.subr.mxu0 0.0
    %1220 = vmatpush1.msra.mxu0 0.0
    %1221 = vmatprep.subr.mxu0 0.0
    %1222 = vmatpush1.msra.mxu0 0.0
    %1223 = vmatprep.subr.mxu0 0.0
    %1224 = vmatpush1.msra.mxu0 0.0
    %1225 = vmatprep.subr.mxu0 0.0
    %1226 = vmatpush1.msra.mxu0 0.0
    %1227 = vmatprep.subr.mxu0 0.0
    %1228 = vmatpush1.msra.mxu0 0.0
    %1229 = vmatprep.subr.mxu0 0.0
    %1230 = vmatpush1.msra.mxu0 0.0
    %1231 = vmatprep.subr.mxu0 0.0
    %1232 = vmatpush1.msra.mxu0 0.0
    %1233 = vmatprep.subr.mxu0 0.0
    %1234 = vmatpush1.msra.mxu0 0.0
    %1235 = vmatprep.subr.mxu0 0.0
    %1236 = vmatpush1.msra.mxu0 0.0
    %1237 = vmatprep.subr.mxu0 0.0
    %1238 = vmatpush1.msra.mxu0 0.0
    %1239 = vmatprep.subr.mxu0 0.0
    %1240 = vmatpush1.msra.mxu0 0.0
    %1241 = vmatprep.subr.mxu0 0.0
    %1242 = vmatpush1.msra.mxu0 0.0
    %1243 = vmatprep.subr.mxu0 0.0
    %1244 = vmatpush1.msra.mxu0 0.0
    %1245 = vmatprep.subr.mxu0 0.0
    %1246 = vmatpush1.msra.mxu0 0.0
    %1247 = vmatprep.subr.mxu0 0.0
    %1248 = vmatpush1.msra.mxu0 0.0
    %1249 = vmatprep.subr.mxu0 0.0
    %1250 = vmatpush1.msra.mxu0 0.0
    %1251 = vmatprep.subr.mxu0 0.0
    %1252 = vmatpush1.msra.mxu0 0.0
    %1253 = vmatprep.subr.mxu0 0.0
    %1254 = vmatpush1.msra.mxu0 0.0
    %1255 = vmatprep.subr.mxu0 0.0
    %1256 = vmatpush1.msra.mxu0 0.0
    %1257 = vmatprep.subr.mxu0 0.0
    %1258 = vmatpush1.msra.mxu0 0.0
    %1259 = vmatprep.subr.mxu0 0.0
    %1260 = vmatpush1.msra.mxu0 0.0
    %1261 = vmatprep.subr.mxu0 0.0
    %1262 = vmatpush1.msra.mxu0 0.0
    %1263 = vmatprep.subr.mxu0 0.0
    %1264 = vmatpush1.msra.mxu0 0.0
    %1265 = vmatprep.subr.mxu0 0.0
    %1266 = vmatpush1.msra.mxu0 0.0
    %1267 = vmatprep.mubr.f32.mxu0 0.0
    %1268 = vmatmul.mubr.f32.gmra.mrb[0].mxu0 %v1201
    %v1269 = vpop.f32.mrb[0].mxu0
    %v1270 = vadd.f32 0.0, %v1269
    %v1271 = vpop.f32.mrb[0].mxu0
    %v1272 = vadd.f32 0.0, %v1271
    %1273 = vdwg.mxu0
    %s1274 = scalar_lea.vmem [#allocation2], 40
    %v1275 = vld [vmem:[%s1274] sm:$0xff]
    %v1276 = vadd.f32 %v1275, %v1270
    %s1277 = scalar_lea.vmem [#allocation3], 16
    %v1278 = vld [vmem:[%s1277] sm:$0xff]
    %v1279 = vadd.f32 %v1278, %v1272
    %v1280 = vxor.u32 %v1276, 2147483648
    %v1281 = vmul.f32 %v1280, 1.442695
    %v1282 = vpow.pop %v1281
    %v1283 = vadd.f32 %v1282, 1.0
    %v1284 = vrcp.pop %v1283
    %v1285 = vmul.f32 1.0, %v1284
    %v1286 = vtanh.pop %v1276
    %1288 = vrot.lane.b32.xlu0 %v1183, 32
    %v1289 = vpop.permute.xlu0 %1288
    %v1291 = vmul.f32 %v1285, %v1289
    %1293 = vrot.lane.b32.xlu0 %v1286, 64
    %v1294 = vpop.permute.xlu0 %1293
    %v1296 = vmul.f32 %v1285, %v1294
    %1298 = vrot.lane.b32.xlu0 %v1296, 32
    %v1299 = vpop.permute.xlu0 %1298
    %v1301 = vadd.f32 %v1291, %v1299
    %v1302 = vtanh.pop %v1301
    %1304 = vrot.lane.b32.xlu0 %v1302, 64
    %v1305 = vpop.permute.xlu0 %1304
    %v1307 = vmul.f32 %v1285, %v1305
    %v1308 = vxor.u32 %v1279, 2147483648
    %v1309 = vmul.f32 %v1308, 1.442695
    %v1310 = vpow.pop %v1309
    %v1311 = vadd.f32 %v1310, 1.0
    %v1312 = vrcp.pop %v1311
    %v1313 = vmul.f32 1.0, %v1312
    %v1314 = vtanh.pop %v1279
    %v1315 = vmul.f32 %v1313, %v1183
    %1317 = vrot.lane.b32.xlu0 %v1314, 64
    %v1318 = vpop.permute.xlu0 %1317
    %v1320 = vmul.f32 %v1313, %v1318
    %1322 = vrot.lane.b32.xlu0 %v1320, 32
    %v1323 = vpop.permute.xlu0 %1322
    %v1325 = vadd.f32 %v1315, %v1323
    %v1326 = vtanh.pop %v1325
    %1328 = vrot.lane.b32.xlu0 %v1326, 64
    %v1329 = vpop.permute.xlu0 %1328
    %v1331 = vmul.f32 %v1313, %v1329
    %1332 = vrot.lane.b32.xlu0 %v1182, 96
    %v1333 = vpop.permute.xlu0 %1332
    %v1335 = vsel %vm775, %v1307, %v1333
    %v1336 = vsel %vm775, %v1301, %v1289
    %1337 = vrot.lane.b32.xlu0 %v1182, 64
    %v1338 = vpop.permute.xlu0 %1337
    %v1340 = vsel %vm765, %v1331, %v1338
    %v1341 = vsel %vm765, %v1325, %v1183
    %1343 = vrot.lane.b32.xlu0 %v1335, 32
    %v1344 = vpop.permute.xlu0 %1343
    %1347 = vrot.lane.b32.xlu0 %v1340, 64
    %v1348 = vpop.permute.xlu0 %1347
    %v1350 = vsel %vm399, %v1344, %v1348
    %1351 = vst.msk [vmem:[#allocation4] sm:$0xff] %vm216, %v1350
    %1353 = vrot.lane.b32.xlu0 %v1336, 96
    %v1354 = vpop.permute.xlu0 %1353
    %v1356 = vsel %vm399, %v1354, %v1341
    %1357 = vst.msk [vmem:[#allocation5] sm:$0xff] %vm216, %v1356
    %s1358 = scalar_lea.vmem %s5, 40
    %1359 = vst.msk [vmem:[%s1358] sm:$0xff] %vm399, %v1344
    %1360 = vrot.lane.b32.xlu0 %v1340, 32
    %v1361 = vpop.permute.xlu0 %1360
    %s1363 = scalar_lea.vmem %s6, 16
    %1364 = vst.msk [vmem:[%s1363] sm:$0xff] %vm399, %v1361
    %v1365 = vld [vmem:[#allocation4] sm:$0xff]
    %v1366 = vld [vmem:[#allocation5] sm:$0xff]
    %v1367 = vld [vmem:[#allocation6] sm:$0xff]
    %v1368 = vld [vmem:[#allocation6 + $0x8] sm:$0xff]
    %v1369 = vld [vmem:[#allocation6 + $0x10] sm:$0xff]
    %v1370 = vld [vmem:[#allocation6 + $0x18] sm:$0xff]
    %v1371 = vld [vmem:[#allocation6 + $0x20] sm:$0xff]
    %v1372 = vld [vmem:[#allocation6 + $0x28] sm:$0xff]
    %v1373 = vld [vmem:[#allocation6 + $0x30] sm:$0xff]
    %v1374 = vld [vmem:[#allocation6 + $0x38] sm:$0xff]
    %v1375 = vld [vmem:[#allocation6 + $0x40] sm:$0xff]
    %v1376 = vld [vmem:[#allocation6 + $0x48] sm:$0xff]
    %v1377 = vld [vmem:[#allocation6 + $0x50] sm:$0xff]
    %v1378 = vld [vmem:[#allocation6 + $0x58] sm:$0xff]
    %v1379 = vld [vmem:[#allocation6 + $0x60] sm:$0xff]
    %v1380 = vld [vmem:[#allocation6 + $0x68] sm:$0xff]
    %v1381 = vld [vmem:[#allocation6 + $0x70] sm:$0xff]
    %v1382 = vld [vmem:[#allocation6 + $0x78] sm:$0xff]
    %v1384 = vsel %vm216, %v1365, 0
    %1386 = vmatprep.subr.mxu0 %v1368
    %1387 = vmatpush1.msra.mxu0 %v1367
    %1388 = vmatprep.subr.mxu0 %v1370
    %1389 = vmatpush1.msra.mxu0 %v1369
    %1390 = vmatprep.subr.mxu0 %v1372
    %1391 = vmatpush1.msra.mxu0 %v1371
    %1392 = vmatprep.subr.mxu0 %v1374
    %1393 = vmatpush1.msra.mxu0 %v1373
    %1394 = vmatprep.subr.mxu0 %v1376
    %1395 = vmatpush1.msra.mxu0 %v1375
    %1396 = vmatprep.subr.mxu0 %v1378
    %1397 = vmatpush1.msra.mxu0 %v1377
    %1398 = vmatprep.subr.mxu0 %v1380
    %1399 = vmatpush1.msra.mxu0 %v1379
    %1400 = vmatprep.subr.mxu0 %v1382
    %1401 = vmatpush1.msra.mxu0 %v1381
    %1402 = vmatprep.subr.mxu0 0.0
    %1403 = vmatpush1.msra.mxu0 0.0
    %1404 = vmatprep.subr.mxu0 0.0
    %1405 = vmatpush1.msra.mxu0 0.0
    %1406 = vmatprep.subr.mxu0 0.0
    %1407 = vmatpush1.msra.mxu0 0.0
    %1408 = vmatprep.subr.mxu0 0.0
    %1409 = vmatpush1.msra.mxu0 0.0
    %1410 = vmatprep.subr.mxu0 0.0
    %1411 = vmatpush1.msra.mxu0 0.0
    %1412 = vmatprep.subr.mxu0 0.0
    %1413 = vmatpush1.msra.mxu0 0.0
    %1414 = vmatprep.subr.mxu0 0.0
    %1415 = vmatpush1.msra.mxu0 0.0
    %1416 = vmatprep.subr.mxu0 0.0
    %1417 = vmatpush1.msra.mxu0 0.0
    %1418 = vmatprep.subr.mxu0 0.0
    %1419 = vmatpush1.msra.mxu0 0.0
    %1420 = vmatprep.subr.mxu0 0.0
    %1421 = vmatpush1.msra.mxu0 0.0
    %1422 = vmatprep.subr.mxu0 0.0
    %1423 = vmatpush1.msra.mxu0 0.0
    %1424 = vmatprep.subr.mxu0 0.0
    %1425 = vmatpush1.msra.mxu0 0.0
    %1426 = vmatprep.subr.mxu0 0.0
    %1427 = vmatpush1.msra.mxu0 0.0
    %1428 = vmatprep.subr.mxu0 0.0
    %1429 = vmatpush1.msra.mxu0 0.0
    %1430 = vmatprep.subr.mxu0 0.0
    %1431 = vmatpush1.msra.mxu0 0.0
    %1432 = vmatprep.subr.mxu0 0.0
    %1433 = vmatpush1.msra.mxu0 0.0
    %1434 = vmatprep.subr.mxu0 0.0
    %1435 = vmatpush1.msra.mxu0 0.0
    %1436 = vmatprep.subr.mxu0 0.0
    %1437 = vmatpush1.msra.mxu0 0.0
    %1438 = vmatprep.subr.mxu0 0.0
    %1439 = vmatpush1.msra.mxu0 0.0
    %1440 = vmatprep.subr.mxu0 0.0
    %1441 = vmatpush1.msra.mxu0 0.0
    %1442 = vmatprep.subr.mxu0 0.0
    %1443 = vmatpush1.msra.mxu0 0.0
    %1444 = vmatprep.subr.mxu0 0.0
    %1445 = vmatpush1.msra.mxu0 0.0
    %1446 = vmatprep.subr.mxu0 0.0
    %1447 = vmatpush1.msra.mxu0 0.0
    %1448 = vmatprep.subr.mxu0 0.0
    %1449 = vmatpush1.msra.mxu0 0.0
    %1450 = vmatprep.mubr.f32.mxu0 0.0
    %1451 = vmatmul.mubr.f32.gmra.mrb[0].mxu0 %v1384
    %v1452 = vpop.f32.mrb[0].mxu0
    %v1453 = vadd.f32 0.0, %v1452
    %v1454 = vpop.f32.mrb[0].mxu0
    %v1455 = vadd.f32 0.0, %v1454
    %1456 = vdwg.mxu0
    %s1457 = scalar_lea.vmem [#allocation2], 48
    %v1458 = vld [vmem:[%s1457] sm:$0xff]
    %v1459 = vadd.f32 %v1458, %v1453
    %s1460 = scalar_lea.vmem [#allocation3], 8
    %v1461 = vld [vmem:[%s1460] sm:$0xff]
    %v1462 = vadd.f32 %v1461, %v1455
    %v1463 = vxor.u32 %v1459, 2147483648
    %v1464 = vmul.f32 %v1463, 1.442695
    %v1465 = vpow.pop %v1464
    %v1466 = vadd.f32 %v1465, 1.0
    %v1467 = vrcp.pop %v1466
    %v1468 = vmul.f32 1.0, %v1467
    %v1469 = vtanh.pop %v1459
    %1471 = vrot.lane.b32.xlu0 %v1366, 32
    %v1472 = vpop.permute.xlu0 %1471
    %v1474 = vmul.f32 %v1468, %v1472
    %1476 = vrot.lane.b32.xlu0 %v1469, 64
    %v1477 = vpop.permute.xlu0 %1476
    %v1479 = vmul.f32 %v1468, %v1477
    %1481 = vrot.lane.b32.xlu0 %v1479, 32
    %v1482 = vpop.permute.xlu0 %1481
    %v1484 = vadd.f32 %v1474, %v1482
    %v1485 = vtanh.pop %v1484
    %1487 = vrot.lane.b32.xlu0 %v1485, 64
    %v1488 = vpop.permute.xlu0 %1487
    %v1490 = vmul.f32 %v1468, %v1488
    %v1491 = vxor.u32 %v1462, 2147483648
    %v1492 = vmul.f32 %v1491, 1.442695
    %v1493 = vpow.pop %v1492
    %v1494 = vadd.f32 %v1493, 1.0
    %v1495 = vrcp.pop %v1494
    %v1496 = vmul.f32 1.0, %v1495
    %v1497 = vtanh.pop %v1462
    %v1498 = vmul.f32 %v1496, %v1366
    %1500 = vrot.lane.b32.xlu0 %v1497, 64
    %v1501 = vpop.permute.xlu0 %1500
    %v1503 = vmul.f32 %v1496, %v1501
    %1505 = vrot.lane.b32.xlu0 %v1503, 32
    %v1506 = vpop.permute.xlu0 %1505
    %v1508 = vadd.f32 %v1498, %v1506
    %v1509 = vtanh.pop %v1508
    %1511 = vrot.lane.b32.xlu0 %v1509, 64
    %v1512 = vpop.permute.xlu0 %1511
    %v1514 = vmul.f32 %v1496, %v1512
    %1515 = vrot.lane.b32.xlu0 %v1365, 96
    %v1516 = vpop.permute.xlu0 %1515
    %v1518 = vsel %vm580, %v1490, %v1516
    %v1519 = vsel %vm580, %v1484, %v1472
    %1520 = vrot.lane.b32.xlu0 %v1365, 64
    %v1521 = vpop.permute.xlu0 %1520
    %v1523 = vsel %vm570, %v1514, %v1521
    %v1524 = vsel %vm570, %v1508, %v1366
    %1526 = vrot.lane.b32.xlu0 %v1518, 32
    %v1527 = vpop.permute.xlu0 %1526
    %1530 = vrot.lane.b32.xlu0 %v1523, 64
    %v1531 = vpop.permute.xlu0 %1530
    %v1533 = vsel %vm399, %v1527, %v1531
    %1534 = vst.msk [vmem:[#allocation4] sm:$0xff] %vm216, %v1533
    %1536 = vrot.lane.b32.xlu0 %v1519, 96
    %v1537 = vpop.permute.xlu0 %1536
    %v1539 = vsel %vm399, %v1537, %v1524
    %1540 = vst.msk [vmem:[#allocation5] sm:$0xff] %vm216, %v1539
    %s1541 = scalar_lea.vmem %s5, 48
    %1542 = vst.msk [vmem:[%s1541] sm:$0xff] %vm399, %v1527
    %1543 = vrot.lane.b32.xlu0 %v1523, 32
    %v1544 = vpop.permute.xlu0 %1543
    %s1546 = scalar_lea.vmem %s6, 8
    %1547 = vst.msk [vmem:[%s1546] sm:$0xff] %vm399, %v1544
    %v1548 = vld [vmem:[#allocation4] sm:$0xff]
    %v1549 = vld [vmem:[#allocation5] sm:$0xff]
    %v1550 = vld [vmem:[#allocation6] sm:$0xff]
    %v1551 = vld [vmem:[#allocation6 + $0x8] sm:$0xff]
    %v1552 = vld [vmem:[#allocation6 + $0x10] sm:$0xff]
    %v1553 = vld [vmem:[#allocation6 + $0x18] sm:$0xff]
    %v1554 = vld [vmem:[#allocation6 + $0x20] sm:$0xff]
    %v1555 = vld [vmem:[#allocation6 + $0x28] sm:$0xff]
    %v1556 = vld [vmem:[#allocation6 + $0x30] sm:$0xff]
    %v1557 = vld [vmem:[#allocation6 + $0x38] sm:$0xff]
    %v1558 = vld [vmem:[#allocation6 + $0x40] sm:$0xff]
    %v1559 = vld [vmem:[#allocation6 + $0x48] sm:$0xff]
    %v1560 = vld [vmem:[#allocation6 + $0x50] sm:$0xff]
    %v1561 = vld [vmem:[#allocation6 + $0x58] sm:$0xff]
    %v1562 = vld [vmem:[#allocation6 + $0x60] sm:$0xff]
    %v1563 = vld [vmem:[#allocation6 + $0x68] sm:$0xff]
    %v1564 = vld [vmem:[#allocation6 + $0x70] sm:$0xff]
    %v1565 = vld [vmem:[#allocation6 + $0x78] sm:$0xff]
    %v1567 = vsel %vm216, %v1548, 0
    %1569 = vmatprep.subr.mxu0 %v1551
    %1570 = vmatpush1.msra.mxu0 %v1550
    %1571 = vmatprep.subr.mxu0 %v1553
    %1572 = vmatpush1.msra.mxu0 %v1552
    %1573 = vmatprep.subr.mxu0 %v1555
    %1574 = vmatpush1.msra.mxu0 %v1554
    %1575 = vmatprep.subr.mxu0 %v1557
    %1576 = vmatpush1.msra.mxu0 %v1556
    %1577 = vmatprep.subr.mxu0 %v1559
    %1578 = vmatpush1.msra.mxu0 %v1558
    %1579 = vmatprep.subr.mxu0 %v1561
    %1580 = vmatpush1.msra.mxu0 %v1560
    %1581 = vmatprep.subr.mxu0 %v1563
    %1582 = vmatpush1.msra.mxu0 %v1562
    %1583 = vmatprep.subr.mxu0 %v1565
    %1584 = vmatpush1.msra.mxu0 %v1564
    %1585 = vmatprep.subr.mxu0 0.0
    %1586 = vmatpush1.msra.mxu0 0.0
    %1587 = vmatprep.subr.mxu0 0.0
    %1588 = vmatpush1.msra.mxu0 0.0
    %1589 = vmatprep.subr.mxu0 0.0
    %1590 = vmatpush1.msra.mxu0 0.0
    %1591 = vmatprep.subr.mxu0 0.0
    %1592 = vmatpush1.msra.mxu0 0.0
    %1593 = vmatprep.subr.mxu0 0.0
    %1594 = vmatpush1.msra.mxu0 0.0
    %1595 = vmatprep.subr.mxu0 0.0
    %1596 = vmatpush1.msra.mxu0 0.0
    %1597 = vmatprep.subr.mxu0 0.0
    %1598 = vmatpush1.msra.mxu0 0.0
    %1599 = vmatprep.subr.mxu0 0.0
    %1600 = vmatpush1.msra.mxu0 0.0
    %1601 = vmatprep.subr.mxu0 0.0
    %1602 = vmatpush1.msra.mxu0 0.0
    %1603 = vmatprep.subr.mxu0 0.0
    %1604 = vmatpush1.msra.mxu0 0.0
    %1605 = vmatprep.subr.mxu0 0.0
    %1606 = vmatpush1.msra.mxu0 0.0
    %1607 = vmatprep.subr.mxu0 0.0
    %1608 = vmatpush1.msra.mxu0 0.0
    %1609 = vmatprep.subr.mxu0 0.0
    %1610 = vmatpush1.msra.mxu0 0.0
    %1611 = vmatprep.subr.mxu0 0.0
    %1612 = vmatpush1.msra.mxu0 0.0
    %1613 = vmatprep.subr.mxu0 0.0
    %1614 = vmatpush1.msra.mxu0 0.0
    %1615 = vmatprep.subr.mxu0 0.0
    %1616 = vmatpush1.msra.mxu0 0.0
    %1617 = vmatprep.subr.mxu0 0.0
    %1618 = vmatpush1.msra.mxu0 0.0
    %1619 = vmatprep.subr.mxu0 0.0
    %1620 = vmatpush1.msra.mxu0 0.0
    %1621 = vmatprep.subr.mxu0 0.0
    %1622 = vmatpush1.msra.mxu0 0.0
    %1623 = vmatprep.subr.mxu0 0.0
    %1624 = vmatpush1.msra.mxu0 0.0
    %1625 = vmatprep.subr.mxu0 0.0
    %1626 = vmatpush1.msra.mxu0 0.0
    %1627 = vmatprep.subr.mxu0 0.0
    %1628 = vmatpush1.msra.mxu0 0.0
    %1629 = vmatprep.subr.mxu0 0.0
    %1630 = vmatpush1.msra.mxu0 0.0
    %1631 = vmatprep.subr.mxu0 0.0
    %1632 = vmatpush1.msra.mxu0 0.0
    %1633 = vmatprep.mubr.f32.mxu0 0.0
    %1634 = vmatmul.mubr.f32.gmra.mrb[0].mxu0 %v1567
    %v1635 = vpop.f32.mrb[0].mxu0
    %v1636 = vadd.f32 0.0, %v1635
    %v1637 = vpop.f32.mrb[0].mxu0
    %v1638 = vadd.f32 0.0, %v1637
    %1639 = vdwg.mxu0
    %s1640 = scalar_lea.vmem [#allocation2], 56
    %v1641 = vld [vmem:[%s1640] sm:$0xff]
    %v1642 = vadd.f32 %v1641, %v1636
    %v1643 = vld [vmem:[#allocation3] sm:$0xff]
    %v1644 = vadd.f32 %v1643, %v1638
    %v1645 = vxor.u32 %v1642, 2147483648
    %v1646 = vmul.f32 %v1645, 1.442695
    %v1647 = vpow.pop %v1646
    %v1648 = vadd.f32 %v1647, 1.0
    %v1649 = vrcp.pop %v1648
    %v1650 = vmul.f32 1.0, %v1649
    %v1651 = vtanh.pop %v1642
    %1653 = vrot.lane.b32.xlu0 %v1549, 32
    %v1654 = vpop.permute.xlu0 %1653
    %v1656 = vmul.f32 %v1650, %v1654
    %1658 = vrot.lane.b32.xlu0 %v1651, 64
    %v1659 = vpop.permute.xlu0 %1658
    %v1661 = vmul.f32 %v1650, %v1659
    %1663 = vrot.lane.b32.xlu0 %v1661, 32
    %v1664 = vpop.permute.xlu0 %1663
    %v1666 = vadd.f32 %v1656, %v1664
    %v1667 = vtanh.pop %v1666
    %1669 = vrot.lane.b32.xlu0 %v1667, 64
    %v1670 = vpop.permute.xlu0 %1669
    %v1672 = vmul.f32 %v1650, %v1670
    %v1673 = vxor.u32 %v1644, 2147483648
    %v1674 = vmul.f32 %v1673, 1.442695
    %v1675 = vpow.pop %v1674
    %v1676 = vadd.f32 %v1675, 1.0
    %v1677 = vrcp.pop %v1676
    %v1678 = vmul.f32 1.0, %v1677
    %v1679 = vtanh.pop %v1644
    %v1680 = vmul.f32 %v1678, %v1549
    %1682 = vrot.lane.b32.xlu0 %v1679, 64
    %v1683 = vpop.permute.xlu0 %1682
    %v1685 = vmul.f32 %v1678, %v1683
    %1687 = vrot.lane.b32.xlu0 %v1685, 32
    %v1688 = vpop.permute.xlu0 %1687
    %v1690 = vadd.f32 %v1680, %v1688
    %v1691 = vtanh.pop %v1690
    %1693 = vrot.lane.b32.xlu0 %v1691, 64
    %v1694 = vpop.permute.xlu0 %1693
    %v1696 = vmul.f32 %v1678, %v1694
    %1697 = vrot.lane.b32.xlu0 %v1548, 96
    %v1698 = vpop.permute.xlu0 %1697
    %v1700 = vsel %vm385, %v1672, %v1698
    %v1701 = vsel %vm385, %v1666, %v1654
    %1702 = vrot.lane.b32.xlu0 %v1548, 64
    %v1703 = vpop.permute.xlu0 %1702
    %v1705 = vsel %vm375, %v1696, %v1703
    %v1706 = vsel %vm375, %v1690, %v1549
    %1708 = vrot.lane.b32.xlu0 %v1700, 32
    %v1709 = vpop.permute.xlu0 %1708
    %1712 = vrot.lane.b32.xlu0 %v1705, 64
    %v1713 = vpop.permute.xlu0 %1712
    %v1715 = vsel %vm399, %v1709, %v1713
    %1716 = vst.msk [vmem:[#allocation4] sm:$0xff] %vm216, %v1715
    %1718 = vrot.lane.b32.xlu0 %v1701, 96
    %v1719 = vpop.permute.xlu0 %1718
    %v1721 = vsel %vm399, %v1719, %v1706
    %1722 = vst.msk [vmem:[#allocation5] sm:$0xff] %vm216, %v1721
    %s1723 = scalar_lea.vmem %s5, 56
    %1724 = vst.msk [vmem:[%s1723] sm:$0xff] %vm399, %v1709
    %1725 = vrot.lane.b32.xlu0 %v1705, 32
    %v1726 = vpop.permute.xlu0 %1725
    %1728 = vst.msk [vmem:[%s6] sm:$0xff] %vm399, %v1726
    %v1729 = vld [vmem:[#allocation4] sm:$0xff]
    %1730 = vst.msk [vmem:[#allocation9] sm:$0xff] %vm216, %v1729
    // Predicated region
    $region26: #{tpu_custom_call.1} parent=1 // pred_check
      _
    $region27: #{tpu_custom_call.1} parent=1 // pred_check_branch
      %1732 = sbr.rel (0) target = $region29
    $region28: #{tpu_custom_call.1} parent=1 // pred_region
      _
    $region29: #{tpu_custom_call.1} parent=1 // pred_fallthru
      _
    // Predicated region
    $region30: #{tpu_custom_call.1} parent=1 // pred_check
      _
    $region31: #{tpu_custom_call.1} parent=1 // pred_check_branch
      %1734 = sbr.rel (0) target = $region33
    $region32: #{tpu_custom_call.1} parent=1 // pred_region
      _
    $region33: #{tpu_custom_call.1} parent=1 // pred_fallthru
      _
    // Predicated region
    $region34: #{tpu_custom_call.1} parent=1 // pred_check
      _
    $region35: #{tpu_custom_call.1} parent=1 // pred_check_branch
      %1736 = sbr.rel (0) target = $region37
    $region36: #{tpu_custom_call.1} parent=1 // pred_region
      %s1738 = ssub.s32 128, 128
      %1739 = vsyncadd [#allocation8], %s1738
      %s1741 = sshll.u32 [#allocation9], 4
      %s1742 = int_to_ptr.vmem [resolvable:$true] %s1741
      %1744 = dma.vmem_to_hbm [thread:$0]  %s1742, 128, %s7, [#allocation8]
    $region37: #{tpu_custom_call.1} parent=1 // pred_fallthru
      _
    // Predicated region
    $region38: #{tpu_custom_call.1} parent=1 // pred_check
      _
    $region39: #{tpu_custom_call.1} parent=1 // pred_check_branch
      %1746 = sbr.rel (0) target = $region41
    $region40: #{tpu_custom_call.1} parent=1 // pred_region
      _
    $region41: #{tpu_custom_call.1} parent=1 // pred_fallthru
      _
    // Predicated region
    $region42: #{tpu_custom_call.1} parent=1 // pred_check
      _
    $region43: #{tpu_custom_call.1} parent=1 // pred_check_branch
      %1748 = sbr.rel (0) target = $region45
    $region44: #{tpu_custom_call.1} parent=1 // pred_region
      _
    $region45: #{tpu_custom_call.1} parent=1 // pred_fallthru
      _
    // Predicated region
    $region46: #{tpu_custom_call.1} parent=1 // pred_check
      _
    $region47: #{tpu_custom_call.1} parent=1 // pred_check_branch
      %1750 = sbr.rel (0) target = $region49
    $region48: #{tpu_custom_call.1} parent=1 // pred_region
      %1751 = dma.done [#allocation8], 128
    $region49: #{tpu_custom_call.1} parent=1 // pred_fallthru
      _
    %1752 = vsyncpa [#allocation7], 1
    %1753 = vsyncpa [#allocation8], 1

</llo_original>
